<compile_context>
chip_gen: v6e
topology: v6e:2x2x1
jax: 0.10.0
libtpu: 0.0.40
codegen_flags: <defaults>
</compile_context>

<pallas_src>
import functools
import math

import jax
import jax.numpy as jnp
from jax.experimental import pallas as pl
from jax.experimental.pallas import tpu as pltpu

LRN_SIZE = 4
LRN_ALPHA = 0.001 / 9.0
LRN_BETA = 0.75          # implemented as rsqrt(base) * rsqrt(sqrt(base))
LRN_K = 1.0

LANE = 128               # TPU lane width; all internal lane dims pad to this
IN_HW = 32               # LeNet input spatial size (fixed by the model)
KH = 5                   # conv kernel size


# ----------------------------- kernel helpers -------------------------------

def _relu_lrn(acc, band_ref):
    """ReLU + LocalResponseNorm(4, 1e-3/9, 0.75, 1) on a (M, W*C) conv output.

    band_ref: (W*C, W*C) bf16 0/1 matrix summing squares over channels
    [c-2, c+1] within each spatial w (PyTorch LRN window, divide by size).
    """
    y = jnp.maximum(acc, 0.0)
    q = (y * y).astype(jnp.bfloat16)                 # bf16 band -> single MXU pass
    s = jnp.dot(q, band_ref[...], preferred_element_type=jnp.float32)
    base = LRN_K + (LRN_ALPHA / LRN_SIZE) * s        # avg pool counts padding
    inv = jax.lax.rsqrt(base) * jax.lax.rsqrt(jnp.sqrt(base))   # base**-0.75 (EUP)
    return (y * inv).astype(jnp.bfloat16)            # >= 0 (maxpool relies on this)


def _maxpool(z, sw_ref, ah_ref):
    """3x3 / stride-2 / pad-1 maxpool via 0/1 selection matmuls.

    Out-of-range taps select 0, which is equivalent to -inf padding because
    z >= 0 (post-ReLU/LRN).  W taps first (lanes), then H taps (rows, block-
    diagonal over the G images stacked along M).
    """
    mw = jnp.dot(z, sw_ref[0], preferred_element_type=jnp.float32)
    mw = jnp.maximum(mw, jnp.dot(z, sw_ref[1], preferred_element_type=jnp.float32))
    mw = jnp.maximum(mw, jnp.dot(z, sw_ref[2], preferred_element_type=jnp.float32))
    mw = mw.astype(jnp.bfloat16)
    out = jnp.dot(ah_ref[0], mw, preferred_element_type=jnp.float32)
    out = jnp.maximum(out, jnp.dot(ah_ref[1], mw, preferred_element_type=jnp.float32))
    out = jnp.maximum(out, jnp.dot(ah_ref[2], mw, preferred_element_type=jnp.float32))
    return out.astype(jnp.bfloat16)


def _shifted_windows(img_rows, h_out):
    """Lane-concat the KH shifted row windows of one padded image -> (h_out, KH*lanes)."""
    return jnp.concatenate([img_rows[kh:kh + h_out, :] for kh in range(KH)], axis=1)


# ------------------------------- fused kernel -------------------------------

def _lenet_kernel(x_ref, t1_ref, band1_ref, sw1_ref, ah1_ref,
                  t2_ref, band2_ref, sw2_ref, ah2_ref,
                  w1_ref, w2_ref, w3_ref, b3_ref, o_ref, *, G, smid):
    """Whole LeNet forward for one group of G images (rows stacked along M).

    x_ref : (G, 36, 128)        bf16 zero-padded input, lanes = (w, cin) + pad
    t*    : (5*128, W*Cout)     bf16 lane-concatenated Toeplitz conv weights
    band* : (W*C, W*C)          bf16 LRN channel-window 0/1 band
    sw*   : (3, W*C, lanes_out) bf16 maxpool W-tap selectors (d = -1, 0, +1)
    ah*   : (3, rows_out, rows_in) bf16 maxpool H-tap selectors, block-diag over G
    w1    : (smid, 128, F1)     bf16 fc1 lowered to per-spatial-row slabs
    o_ref : (1, G, n_out)       f32 logits for this group
    """
    H1 = IN_HW                     # 32
    H2 = IN_HW // 2                # 16
    Hp2 = H2 + 4                   # 20 rows per image of blk2's padded input

    # ---- block 1: conv5x5(pad2) -> relu -> LRN -> maxpool(3,2,1) -----------
    x = x_ref[...]                                                 # (G, 36, 128)
    x5 = jnp.concatenate([_shifted_windows(x[g], H1) for g in range(G)], axis=0)
    a1 = jnp.dot(x5, t1_ref[...], preferred_element_type=jnp.float32)   # (G*32, 128)
    z1 = _relu_lrn(a1, band1_ref)
    x2 = _maxpool(z1, sw1_ref, ah1_ref)        # (G*20, 128): blk2 padded input, zero pad rows/lanes

    # ---- block 2: conv5x5(pad2) -> relu -> LRN -> maxpool(3,2,1) -----------
    x5b = jnp.concatenate(
        [_shifted_windows(x2[g * Hp2:(g + 1) * Hp2, :], H2) for g in range(G)],
        axis=0)
    a2 = jnp.dot(x5b, t2_ref[...], preferred_element_type=jnp.float32)  # (G*16, 160)
    z2 = _relu_lrn(a2, band2_ref)
    feat = _maxpool(z2, sw2_ref, ah2_ref)      # (G*smid, 128): rows ordered (h, g)

    # ---- fc1 -> relu -> fc2 -> relu -> fc3 (+bias) --------------------------
    # fc1 is lowered to per-spatial-row weight slabs, so the PyTorch
    # NHWC->NCHW flatten never materializes in the kernel.
    h1 = jnp.dot(feat[0:G, :], w1_ref[0], preferred_element_type=jnp.float32)
    for h in range(1, smid):
        h1 = h1 + jnp.dot(feat[h * G:(h + 1) * G, :], w1_ref[h],
                          preferred_element_type=jnp.float32)
    h1 = jnp.maximum(h1, 0.0).astype(jnp.bfloat16)                  # (G, F1)
    h2 = jnp.dot(h1, w2_ref[...], preferred_element_type=jnp.float32)
    h2 = jnp.maximum(h2, 0.0).astype(jnp.bfloat16)                  # (G, F2)
    y = jnp.dot(h2, w3_ref[...], preferred_element_type=jnp.float32)
    o_ref[0] = (y + b3_ref[...]).astype(o_ref.dtype)                # (G, n_out)


# ------------------------ one-time parameter lowering ------------------------

def _round_up(x, m):
    return (x + m - 1) // m * m


def _toeplitz(w_oihw, w_in, lane_in):
    """Lane-concatenated Toeplitz conv weights: (KH*lane_in, w_in*Cout) bf16.

    Row kh*lane_in + (wp*Cin + ci) multiplies padded input (h+kh, wp, ci);
    rows past Wp*Cin (the zero lane padding of the input) are zero.
    """
    cout, cin, k_h, k_w = w_oihw.shape
    wp = w_in + k_w - 1
    wt = jnp.transpose(w_oihw, (2, 3, 1, 0)).astype(jnp.float32)   # (kh, kw, ci, co)
    kk = jnp.arange(k_w)[:, None, None]
    pp = jnp.arange(wp)[None, :, None]
    ww = jnp.arange(w_in)[None, None, :]
    place = (pp == ww + kk).astype(jnp.float32)                    # (kw, wp, w_in)
    t = jnp.einsum("xpw,hxio->hpiwo", place, wt)                   # (kh, wp, ci, w, co)
    t = t.reshape(k_h, wp * cin, w_in * cout)
    t = jnp.pad(t, ((0, 0), (0, lane_in - wp * cin), (0, 0)))
    return t.reshape(k_h * lane_in, w_in * cout).astype(jnp.bfloat16)


def _lrn_band(w, c):
    """0/1 band summing squares over channels [c-2, c+1] within each spatial w."""
    wa = jnp.arange(w)
    ca = jnp.arange(c)
    wi = wa[:, None, None, None]
    ci = ca[None, :, None, None]
    wj = wa[None, None, :, None]
    cj = ca[None, None, None, :]
    band = ((wi == wj)
            & (ci >= cj - LRN_SIZE // 2)
            & (ci <= cj + (LRN_SIZE - 1) // 2))
    return band.reshape(w * c, w * c).astype(jnp.bfloat16)


def _pool_w_sel(w, c, pad_out, lane_out):
    """W-tap maxpool selectors (3, w*c, lane_out).

    Output lanes are (wq*c + cc) with wq in [0, w//2 + 2*pad_out); pad_out>0
    bakes the zero padding the next conv block needs; zero columns pad the
    lane dim up to lane_out (lane-dense stores).
    """
    wo = w // 2
    wop = wo + 2 * pad_out
    src_w = jnp.arange(w)[:, None, None, None]
    ci = jnp.arange(c)[None, :, None, None]
    wq = jnp.arange(wop)[None, None, :, None]
    cj = jnp.arange(c)[None, None, None, :]
    sels = []
    for d in (-1, 0, 1):
        src = 2 * (wq - pad_out) + d
        cond = (ci == cj) & (wq >= pad_out) & (wq < pad_out + wo) & (src_w == src)
        s = cond.reshape(w * c, wop * c).astype(jnp.float32)
        sels.append(jnp.pad(s, ((0, 0), (0, lane_out - wop * c))))
    return jnp.stack(sels).astype(jnp.bfloat16)


def _pool_h_sel(h, pad_out, groups, h_major):
    """H-tap maxpool selectors (3, groups*hop, groups*h), block-diagonal over
    the G images stacked along M.  Output rows are image-major (g*hop + hq)
    when h_major=False, or h-major (hq*groups + g) when h_major=True (the
    latter feeds the per-row fc1 slabs directly)."""
    ho = h // 2
    hop = ho + 2 * pad_out
    g1 = jnp.arange(groups)
    hq = jnp.arange(hop)
    g2 = jnp.arange(groups)
    hh = jnp.arange(h)
    if h_major:
        row_h = hq[:, None, None, None]
        row_g = g1[None, :, None, None]
    else:
        row_g = g1[:, None, None, None]
        row_h = hq[None, :, None, None]
    col_g = g2[None, None, :, None]
    col_h = hh[None, None, None, :]
    sels = []
    for d in (-1, 0, 1):
        src = 2 * (row_h - pad_out) + d
        cond = ((row_g == col_g) & (row_h >= pad_out) & (row_h < pad_out + ho)
                & (col_h == src))
        sels.append(cond.reshape(groups * hop, groups * h).astype(jnp.bfloat16))
    return jnp.stack(sels)


def _fc1_slabs(fc1_w, c, smid, lane_in):
    """fc1 lowered to per-spatial-row slabs (smid, lane_in, out).

    Row h of the pooled feature map (lanes = w*c + cc, zero-padded to lane_in)
    contracts with slab h; this encodes PyTorch's (C, H, W) flatten order, so
    no activation transpose/reshape is needed in the kernel."""
    out_f = fc1_w.shape[0]
    w1 = fc1_w.T.reshape(c, smid, smid, out_f)       # (c, h, w, o)
    w1 = jnp.transpose(w1, (1, 2, 0, 3))             # (h, w, c, o)
    w1 = w1.reshape(smid, smid * c, out_f)
    w1 = jnp.pad(w1, ((0, 0), (0, lane_in - smid * c), (0, 0)))
    return w1.astype(jnp.bfloat16)


def _choose_grouping(batch):
    """2 parallel grid steps when possible (one per v7x TensorCore); the rest
    of the batch is folded into the matmul M dimension."""
    if batch >= 2 and batch % 2 == 0:
        return 2, batch // 2          # (num_groups, images_per_group)
    return 1, batch


def prepare_params(params, *, nf=2, batch=2):
    """One-time lowering of PyTorch-layout params into fused-kernel constants."""
    c1, c2 = nf * 2, nf * 5
    smid = IN_HW // 4
    _, g = _choose_grouping(batch)

    lane_x = _round_up((IN_HW + 4) * 3, LANE)          # blk1 input lanes  (128)
    lane_p1 = _round_up((IN_HW // 2 + 4) * c1, LANE)   # blk2 input lanes  (128)
    lane_f = _round_up(smid * c2, LANE)                # feature lanes     (128)

    return {
        "t1": _toeplitz(params["conv1_w"], IN_HW, lane_x),          # (640, 128)
        "band1": _lrn_band(IN_HW, c1),                              # (128, 128)
        "sw1": _pool_w_sel(IN_HW, c1, 2, lane_p1),                  # (3, 128, 128)
        "ah1": _pool_h_sel(IN_HW, 2, g, h_major=False),             # (3, G*20, G*32)
        "t2": _toeplitz(params["conv2_w"], IN_HW // 2, lane_p1),    # (640, 160)
        "band2": _lrn_band(IN_HW // 2, c2),                         # (160, 160)
        "sw2": _pool_w_sel(IN_HW // 2, c2, 0, lane_f),              # (3, 160, 128)
        "ah2": _pool_h_sel(IN_HW // 2, 0, g, h_major=True),         # (3, G*8, G*16)
        "w1": _fc1_slabs(params["fc1_w"], c2, smid, lane_f),        # (8, 128, 160)
        "w2": params["fc2_w"].T.astype(jnp.bfloat16),               # (160, 100)
        "w3": params["fc3_w"].T.astype(jnp.bfloat16),               # (100, n_out)
        "b3": params["fc3_b"].reshape(1, -1).astype(jnp.float32),   # (1, n_out)
    }


# ------------------------------ forward pass ---------------------------------

def _const_spec(arr):
    zeros = (0,) * arr.ndim
    return pl.BlockSpec(arr.shape, lambda b, _z=zeros: _z)


def _nbytes(a):
    return math.prod(a.shape) * jnp.dtype(a.dtype).itemsize


def _cost_estimate(g, num_groups, consts, x, n_out):
    h1, h2, smid = IN_HW, IN_HW // 2, IN_HW // 4
    t1, band1, sw1, ah1, t2, band2, sw2, ah2, w1, w2, w3, b3 = consts

    def mm(m, k, n):
        return 2 * m * k * n

    per_step = (mm(g * h1, t1.shape[0], t1.shape[1])
                + mm(g * h1, band1.shape[0], band1.shape[1])
                + 3 * mm(g * h1, sw1.shape[1], sw1.shape[2])
                + 3 * mm(ah1.shape[1], ah1.shape[2], sw1.shape[2])
                + mm(g * h2, t2.shape[0], t2.shape[1])
                + mm(g * h2, band2.shape[0], band2.shape[1])
                + 3 * mm(g * h2, sw2.shape[1], sw2.shape[2])
                + 3 * mm(ah2.shape[1], ah2.shape[2], sw2.shape[2])
                + smid * mm(g, w1.shape[1], w1.shape[2])
                + mm(g, w2.shape[0], w2.shape[1])
                + mm(g, w3.shape[0], w3.shape[1]))
    trans_per_step = 3 * (g * h1 * band1.shape[1] + g * h2 * band2.shape[1])
    bytes_accessed = (_nbytes(x) + sum(_nbytes(c) for c in consts)
                      + num_groups * g * n_out * 4)
    return pl.CostEstimate(flops=num_groups * per_step,
                           transcendentals=num_groups * trans_per_step,
                           bytes_accessed=bytes_accessed)


def lenet_forward(prep, x_nchw, task_id=0):
    """Matches LeNet.forward(x, task_id); task_id is unused (as in PyTorch)."""
    del task_id
    B, _, H, W = x_nchw.shape
    G = prep["ah1"].shape[1] // (IN_HW // 2 + 4)     # images per grid step
    num_groups = B // G
    assert num_groups * G == B
    lane_x = prep["t1"].shape[0] // KH
    n_out = prep["w3"].shape[1]
    smid = prep["w1"].shape[0]

    # Tiny one-time XLA glue on the raw input: NCHW -> NHWC, pad by 2, fold
    # (w, cin) into a lane-dense (128-multiple) lane dim, cast to bf16.
    x = jnp.transpose(x_nchw, (0, 2, 3, 1))
    x = jnp.pad(x, ((0, 0), (2, 2), (2, 2), (0, 0)))
    x = x.reshape(B, H + 4, (W + 4) * 3)
    x = jnp.pad(x, ((0, 0), (0, 0), (0, lane_x - x.shape[-1]))).astype(jnp.bfloat16)

    const_names = ("t1", "band1", "sw1", "ah1", "t2", "band2", "sw2", "ah2",
                   "w1", "w2", "w3", "b3")
    consts = [prep[k] for k in const_names]

    kern = functools.partial(_lenet_kernel, G=G, smid=smid)
    out = pl.pallas_call(
        kern,
        grid=(num_groups,),
        in_specs=[pl.BlockSpec((G, H + 4, lane_x), lambda b: (b, 0, 0))]
                 + [_const_spec(c) for c in consts],
        out_specs=pl.BlockSpec((1, G, n_out), lambda b: (b, 0, 0)),
        out_shape=jax.ShapeDtypeStruct((num_groups, G, n_out), jnp.float32),
        compiler_params=pltpu.CompilerParams(
            dimension_semantics=("parallel",)),
        cost_estimate=_cost_estimate(G, num_groups, consts, x, n_out),
    )(x, *consts)
    return out.reshape(B, n_out)


# --------------------------- synthetic parameters ----------------------------

def init_params(key, nf=2, nt=2, cpt=3):
    """Deterministic synthetic params in PyTorch layout (conv OIHW, linear (out,in))."""
    smid = IN_HW // 4
    c1, c2 = nf * 2, nf * 5
    keys = jax.random.split(key, 6)

    def u(k, shape, fan_in):
        bound = 1.0 / math.sqrt(fan_in)
        return jax.random.uniform(k, shape, jnp.float32, -bound, bound)

    return {
        "conv1_w": u(keys[0], (c1, 3, 5, 5), 3 * 25),
        "conv2_w": u(keys[1], (c2, c1, 5, 5), c1 * 25),
        "fc1_w": u(keys[2], (nf * 80, c2 * smid * smid), c2 * smid * smid),
        "fc2_w": u(keys[3], (nf * 50, nf * 80), nf * 80),
        "fc3_w": u(keys[4], (cpt * nt, nf * 50), nf * 50),
        "fc3_b": u(keys[5], (cpt * nt,), nf * 50),
    }


if __name__ == "__main__":
    nf, nt, cpt, B = 2, 2, 3, 4       # small LeNet: conv1 3->4, conv2 4->10
    key = jax.random.PRNGKey(0)
    kx, kp = jax.random.split(key)
    x = jax.random.normal(kx, (B, 3, 32, 32), jnp.float32)   # NCHW like PyTorch
    params = init_params(kp, nf=nf, nt=nt, cpt=cpt)
    prep = prepare_params(params, nf=nf, batch=B)

    fwd = jax.jit(lenet_forward)
    y = fwd(prep, x)
    jax.block_until_ready(y)
    assert y.shape == (B, cpt * nt) and y.dtype == jnp.float32
    print("KERNEL_OK")
</pallas_src>

<mosaic_0001>
module attributes {stable_mosaic.version = 11 : i64} {
  func.func @_lenet_kernel(%arg0: i32, %arg1: memref<2x36x128xbf16, #tpu.memory_space<vmem>>, %arg2: memref<640x128xbf16, #tpu.memory_space<vmem>>, %arg3: memref<128x128xbf16, #tpu.memory_space<vmem>>, %arg4: memref<3x128x128xbf16, #tpu.memory_space<vmem>>, %arg5: memref<3x40x64xbf16, #tpu.memory_space<vmem>>, %arg6: memref<640x160xbf16, #tpu.memory_space<vmem>>, %arg7: memref<160x160xbf16, #tpu.memory_space<vmem>>, %arg8: memref<3x160x128xbf16, #tpu.memory_space<vmem>>, %arg9: memref<3x16x32xbf16, #tpu.memory_space<vmem>>, %arg10: memref<8x128x160xbf16, #tpu.memory_space<vmem>>, %arg11: memref<160x100xbf16, #tpu.memory_space<vmem>>, %arg12: memref<100x6xbf16, #tpu.memory_space<vmem>>, %arg13: memref<1x6xf32, #tpu.memory_space<vmem>>, %arg14: memref<1x2x6xf32, #tpu.memory_space<vmem>>) attributes {dimension_semantics = [#tpu.dimension_semantics<parallel>], iteration_bounds = array<i64: 2>, scalar_prefetch = 0 : i64, scratch_operands = 0 : i64, tpu.core_type = #tpu.core_type<tc>, window_params = [{transform_indices = @transform_0, window_bounds = array<i64: 2, 36, 128>}, {pipeline_mode = #tpu.pipeline_mode<synchronous>, transform_indices = @transform_1, window_bounds = array<i64: 640, 128>}, {pipeline_mode = #tpu.pipeline_mode<synchronous>, transform_indices = @transform_2, window_bounds = array<i64: 128, 128>}, {pipeline_mode = #tpu.pipeline_mode<synchronous>, transform_indices = @transform_3, window_bounds = array<i64: 3, 128, 128>}, {pipeline_mode = #tpu.pipeline_mode<synchronous>, transform_indices = @transform_4, window_bounds = array<i64: 3, 40, 64>}, {pipeline_mode = #tpu.pipeline_mode<synchronous>, transform_indices = @transform_5, window_bounds = array<i64: 640, 160>}, {pipeline_mode = #tpu.pipeline_mode<synchronous>, transform_indices = @transform_6, window_bounds = array<i64: 160, 160>}, {pipeline_mode = #tpu.pipeline_mode<synchronous>, transform_indices = @transform_7, window_bounds = array<i64: 3, 160, 128>}, {pipeline_mode = #tpu.pipeline_mode<synchronous>, transform_indices = @transform_8, window_bounds = array<i64: 3, 16, 32>}, {pipeline_mode = #tpu.pipeline_mode<synchronous>, transform_indices = @transform_9, window_bounds = array<i64: 8, 128, 160>}, {pipeline_mode = #tpu.pipeline_mode<synchronous>, transform_indices = @transform_10, window_bounds = array<i64: 160, 100>}, {pipeline_mode = #tpu.pipeline_mode<synchronous>, transform_indices = @transform_11, window_bounds = array<i64: 100, 6>}, {pipeline_mode = #tpu.pipeline_mode<synchronous>, transform_indices = @transform_12, window_bounds = array<i64: 1, 6>}, {transform_indices = @transform_13, window_bounds = array<i64: 1, 2, 6>}]} {
    %c0 = arith.constant 0 : index
    %c0_0 = arith.constant 0 : index
    %c0_1 = arith.constant 0 : index
    %0 = vector.load %arg1[%c0, %c0_0, %c0_1] : memref<2x36x128xbf16, #tpu.memory_space<vmem>>, vector<2x36x128xbf16>
    %1 = vector.extract_strided_slice %0 {offsets = [0, 0, 0], sizes = [1, 36, 128], strides = [1, 1, 1]} : vector<2x36x128xbf16> to vector<1x36x128xbf16>
    %2 = vector.shape_cast %1 : vector<1x36x128xbf16> to vector<36x128xbf16>
    %3 = vector.extract_strided_slice %2 {offsets = [0, 0], sizes = [32, 128], strides = [1, 1]} : vector<36x128xbf16> to vector<32x128xbf16>
    %4 = vector.extract_strided_slice %2 {offsets = [1, 0], sizes = [32, 128], strides = [1, 1]} : vector<36x128xbf16> to vector<32x128xbf16>
    %5 = vector.extract_strided_slice %2 {offsets = [2, 0], sizes = [32, 128], strides = [1, 1]} : vector<36x128xbf16> to vector<32x128xbf16>
    %6 = vector.extract_strided_slice %2 {offsets = [3, 0], sizes = [32, 128], strides = [1, 1]} : vector<36x128xbf16> to vector<32x128xbf16>
    %7 = vector.extract_strided_slice %2 {offsets = [4, 0], sizes = [32, 128], strides = [1, 1]} : vector<36x128xbf16> to vector<32x128xbf16>
    %8 = tpu.concatenate %3, %4, %5, %6, %7 in 1 : vector<32x128xbf16>, vector<32x128xbf16>, vector<32x128xbf16>, vector<32x128xbf16>, vector<32x128xbf16> -> vector<32x640xbf16>
    %9 = vector.extract_strided_slice %0 {offsets = [1, 0, 0], sizes = [1, 36, 128], strides = [1, 1, 1]} : vector<2x36x128xbf16> to vector<1x36x128xbf16>
    %10 = vector.shape_cast %9 : vector<1x36x128xbf16> to vector<36x128xbf16>
    %11 = vector.extract_strided_slice %10 {offsets = [0, 0], sizes = [32, 128], strides = [1, 1]} : vector<36x128xbf16> to vector<32x128xbf16>
    %12 = vector.extract_strided_slice %10 {offsets = [1, 0], sizes = [32, 128], strides = [1, 1]} : vector<36x128xbf16> to vector<32x128xbf16>
    %13 = vector.extract_strided_slice %10 {offsets = [2, 0], sizes = [32, 128], strides = [1, 1]} : vector<36x128xbf16> to vector<32x128xbf16>
    %14 = vector.extract_strided_slice %10 {offsets = [3, 0], sizes = [32, 128], strides = [1, 1]} : vector<36x128xbf16> to vector<32x128xbf16>
    %15 = vector.extract_strided_slice %10 {offsets = [4, 0], sizes = [32, 128], strides = [1, 1]} : vector<36x128xbf16> to vector<32x128xbf16>
    %16 = tpu.concatenate %11, %12, %13, %14, %15 in 1 : vector<32x128xbf16>, vector<32x128xbf16>, vector<32x128xbf16>, vector<32x128xbf16>, vector<32x128xbf16> -> vector<32x640xbf16>
    %17 = tpu.concatenate %8, %16 in 0 : vector<32x640xbf16>, vector<32x640xbf16> -> vector<64x640xbf16>
    %c0_2 = arith.constant 0 : index
    %c0_3 = arith.constant 0 : index
    %18 = vector.load %arg2[%c0_2, %c0_3] : memref<640x128xbf16, #tpu.memory_space<vmem>>, vector<640x128xbf16>
    %cst = arith.constant dense<0.000000e+00> : vector<64x128xf32>
    %19 = tpu.matmul %17, %18, %cst {dimension_numbers = #tpu.dot_dimension_numbers<[1], [0], [0], [1], [0, 0, 1, 1], [], []>} : vector<64x640xbf16>, vector<640x128xbf16>, vector<64x128xf32> -> vector<64x128xf32>
    %cst_4 = arith.constant 0.000000e+00 : f32
    %20 = vector.broadcast %cst_4 : f32 to vector<64x128xf32>
    %21 = arith.maximumf %19, %20 : vector<64x128xf32>
    %22 = arith.mulf %21, %21 : vector<64x128xf32>
    %23 = arith.truncf %22 : vector<64x128xf32> to vector<64x128xbf16>
    %c0_5 = arith.constant 0 : index
    %c0_6 = arith.constant 0 : index
    %24 = vector.load %arg3[%c0_5, %c0_6] : memref<128x128xbf16, #tpu.memory_space<vmem>>, vector<128x128xbf16>
    %cst_7 = arith.constant dense<0.000000e+00> : vector<64x128xf32>
    %25 = tpu.matmul %23, %24, %cst_7 {dimension_numbers = #tpu.dot_dimension_numbers<[1], [0], [0], [1], [0, 0, 1, 1], [], []>} : vector<64x128xbf16>, vector<128x128xbf16>, vector<64x128xf32> -> vector<64x128xf32>
    %cst_8 = arith.constant 2.77777781E-5 : f32
    %26 = vector.broadcast %cst_8 : f32 to vector<64x128xf32>
    %27 = arith.mulf %26, %25 : vector<64x128xf32>
    %cst_9 = arith.constant 1.000000e+00 : f32
    %28 = vector.broadcast %cst_9 : f32 to vector<64x128xf32>
    %29 = arith.addf %28, %27 : vector<64x128xf32>
    %30 = math.rsqrt %29 : vector<64x128xf32>
    %31 = math.sqrt %29 : vector<64x128xf32>
    %32 = math.rsqrt %31 : vector<64x128xf32>
    %33 = arith.mulf %30, %32 : vector<64x128xf32>
    %34 = arith.mulf %21, %33 : vector<64x128xf32>
    %35 = arith.truncf %34 : vector<64x128xf32> to vector<64x128xbf16>
    %c0_10 = arith.constant 0 : index
    %c0_11 = arith.constant 0 : index
    %c0_12 = arith.constant 0 : index
    %36 = vector.load %arg4[%c0_10, %c0_11, %c0_12] : memref<3x128x128xbf16, #tpu.memory_space<vmem>>, vector<1x128x128xbf16>
    %37 = vector.shape_cast %36 : vector<1x128x128xbf16> to vector<128x128xbf16>
    %cst_13 = arith.constant dense<0.000000e+00> : vector<64x128xf32>
    %38 = tpu.matmul %35, %37, %cst_13 {dimension_numbers = #tpu.dot_dimension_numbers<[1], [0], [0], [1], [0, 0, 1, 1], [], []>} : vector<64x128xbf16>, vector<128x128xbf16>, vector<64x128xf32> -> vector<64x128xf32>
    %c1 = arith.constant 1 : index
    %c0_14 = arith.constant 0 : index
    %c0_15 = arith.constant 0 : index
    %39 = vector.load %arg4[%c1, %c0_14, %c0_15] : memref<3x128x128xbf16, #tpu.memory_space<vmem>>, vector<1x128x128xbf16>
    %40 = vector.shape_cast %39 : vector<1x128x128xbf16> to vector<128x128xbf16>
    %cst_16 = arith.constant dense<0.000000e+00> : vector<64x128xf32>
    %41 = tpu.matmul %35, %40, %cst_16 {dimension_numbers = #tpu.dot_dimension_numbers<[1], [0], [0], [1], [0, 0, 1, 1], [], []>} : vector<64x128xbf16>, vector<128x128xbf16>, vector<64x128xf32> -> vector<64x128xf32>
    %42 = arith.maximumf %38, %41 : vector<64x128xf32>
    %c2 = arith.constant 2 : index
    %c0_17 = arith.constant 0 : index
    %c0_18 = arith.constant 0 : index
    %43 = vector.load %arg4[%c2, %c0_17, %c0_18] : memref<3x128x128xbf16, #tpu.memory_space<vmem>>, vector<1x128x128xbf16>
    %44 = vector.shape_cast %43 : vector<1x128x128xbf16> to vector<128x128xbf16>
    %cst_19 = arith.constant dense<0.000000e+00> : vector<64x128xf32>
    %45 = tpu.matmul %35, %44, %cst_19 {dimension_numbers = #tpu.dot_dimension_numbers<[1], [0], [0], [1], [0, 0, 1, 1], [], []>} : vector<64x128xbf16>, vector<128x128xbf16>, vector<64x128xf32> -> vector<64x128xf32>
    %46 = arith.maximumf %42, %45 : vector<64x128xf32>
    %47 = arith.truncf %46 : vector<64x128xf32> to vector<64x128xbf16>
    %c0_20 = arith.constant 0 : index
    %c0_21 = arith.constant 0 : index
    %c0_22 = arith.constant 0 : index
    %48 = vector.load %arg5[%c0_20, %c0_21, %c0_22] : memref<3x40x64xbf16, #tpu.memory_space<vmem>>, vector<1x40x64xbf16>
    %49 = vector.shape_cast %48 : vector<1x40x64xbf16> to vector<40x64xbf16>
    %cst_23 = arith.constant dense<0.000000e+00> : vector<40x128xf32>
    %50 = tpu.matmul %49, %47, %cst_23 {dimension_numbers = #tpu.dot_dimension_numbers<[1], [0], [0], [1], [0, 0, 1, 1], [], []>} : vector<40x64xbf16>, vector<64x128xbf16>, vector<40x128xf32> -> vector<40x128xf32>
    %c1_24 = arith.constant 1 : index
    %c0_25 = arith.constant 0 : index
    %c0_26 = arith.constant 0 : index
    %51 = vector.load %arg5[%c1_24, %c0_25, %c0_26] : memref<3x40x64xbf16, #tpu.memory_space<vmem>>, vector<1x40x64xbf16>
    %52 = vector.shape_cast %51 : vector<1x40x64xbf16> to vector<40x64xbf16>
    %cst_27 = arith.constant dense<0.000000e+00> : vector<40x128xf32>
    %53 = tpu.matmul %52, %47, %cst_27 {dimension_numbers = #tpu.dot_dimension_numbers<[1], [0], [0], [1], [0, 0, 1, 1], [], []>} : vector<40x64xbf16>, vector<64x128xbf16>, vector<40x128xf32> -> vector<40x128xf32>
    %54 = arith.maximumf %50, %53 : vector<40x128xf32>
    %c2_28 = arith.constant 2 : index
    %c0_29 = arith.constant 0 : index
    %c0_30 = arith.constant 0 : index
    %55 = vector.load %arg5[%c2_28, %c0_29, %c0_30] : memref<3x40x64xbf16, #tpu.memory_space<vmem>>, vector<1x40x64xbf16>
    %56 = vector.shape_cast %55 : vector<1x40x64xbf16> to vector<40x64xbf16>
    %cst_31 = arith.constant dense<0.000000e+00> : vector<40x128xf32>
    %57 = tpu.matmul %56, %47, %cst_31 {dimension_numbers = #tpu.dot_dimension_numbers<[1], [0], [0], [1], [0, 0, 1, 1], [], []>} : vector<40x64xbf16>, vector<64x128xbf16>, vector<40x128xf32> -> vector<40x128xf32>
    %58 = arith.maximumf %54, %57 : vector<40x128xf32>
    %59 = arith.truncf %58 : vector<40x128xf32> to vector<40x128xbf16>
    %60 = vector.extract_strided_slice %59 {offsets = [0, 0], sizes = [20, 128], strides = [1, 1]} : vector<40x128xbf16> to vector<20x128xbf16>
    %61 = vector.extract_strided_slice %60 {offsets = [0, 0], sizes = [16, 128], strides = [1, 1]} : vector<20x128xbf16> to vector<16x128xbf16>
    %62 = vector.extract_strided_slice %60 {offsets = [1, 0], sizes = [16, 128], strides = [1, 1]} : vector<20x128xbf16> to vector<16x128xbf16>
    %63 = vector.extract_strided_slice %60 {offsets = [2, 0], sizes = [16, 128], strides = [1, 1]} : vector<20x128xbf16> to vector<16x128xbf16>
    %64 = vector.extract_strided_slice %60 {offsets = [3, 0], sizes = [16, 128], strides = [1, 1]} : vector<20x128xbf16> to vector<16x128xbf16>
    %65 = vector.extract_strided_slice %60 {offsets = [4, 0], sizes = [16, 128], strides = [1, 1]} : vector<20x128xbf16> to vector<16x128xbf16>
    %66 = tpu.concatenate %61, %62, %63, %64, %65 in 1 : vector<16x128xbf16>, vector<16x128xbf16>, vector<16x128xbf16>, vector<16x128xbf16>, vector<16x128xbf16> -> vector<16x640xbf16>
    %67 = vector.extract_strided_slice %59 {offsets = [20, 0], sizes = [20, 128], strides = [1, 1]} : vector<40x128xbf16> to vector<20x128xbf16>
    %68 = vector.extract_strided_slice %67 {offsets = [0, 0], sizes = [16, 128], strides = [1, 1]} : vector<20x128xbf16> to vector<16x128xbf16>
    %69 = vector.extract_strided_slice %67 {offsets = [1, 0], sizes = [16, 128], strides = [1, 1]} : vector<20x128xbf16> to vector<16x128xbf16>
    %70 = vector.extract_strided_slice %67 {offsets = [2, 0], sizes = [16, 128], strides = [1, 1]} : vector<20x128xbf16> to vector<16x128xbf16>
    %71 = vector.extract_strided_slice %67 {offsets = [3, 0], sizes = [16, 128], strides = [1, 1]} : vector<20x128xbf16> to vector<16x128xbf16>
    %72 = vector.extract_strided_slice %67 {offsets = [4, 0], sizes = [16, 128], strides = [1, 1]} : vector<20x128xbf16> to vector<16x128xbf16>
    %73 = tpu.concatenate %68, %69, %70, %71, %72 in 1 : vector<16x128xbf16>, vector<16x128xbf16>, vector<16x128xbf16>, vector<16x128xbf16>, vector<16x128xbf16> -> vector<16x640xbf16>
    %74 = tpu.concatenate %66, %73 in 0 : vector<16x640xbf16>, vector<16x640xbf16> -> vector<32x640xbf16>
    %c0_32 = arith.constant 0 : index
    %c0_33 = arith.constant 0 : index
    %75 = vector.load %arg6[%c0_32, %c0_33] : memref<640x160xbf16, #tpu.memory_space<vmem>>, vector<640x160xbf16>
    %cst_34 = arith.constant dense<0.000000e+00> : vector<32x160xf32>
    %76 = tpu.matmul %74, %75, %cst_34 {dimension_numbers = #tpu.dot_dimension_numbers<[1], [0], [0], [1], [0, 0, 1, 1], [], []>} : vector<32x640xbf16>, vector<640x160xbf16>, vector<32x160xf32> -> vector<32x160xf32>
    %cst_35 = arith.constant 0.000000e+00 : f32
    %77 = vector.broadcast %cst_35 : f32 to vector<32x160xf32>
    %78 = arith.maximumf %76, %77 : vector<32x160xf32>
    %79 = arith.mulf %78, %78 : vector<32x160xf32>
    %80 = arith.truncf %79 : vector<32x160xf32> to vector<32x160xbf16>
    %c0_36 = arith.constant 0 : index
    %c0_37 = arith.constant 0 : index
    %81 = vector.load %arg7[%c0_36, %c0_37] : memref<160x160xbf16, #tpu.memory_space<vmem>>, vector<160x160xbf16>
    %cst_38 = arith.constant dense<0.000000e+00> : vector<32x160xf32>
    %82 = tpu.matmul %80, %81, %cst_38 {dimension_numbers = #tpu.dot_dimension_numbers<[1], [0], [0], [1], [0, 0, 1, 1], [], []>} : vector<32x160xbf16>, vector<160x160xbf16>, vector<32x160xf32> -> vector<32x160xf32>
    %cst_39 = arith.constant 2.77777781E-5 : f32
    %83 = vector.broadcast %cst_39 : f32 to vector<32x160xf32>
    %84 = arith.mulf %83, %82 : vector<32x160xf32>
    %cst_40 = arith.constant 1.000000e+00 : f32
    %85 = vector.broadcast %cst_40 : f32 to vector<32x160xf32>
    %86 = arith.addf %85, %84 : vector<32x160xf32>
    %87 = math.rsqrt %86 : vector<32x160xf32>
    %88 = math.sqrt %86 : vector<32x160xf32>
    %89 = math.rsqrt %88 : vector<32x160xf32>
    %90 = arith.mulf %87, %89 : vector<32x160xf32>
    %91 = arith.mulf %78, %90 : vector<32x160xf32>
    %92 = arith.truncf %91 : vector<32x160xf32> to vector<32x160xbf16>
    %c0_41 = arith.constant 0 : index
    %c0_42 = arith.constant 0 : index
    %c0_43 = arith.constant 0 : index
    %93 = vector.load %arg8[%c0_41, %c0_42, %c0_43] : memref<3x160x128xbf16, #tpu.memory_space<vmem>>, vector<1x160x128xbf16>
    %94 = vector.shape_cast %93 : vector<1x160x128xbf16> to vector<160x128xbf16>
    %cst_44 = arith.constant dense<0.000000e+00> : vector<32x128xf32>
    %95 = tpu.matmul %92, %94, %cst_44 {dimension_numbers = #tpu.dot_dimension_numbers<[1], [0], [0], [1], [0, 0, 1, 1], [], []>} : vector<32x160xbf16>, vector<160x128xbf16>, vector<32x128xf32> -> vector<32x128xf32>
    %c1_45 = arith.constant 1 : index
    %c0_46 = arith.constant 0 : index
    %c0_47 = arith.constant 0 : index
    %96 = vector.load %arg8[%c1_45, %c0_46, %c0_47] : memref<3x160x128xbf16, #tpu.memory_space<vmem>>, vector<1x160x128xbf16>
    %97 = vector.shape_cast %96 : vector<1x160x128xbf16> to vector<160x128xbf16>
    %cst_48 = arith.constant dense<0.000000e+00> : vector<32x128xf32>
    %98 = tpu.matmul %92, %97, %cst_48 {dimension_numbers = #tpu.dot_dimension_numbers<[1], [0], [0], [1], [0, 0, 1, 1], [], []>} : vector<32x160xbf16>, vector<160x128xbf16>, vector<32x128xf32> -> vector<32x128xf32>
    %99 = arith.maximumf %95, %98 : vector<32x128xf32>
    %c2_49 = arith.constant 2 : index
    %c0_50 = arith.constant 0 : index
    %c0_51 = arith.constant 0 : index
    %100 = vector.load %arg8[%c2_49, %c0_50, %c0_51] : memref<3x160x128xbf16, #tpu.memory_space<vmem>>, vector<1x160x128xbf16>
    %101 = vector.shape_cast %100 : vector<1x160x128xbf16> to vector<160x128xbf16>
    %cst_52 = arith.constant dense<0.000000e+00> : vector<32x128xf32>
    %102 = tpu.matmul %92, %101, %cst_52 {dimension_numbers = #tpu.dot_dimension_numbers<[1], [0], [0], [1], [0, 0, 1, 1], [], []>} : vector<32x160xbf16>, vector<160x128xbf16>, vector<32x128xf32> -> vector<32x128xf32>
    %103 = arith.maximumf %99, %102 : vector<32x128xf32>
    %104 = arith.truncf %103 : vector<32x128xf32> to vector<32x128xbf16>
    %c0_53 = arith.constant 0 : index
    %c0_54 = arith.constant 0 : index
    %c0_55 = arith.constant 0 : index
    %105 = vector.load %arg9[%c0_53, %c0_54, %c0_55] : memref<3x16x32xbf16, #tpu.memory_space<vmem>>, vector<1x16x32xbf16>
    %106 = vector.shape_cast %105 : vector<1x16x32xbf16> to vector<16x32xbf16>
    %cst_56 = arith.constant dense<0.000000e+00> : vector<16x128xf32>
    %107 = tpu.matmul %106, %104, %cst_56 {dimension_numbers = #tpu.dot_dimension_numbers<[1], [0], [0], [1], [0, 0, 1, 1], [], []>} : vector<16x32xbf16>, vector<32x128xbf16>, vector<16x128xf32> -> vector<16x128xf32>
    %c1_57 = arith.constant 1 : index
    %c0_58 = arith.constant 0 : index
    %c0_59 = arith.constant 0 : index
    %108 = vector.load %arg9[%c1_57, %c0_58, %c0_59] : memref<3x16x32xbf16, #tpu.memory_space<vmem>>, vector<1x16x32xbf16>
    %109 = vector.shape_cast %108 : vector<1x16x32xbf16> to vector<16x32xbf16>
    %cst_60 = arith.constant dense<0.000000e+00> : vector<16x128xf32>
    %110 = tpu.matmul %109, %104, %cst_60 {dimension_numbers = #tpu.dot_dimension_numbers<[1], [0], [0], [1], [0, 0, 1, 1], [], []>} : vector<16x32xbf16>, vector<32x128xbf16>, vector<16x128xf32> -> vector<16x128xf32>
    %111 = arith.maximumf %107, %110 : vector<16x128xf32>
    %c2_61 = arith.constant 2 : index
    %c0_62 = arith.constant 0 : index
    %c0_63 = arith.constant 0 : index
    %112 = vector.load %arg9[%c2_61, %c0_62, %c0_63] : memref<3x16x32xbf16, #tpu.memory_space<vmem>>, vector<1x16x32xbf16>
    %113 = vector.shape_cast %112 : vector<1x16x32xbf16> to vector<16x32xbf16>
    %cst_64 = arith.constant dense<0.000000e+00> : vector<16x128xf32>
    %114 = tpu.matmul %113, %104, %cst_64 {dimension_numbers = #tpu.dot_dimension_numbers<[1], [0], [0], [1], [0, 0, 1, 1], [], []>} : vector<16x32xbf16>, vector<32x128xbf16>, vector<16x128xf32> -> vector<16x128xf32>
    %115 = arith.maximumf %111, %114 : vector<16x128xf32>
    %116 = arith.truncf %115 : vector<16x128xf32> to vector<16x128xbf16>
    %117 = vector.extract_strided_slice %116 {offsets = [0, 0], sizes = [2, 128], strides = [1, 1]} : vector<16x128xbf16> to vector<2x128xbf16>
    %c0_65 = arith.constant 0 : index
    %c0_66 = arith.constant 0 : index
    %c0_67 = arith.constant 0 : index
    %118 = vector.load %arg10[%c0_65, %c0_66, %c0_67] : memref<8x128x160xbf16, #tpu.memory_space<vmem>>, vector<1x128x160xbf16>
    %119 = vector.shape_cast %118 : vector<1x128x160xbf16> to vector<128x160xbf16>
    %cst_68 = arith.constant dense<0.000000e+00> : vector<2x160xf32>
    %120 = tpu.matmul %117, %119, %cst_68 {dimension_numbers = #tpu.dot_dimension_numbers<[1], [0], [0], [1], [0, 0, 1, 1], [], []>} : vector<2x128xbf16>, vector<128x160xbf16>, vector<2x160xf32> -> vector<2x160xf32>
    %121 = vector.extract_strided_slice %116 {offsets = [2, 0], sizes = [2, 128], strides = [1, 1]} : vector<16x128xbf16> to vector<2x128xbf16>
    %c1_69 = arith.constant 1 : index
    %c0_70 = arith.constant 0 : index
    %c0_71 = arith.constant 0 : index
    %122 = vector.load %arg10[%c1_69, %c0_70, %c0_71] : memref<8x128x160xbf16, #tpu.memory_space<vmem>>, vector<1x128x160xbf16>
    %123 = vector.shape_cast %122 : vector<1x128x160xbf16> to vector<128x160xbf16>
    %cst_72 = arith.constant dense<0.000000e+00> : vector<2x160xf32>
    %124 = tpu.matmul %121, %123, %cst_72 {dimension_numbers = #tpu.dot_dimension_numbers<[1], [0], [0], [1], [0, 0, 1, 1], [], []>} : vector<2x128xbf16>, vector<128x160xbf16>, vector<2x160xf32> -> vector<2x160xf32>
    %125 = arith.addf %120, %124 : vector<2x160xf32>
    %126 = vector.extract_strided_slice %116 {offsets = [4, 0], sizes = [2, 128], strides = [1, 1]} : vector<16x128xbf16> to vector<2x128xbf16>
    %c2_73 = arith.constant 2 : index
    %c0_74 = arith.constant 0 : index
    %c0_75 = arith.constant 0 : index
    %127 = vector.load %arg10[%c2_73, %c0_74, %c0_75] : memref<8x128x160xbf16, #tpu.memory_space<vmem>>, vector<1x128x160xbf16>
    %128 = vector.shape_cast %127 : vector<1x128x160xbf16> to vector<128x160xbf16>
    %cst_76 = arith.constant dense<0.000000e+00> : vector<2x160xf32>
    %129 = tpu.matmul %126, %128, %cst_76 {dimension_numbers = #tpu.dot_dimension_numbers<[1], [0], [0], [1], [0, 0, 1, 1], [], []>} : vector<2x128xbf16>, vector<128x160xbf16>, vector<2x160xf32> -> vector<2x160xf32>
    %130 = arith.addf %125, %129 : vector<2x160xf32>
    %131 = vector.extract_strided_slice %116 {offsets = [6, 0], sizes = [2, 128], strides = [1, 1]} : vector<16x128xbf16> to vector<2x128xbf16>
    %c3 = arith.constant 3 : index
    %c0_77 = arith.constant 0 : index
    %c0_78 = arith.constant 0 : index
    %132 = vector.load %arg10[%c3, %c0_77, %c0_78] : memref<8x128x160xbf16, #tpu.memory_space<vmem>>, vector<1x128x160xbf16>
    %133 = vector.shape_cast %132 : vector<1x128x160xbf16> to vector<128x160xbf16>
    %cst_79 = arith.constant dense<0.000000e+00> : vector<2x160xf32>
    %134 = tpu.matmul %131, %133, %cst_79 {dimension_numbers = #tpu.dot_dimension_numbers<[1], [0], [0], [1], [0, 0, 1, 1], [], []>} : vector<2x128xbf16>, vector<128x160xbf16>, vector<2x160xf32> -> vector<2x160xf32>
    %135 = arith.addf %130, %134 : vector<2x160xf32>
    %136 = vector.extract_strided_slice %116 {offsets = [8, 0], sizes = [2, 128], strides = [1, 1]} : vector<16x128xbf16> to vector<2x128xbf16>
    %c4 = arith.constant 4 : index
    %c0_80 = arith.constant 0 : index
    %c0_81 = arith.constant 0 : index
    %137 = vector.load %arg10[%c4, %c0_80, %c0_81] : memref<8x128x160xbf16, #tpu.memory_space<vmem>>, vector<1x128x160xbf16>
    %138 = vector.shape_cast %137 : vector<1x128x160xbf16> to vector<128x160xbf16>
    %cst_82 = arith.constant dense<0.000000e+00> : vector<2x160xf32>
    %139 = tpu.matmul %136, %138, %cst_82 {dimension_numbers = #tpu.dot_dimension_numbers<[1], [0], [0], [1], [0, 0, 1, 1], [], []>} : vector<2x128xbf16>, vector<128x160xbf16>, vector<2x160xf32> -> vector<2x160xf32>
    %140 = arith.addf %135, %139 : vector<2x160xf32>
    %141 = vector.extract_strided_slice %116 {offsets = [10, 0], sizes = [2, 128], strides = [1, 1]} : vector<16x128xbf16> to vector<2x128xbf16>
    %c5 = arith.constant 5 : index
    %c0_83 = arith.constant 0 : index
    %c0_84 = arith.constant 0 : index
    %142 = vector.load %arg10[%c5, %c0_83, %c0_84] : memref<8x128x160xbf16, #tpu.memory_space<vmem>>, vector<1x128x160xbf16>
    %143 = vector.shape_cast %142 : vector<1x128x160xbf16> to vector<128x160xbf16>
    %cst_85 = arith.constant dense<0.000000e+00> : vector<2x160xf32>
    %144 = tpu.matmul %141, %143, %cst_85 {dimension_numbers = #tpu.dot_dimension_numbers<[1], [0], [0], [1], [0, 0, 1, 1], [], []>} : vector<2x128xbf16>, vector<128x160xbf16>, vector<2x160xf32> -> vector<2x160xf32>
    %145 = arith.addf %140, %144 : vector<2x160xf32>
    %146 = vector.extract_strided_slice %116 {offsets = [12, 0], sizes = [2, 128], strides = [1, 1]} : vector<16x128xbf16> to vector<2x128xbf16>
    %c6 = arith.constant 6 : index
    %c0_86 = arith.constant 0 : index
    %c0_87 = arith.constant 0 : index
    %147 = vector.load %arg10[%c6, %c0_86, %c0_87] : memref<8x128x160xbf16, #tpu.memory_space<vmem>>, vector<1x128x160xbf16>
    %148 = vector.shape_cast %147 : vector<1x128x160xbf16> to vector<128x160xbf16>
    %cst_88 = arith.constant dense<0.000000e+00> : vector<2x160xf32>
    %149 = tpu.matmul %146, %148, %cst_88 {dimension_numbers = #tpu.dot_dimension_numbers<[1], [0], [0], [1], [0, 0, 1, 1], [], []>} : vector<2x128xbf16>, vector<128x160xbf16>, vector<2x160xf32> -> vector<2x160xf32>
    %150 = arith.addf %145, %149 : vector<2x160xf32>
    %151 = vector.extract_strided_slice %116 {offsets = [14, 0], sizes = [2, 128], strides = [1, 1]} : vector<16x128xbf16> to vector<2x128xbf16>
    %c7 = arith.constant 7 : index
    %c0_89 = arith.constant 0 : index
    %c0_90 = arith.constant 0 : index
    %152 = vector.load %arg10[%c7, %c0_89, %c0_90] : memref<8x128x160xbf16, #tpu.memory_space<vmem>>, vector<1x128x160xbf16>
    %153 = vector.shape_cast %152 : vector<1x128x160xbf16> to vector<128x160xbf16>
    %cst_91 = arith.constant dense<0.000000e+00> : vector<2x160xf32>
    %154 = tpu.matmul %151, %153, %cst_91 {dimension_numbers = #tpu.dot_dimension_numbers<[1], [0], [0], [1], [0, 0, 1, 1], [], []>} : vector<2x128xbf16>, vector<128x160xbf16>, vector<2x160xf32> -> vector<2x160xf32>
    %155 = arith.addf %150, %154 : vector<2x160xf32>
    %cst_92 = arith.constant 0.000000e+00 : f32
    %156 = vector.broadcast %cst_92 : f32 to vector<2x160xf32>
    %157 = arith.maximumf %155, %156 : vector<2x160xf32>
    %158 = arith.truncf %157 : vector<2x160xf32> to vector<2x160xbf16>
    %c0_93 = arith.constant 0 : index
    %c0_94 = arith.constant 0 : index
    %159 = vector.load %arg11[%c0_93, %c0_94] : memref<160x100xbf16, #tpu.memory_space<vmem>>, vector<160x100xbf16>
    %cst_95 = arith.constant dense<0.000000e+00> : vector<2x100xf32>
    %160 = tpu.matmul %158, %159, %cst_95 {dimension_numbers = #tpu.dot_dimension_numbers<[1], [0], [0], [1], [0, 0, 1, 1], [], []>} : vector<2x160xbf16>, vector<160x100xbf16>, vector<2x100xf32> -> vector<2x100xf32>
    %cst_96 = arith.constant 0.000000e+00 : f32
    %161 = vector.broadcast %cst_96 : f32 to vector<2x100xf32>
    %162 = arith.maximumf %160, %161 : vector<2x100xf32>
    %163 = arith.truncf %162 : vector<2x100xf32> to vector<2x100xbf16>
    %c0_97 = arith.constant 0 : index
    %c0_98 = arith.constant 0 : index
    %164 = vector.load %arg12[%c0_97, %c0_98] : memref<100x6xbf16, #tpu.memory_space<vmem>>, vector<100x6xbf16>
    %cst_99 = arith.constant dense<0.000000e+00> : vector<2x6xf32>
    %165 = tpu.matmul %163, %164, %cst_99 {dimension_numbers = #tpu.dot_dimension_numbers<[1], [0], [0], [1], [0, 0, 1, 1], [], []>} : vector<2x100xbf16>, vector<100x6xbf16>, vector<2x6xf32> -> vector<2x6xf32>
    %c0_100 = arith.constant 0 : index
    %c0_101 = arith.constant 0 : index
    %166 = vector.load %arg13[%c0_100, %c0_101] : memref<1x6xf32, #tpu.memory_space<vmem>>, vector<1x6xf32>
    %167 = vector.broadcast %166 : vector<1x6xf32> to vector<2x6xf32>
    %168 = arith.addf %165, %167 : vector<2x6xf32>
    %c0_102 = arith.constant 0 : index
    %c0_103 = arith.constant 0 : index
    %c0_104 = arith.constant 0 : index
    %169 = vector.load %arg14[%c0_102, %c0_103, %c0_104] : memref<1x2x6xf32, #tpu.memory_space<vmem>>, vector<1x2x6xf32>
    %170 = vector.shape_cast %169 : vector<1x2x6xf32> to vector<2x6xf32>
    %171 = vector.shape_cast %168 : vector<2x6xf32> to vector<1x2x6xf32>
    tpu.vector_store %arg14[%c0_102, %c0_103, %c0_104], %171 {strides = array<i32>} : memref<1x2x6xf32, #tpu.memory_space<vmem>>, vector<1x2x6xf32>,
    return
  }
  func.func @transform_0(%arg0: i32) -> (i32, i32, i32) {
    %c0_i32 = arith.constant 0 : i32
    %c0_i32_0 = arith.constant 0 : i32
    %c0_i32_1 = arith.constant 0 : i32
    return %arg0, %c0_i32, %c0_i32_0 : i32, i32, i32
  }
  func.func @transform_1(%arg0: i32) -> (i32, i32) {
    %c0_i32 = arith.constant 0 : i32
    %c0_i32_0 = arith.constant 0 : i32
    %c0_i32_1 = arith.constant 0 : i32
    return %c0_i32, %c0_i32_0 : i32, i32
  }
  func.func @transform_2(%arg0: i32) -> (i32, i32) {
    %c0_i32 = arith.constant 0 : i32
    %c0_i32_0 = arith.constant 0 : i32
    %c0_i32_1 = arith.constant 0 : i32
    return %c0_i32, %c0_i32_0 : i32, i32
  }
  func.func @transform_3(%arg0: i32) -> (i32, i32, i32) {
    %c0_i32 = arith.constant 0 : i32
    %c0_i32_0 = arith.constant 0 : i32
    %c0_i32_1 = arith.constant 0 : i32
    %c0_i32_2 = arith.constant 0 : i32
    return %c0_i32, %c0_i32_0, %c0_i32_1 : i32, i32, i32
  }
  func.func @transform_4(%arg0: i32) -> (i32, i32, i32) {
    %c0_i32 = arith.constant 0 : i32
    %c0_i32_0 = arith.constant 0 : i32
    %c0_i32_1 = arith.constant 0 : i32
    %c0_i32_2 = arith.constant 0 : i32
    return %c0_i32, %c0_i32_0, %c0_i32_1 : i32, i32, i32
  }
  func.func @transform_5(%arg0: i32) -> (i32, i32) {
    %c0_i32 = arith.constant 0 : i32
    %c0_i32_0 = arith.constant 0 : i32
    %c0_i32_1 = arith.constant 0 : i32
    return %c0_i32, %c0_i32_0 : i32, i32
  }
  func.func @transform_6(%arg0: i32) -> (i32, i32) {
    %c0_i32 = arith.constant 0 : i32
    %c0_i32_0 = arith.constant 0 : i32
    %c0_i32_1 = arith.constant 0 : i32
    return %c0_i32, %c0_i32_0 : i32, i32
  }
  func.func @transform_7(%arg0: i32) -> (i32, i32, i32) {
    %c0_i32 = arith.constant 0 : i32
    %c0_i32_0 = arith.constant 0 : i32
    %c0_i32_1 = arith.constant 0 : i32
    %c0_i32_2 = arith.constant 0 : i32
    return %c0_i32, %c0_i32_0, %c0_i32_1 : i32, i32, i32
  }
  func.func @transform_8(%arg0: i32) -> (i32, i32, i32) {
    %c0_i32 = arith.constant 0 : i32
    %c0_i32_0 = arith.constant 0 : i32
    %c0_i32_1 = arith.constant 0 : i32
    %c0_i32_2 = arith.constant 0 : i32
    return %c0_i32, %c0_i32_0, %c0_i32_1 : i32, i32, i32
  }
  func.func @transform_9(%arg0: i32) -> (i32, i32, i32) {
    %c0_i32 = arith.constant 0 : i32
    %c0_i32_0 = arith.constant 0 : i32
    %c0_i32_1 = arith.constant 0 : i32
    %c0_i32_2 = arith.constant 0 : i32
    return %c0_i32, %c0_i32_0, %c0_i32_1 : i32, i32, i32
  }
  func.func @transform_10(%arg0: i32) -> (i32, i32) {
    %c0_i32 = arith.constant 0 : i32
    %c0_i32_0 = arith.constant 0 : i32
    %c0_i32_1 = arith.constant 0 : i32
    return %c0_i32, %c0_i32_0 : i32, i32
  }
  func.func @transform_11(%arg0: i32) -> (i32, i32) {
    %c0_i32 = arith.constant 0 : i32
    %c0_i32_0 = arith.constant 0 : i32
    %c0_i32_1 = arith.constant 0 : i32
    return %c0_i32, %c0_i32_0 : i32, i32
  }
  func.func @transform_12(%arg0: i32) -> (i32, i32) {
    %c0_i32 = arith.constant 0 : i32
    %c0_i32_0 = arith.constant 0 : i32
    %c0_i32_1 = arith.constant 0 : i32
    return %c0_i32, %c0_i32_0 : i32, i32
  }
  func.func @transform_13(%arg0: i32) -> (i32, i32, i32) {
    %c0_i32 = arith.constant 0 : i32
    %c0_i32_0 = arith.constant 0 : i32
    %c0_i32_1 = arith.constant 0 : i32
    return %arg0, %c0_i32, %c0_i32_0 : i32, i32, i32
  }
}

</mosaic_0001>

<llo_original>
// kernel: lenet_forward.1
$region0: #{lenet_forward.1}
  #allocation0 [shape = 'u32[]', space=smem, size = 0x4, offset = 0x4, fixed_abs, tag = 'smem constant byte address 0x4 - core index']
  #allocation1 [shape = 'u32[144,128]{1,0:T(1,128)}', space=vmem, size = 0x12000, scoped, tag = 'internal scratch']
  %s0 = inlined_call_operand.vmem [shape: bf16[4,36,128], index: 0, kind: input, shape index: {}]
  %s1 = inlined_call_operand.vmem [shape: bf16[640,128], index: 1, kind: input, shape index: {}]
  %s2 = inlined_call_operand.vmem [shape: bf16[128,128], index: 2, kind: input, shape index: {}]
  %s3 = inlined_call_operand.vmem [shape: bf16[3,128,128], index: 3, kind: input, shape index: {}]
  %s4 = inlined_call_operand.vmem [shape: bf16[3,40,64], index: 4, kind: input, shape index: {}]
  %s5 = inlined_call_operand.vmem [shape: bf16[640,160], index: 5, kind: input, shape index: {}]
  %s6 = inlined_call_operand.vmem [shape: bf16[160,160], index: 6, kind: input, shape index: {}]
  %s7 = inlined_call_operand.vmem [shape: bf16[3,160,128], index: 7, kind: input, shape index: {}]
  %s8 = inlined_call_operand.vmem [shape: bf16[3,16,32], index: 8, kind: input, shape index: {}]
  %s9 = inlined_call_operand.vmem [shape: bf16[8,128,160], index: 9, kind: input, shape index: {}]
  %s10 = inlined_call_operand.vmem [shape: bf16[160,100], index: 10, kind: input, shape index: {}]
  %s11 = inlined_call_operand.vmem [shape: bf16[100,6], index: 11, kind: input, shape index: {}]
  %s12 = inlined_call_operand.vmem [shape: f32[1,6], index: 12, kind: input, shape index: {}]
  %s13 = inlined_call_operand.hbm [shape: f32[2,2,6], index: 13, kind: output, shape index: {}]
  %s14 = sld [smem:[#allocation0]]
  $region85: #{lenet_forward.1} parent=0
    _
  %s16 = ssub.s32 1, %s14
  %s17 = scalar_select 0, %s16, %s14
  $region1: #{lenet_forward.1} parent=0
    #allocation2 [shape = 'u8[2048]{0}', space=vmem, size = 0x800, scoped, tag = 'output window, operand 0']
    #allocation3 [shape = 's32[2]{0}', space=sflag, size = 0x8, scoped, tag = 'scoped memory for lenet_forward.1']
    %18 = vsyncpa [#allocation3], 0
    %s19 = scalar_lea.sflag [#allocation3], 1
    %20 = vsyncpa %s19, 0
    loop: start=0, step=1, limit=4
    $region2: #{lenet_forward.1} parent=1 // loop_pre_header
      _
    $region3: #{lenet_forward.1} parent=1 // loop_header
      %s22 = sphi 0, %s26
      %p23 = scmp.ge.s32.totalorder %s22, 4
      %s32 = sphi 0, %s34
      %s35 = sphi 0, %s32
      %s36 = sphi 0, %s35
      %s52 = sphi 0, %s36
      %s56 = sphi 0, %s56
      %s58 = sphi 0, %s56
      %s59 = sphi 0, %s58
      %s73 = sphi 0, %s59
      %s77 = sphi 0, %s77
      %s79 = sphi 0, %s77
      %s80 = sphi 0, %s79
      %s94 = sphi 0, %s80
      %s98 = sphi 0, %s98
      %s100 = sphi 0, %s98
      %s101 = sphi 0, %s100
      %s115 = sphi 0, %s101
      %s119 = sphi 0, %s119
      %s121 = sphi 0, %s119
      %s122 = sphi 0, %s121
      %s136 = sphi 0, %s122
      %s140 = sphi 0, %s140
      %s142 = sphi 0, %s140
      %s143 = sphi 0, %s142
      %s157 = sphi 0, %s143
      %s161 = sphi 0, %s161
      %s163 = sphi 0, %s161
      %s164 = sphi 0, %s163
      %s178 = sphi 0, %s164
      %s182 = sphi 0, %s182
      %s184 = sphi 0, %s182
      %s185 = sphi 0, %s184
      %s199 = sphi 0, %s185
      %s203 = sphi 0, %s203
      %s205 = sphi 0, %s203
      %s206 = sphi 0, %s205
      %s220 = sphi 0, %s206
      %s224 = sphi 0, %s224
      %s226 = sphi 0, %s224
      %s227 = sphi 0, %s226
      %s241 = sphi 0, %s227
      %s245 = sphi 0, %s245
      %s247 = sphi 0, %s245
      %s248 = sphi 0, %s247
      %s262 = sphi 0, %s248
      %s266 = sphi 0, %s266
      %s268 = sphi 0, %s266
      %s269 = sphi 0, %s268
      %s283 = sphi 0, %s269
      %s287 = sphi 0, %s287
      %s289 = sphi 0, %s287
      %s290 = sphi 0, %s289
      %s304 = sphi 0, %s290
      %s310 = sphi 0, %s312
      %s313 = sphi 0, %s310
      %s314 = sphi 0, %s313
      %s330 = sphi 0, %s314
    $region4: #{lenet_forward.1} parent=1 // loop_header_branch
      %25 = sbr.rel (%p23) target = $region8
    $region5: #{lenet_forward.1} parent=1 // loop_body
      %s27 = ssub.s32 %s22, 1
      %s28 = ssub.s32 %s22, 2
      %s29 = sadd.s32 %s22, 1
      %s30 = ssub.s32 %s22, %s29
      %p31 = scmp.eq.s32.totalorder %s30, 0
      %s33 = sadd.s32 %s32, 1
      %s34 = scalar_select %p31, %s32, %s33
      %p37 = pneg %p31
      %p38 = scmp.eq.s32.totalorder %s22, 1
      %p39 = por %p37, %p38
      %p40 = scmp.ne.s32.totalorder %s32, %s35
      %p41 = scmp.eq.s32.totalorder %s22, 0
      %p42 = por %p40, %p41
      %p43 = scmp.ne.s32.totalorder %s32, %s35
      %p44 = scmp.eq.s32.totalorder %s27, 1
      %p45 = por %p43, %p44
      %p46 = scmp.ne.s32.totalorder %s35, %s36
      %p47 = scmp.eq.s32.totalorder %s27, 0
      %p48 = por %p46, %p47
      %p49 = scmp.ne.s32.totalorder %s35, %s36
      %p50 = scmp.eq.s32.totalorder %s28, 1
      %p51 = por %p49, %p50
      %p53 = scmp.ne.s32.totalorder %s36, %s52
      %p54 = scmp.eq.s32.totalorder %s28, 0
      %p55 = por %p53, %p54
      %s57 = sadd.s32 %s56, 1
      %p60 = scmp.eq.s32.totalorder %s22, 1
      %p61 = scmp.ne.s32.totalorder %s56, %s58
      %p62 = scmp.eq.s32.totalorder %s22, 0
      %p63 = por %p61, %p62
      %p64 = scmp.ne.s32.totalorder %s56, %s58
      %p65 = scmp.eq.s32.totalorder %s27, 1
      %p66 = por %p64, %p65
      %p67 = scmp.ne.s32.totalorder %s58, %s59
      %p68 = scmp.eq.s32.totalorder %s27, 0
      %p69 = por %p67, %p68
      %p70 = scmp.ne.s32.totalorder %s58, %s59
      %p71 = scmp.eq.s32.totalorder %s28, 1
      %p72 = por %p70, %p71
      %p74 = scmp.ne.s32.totalorder %s59, %s73
      %p75 = scmp.eq.s32.totalorder %s28, 0
      %p76 = por %p74, %p75
      %s78 = sadd.s32 %s77, 1
      %p81 = scmp.eq.s32.totalorder %s22, 1
      %p82 = scmp.ne.s32.totalorder %s77, %s79
      %p83 = scmp.eq.s32.totalorder %s22, 0
      %p84 = por %p82, %p83
      %p85 = scmp.ne.s32.totalorder %s77, %s79
      %p86 = scmp.eq.s32.totalorder %s27, 1
      %p87 = por %p85, %p86
      %p88 = scmp.ne.s32.totalorder %s79, %s80
      %p89 = scmp.eq.s32.totalorder %s27, 0
      %p90 = por %p88, %p89
      %p91 = scmp.ne.s32.totalorder %s79, %s80
      %p92 = scmp.eq.s32.totalorder %s28, 1
      %p93 = por %p91, %p92
      %p95 = scmp.ne.s32.totalorder %s80, %s94
      %p96 = scmp.eq.s32.totalorder %s28, 0
      %p97 = por %p95, %p96
      %s99 = sadd.s32 %s98, 1
      %p102 = scmp.eq.s32.totalorder %s22, 1
      %p103 = scmp.ne.s32.totalorder %s98, %s100
      %p104 = scmp.eq.s32.totalorder %s22, 0
      %p105 = por %p103, %p104
      %p106 = scmp.ne.s32.totalorder %s98, %s100
      %p107 = scmp.eq.s32.totalorder %s27, 1
      %p108 = por %p106, %p107
      %p109 = scmp.ne.s32.totalorder %s100, %s101
      %p110 = scmp.eq.s32.totalorder %s27, 0
      %p111 = por %p109, %p110
      %p112 = scmp.ne.s32.totalorder %s100, %s101
      %p113 = scmp.eq.s32.totalorder %s28, 1
      %p114 = por %p112, %p113
      %p116 = scmp.ne.s32.totalorder %s101, %s115
      %p117 = scmp.eq.s32.totalorder %s28, 0
      %p118 = por %p116, %p117
      %s120 = sadd.s32 %s119, 1
      %p123 = scmp.eq.s32.totalorder %s22, 1
      %p124 = scmp.ne.s32.totalorder %s119, %s121
      %p125 = scmp.eq.s32.totalorder %s22, 0
      %p126 = por %p124, %p125
      %p127 = scmp.ne.s32.totalorder %s119, %s121
      %p128 = scmp.eq.s32.totalorder %s27, 1
      %p129 = por %p127, %p128
      %p130 = scmp.ne.s32.totalorder %s121, %s122
      %p131 = scmp.eq.s32.totalorder %s27, 0
      %p132 = por %p130, %p131
      %p133 = scmp.ne.s32.totalorder %s121, %s122
      %p134 = scmp.eq.s32.totalorder %s28, 1
      %p135 = por %p133, %p134
      %p137 = scmp.ne.s32.totalorder %s122, %s136
      %p138 = scmp.eq.s32.totalorder %s28, 0
      %p139 = por %p137, %p138
      %s141 = sadd.s32 %s140, 1
      %p144 = scmp.eq.s32.totalorder %s22, 1
      %p145 = scmp.ne.s32.totalorder %s140, %s142
      %p146 = scmp.eq.s32.totalorder %s22, 0
      %p147 = por %p145, %p146
      %p148 = scmp.ne.s32.totalorder %s140, %s142
      %p149 = scmp.eq.s32.totalorder %s27, 1
      %p150 = por %p148, %p149
      %p151 = scmp.ne.s32.totalorder %s142, %s143
      %p152 = scmp.eq.s32.totalorder %s27, 0
      %p153 = por %p151, %p152
      %p154 = scmp.ne.s32.totalorder %s142, %s143
      %p155 = scmp.eq.s32.totalorder %s28, 1
      %p156 = por %p154, %p155
      %p158 = scmp.ne.s32.totalorder %s143, %s157
      %p159 = scmp.eq.s32.totalorder %s28, 0
      %p160 = por %p158, %p159
      %s162 = sadd.s32 %s161, 1
      %p165 = scmp.eq.s32.totalorder %s22, 1
      %p166 = scmp.ne.s32.totalorder %s161, %s163
      %p167 = scmp.eq.s32.totalorder %s22, 0
      %p168 = por %p166, %p167
      %p169 = scmp.ne.s32.totalorder %s161, %s163
      %p170 = scmp.eq.s32.totalorder %s27, 1
      %p171 = por %p169, %p170
      %p172 = scmp.ne.s32.totalorder %s163, %s164
      %p173 = scmp.eq.s32.totalorder %s27, 0
      %p174 = por %p172, %p173
      %p175 = scmp.ne.s32.totalorder %s163, %s164
      %p176 = scmp.eq.s32.totalorder %s28, 1
      %p177 = por %p175, %p176
      %p179 = scmp.ne.s32.totalorder %s164, %s178
      %p180 = scmp.eq.s32.totalorder %s28, 0
      %p181 = por %p179, %p180
      %s183 = sadd.s32 %s182, 1
      %p186 = scmp.eq.s32.totalorder %s22, 1
      %p187 = scmp.ne.s32.totalorder %s182, %s184
      %p188 = scmp.eq.s32.totalorder %s22, 0
      %p189 = por %p187, %p188
      %p190 = scmp.ne.s32.totalorder %s182, %s184
      %p191 = scmp.eq.s32.totalorder %s27, 1
      %p192 = por %p190, %p191
      %p193 = scmp.ne.s32.totalorder %s184, %s185
      %p194 = scmp.eq.s32.totalorder %s27, 0
      %p195 = por %p193, %p194
      %p196 = scmp.ne.s32.totalorder %s184, %s185
      %p197 = scmp.eq.s32.totalorder %s28, 1
      %p198 = por %p196, %p197
      %p200 = scmp.ne.s32.totalorder %s185, %s199
      %p201 = scmp.eq.s32.totalorder %s28, 0
      %p202 = por %p200, %p201
      %s204 = sadd.s32 %s203, 1
      %p207 = scmp.eq.s32.totalorder %s22, 1
      %p208 = scmp.ne.s32.totalorder %s203, %s205
      %p209 = scmp.eq.s32.totalorder %s22, 0
      %p210 = por %p208, %p209
      %p211 = scmp.ne.s32.totalorder %s203, %s205
      %p212 = scmp.eq.s32.totalorder %s27, 1
      %p213 = por %p211, %p212
      %p214 = scmp.ne.s32.totalorder %s205, %s206
      %p215 = scmp.eq.s32.totalorder %s27, 0
      %p216 = por %p214, %p215
      %p217 = scmp.ne.s32.totalorder %s205, %s206
      %p218 = scmp.eq.s32.totalorder %s28, 1
      %p219 = por %p217, %p218
      %p221 = scmp.ne.s32.totalorder %s206, %s220
      %p222 = scmp.eq.s32.totalorder %s28, 0
      %p223 = por %p221, %p222
      %s225 = sadd.s32 %s224, 1
      %p228 = scmp.eq.s32.totalorder %s22, 1
      %p229 = scmp.ne.s32.totalorder %s224, %s226
      %p230 = scmp.eq.s32.totalorder %s22, 0
      %p231 = por %p229, %p230
      %p232 = scmp.ne.s32.totalorder %s224, %s226
      %p233 = scmp.eq.s32.totalorder %s27, 1
      %p234 = por %p232, %p233
      %p235 = scmp.ne.s32.totalorder %s226, %s227
      %p236 = scmp.eq.s32.totalorder %s27, 0
      %p237 = por %p235, %p236
      %p238 = scmp.ne.s32.totalorder %s226, %s227
      %p239 = scmp.eq.s32.totalorder %s28, 1
      %p240 = por %p238, %p239
      %p242 = scmp.ne.s32.totalorder %s227, %s241
      %p243 = scmp.eq.s32.totalorder %s28, 0
      %p244 = por %p242, %p243
      %s246 = sadd.s32 %s245, 1
      %p249 = scmp.eq.s32.totalorder %s22, 1
      %p250 = scmp.ne.s32.totalorder %s245, %s247
      %p251 = scmp.eq.s32.totalorder %s22, 0
      %p252 = por %p250, %p251
      %p253 = scmp.ne.s32.totalorder %s245, %s247
      %p254 = scmp.eq.s32.totalorder %s27, 1
      %p255 = por %p253, %p254
      %p256 = scmp.ne.s32.totalorder %s247, %s248
      %p257 = scmp.eq.s32.totalorder %s27, 0
      %p258 = por %p256, %p257
      %p259 = scmp.ne.s32.totalorder %s247, %s248
      %p260 = scmp.eq.s32.totalorder %s28, 1
      %p261 = por %p259, %p260
      %p263 = scmp.ne.s32.totalorder %s248, %s262
      %p264 = scmp.eq.s32.totalorder %s28, 0
      %p265 = por %p263, %p264
      %s267 = sadd.s32 %s266, 1
      %p270 = scmp.eq.s32.totalorder %s22, 1
      %p271 = scmp.ne.s32.totalorder %s266, %s268
      %p272 = scmp.eq.s32.totalorder %s22, 0
      %p273 = por %p271, %p272
      %p274 = scmp.ne.s32.totalorder %s266, %s268
      %p275 = scmp.eq.s32.totalorder %s27, 1
      %p276 = por %p274, %p275
      %p277 = scmp.ne.s32.totalorder %s268, %s269
      %p278 = scmp.eq.s32.totalorder %s27, 0
      %p279 = por %p277, %p278
      %p280 = scmp.ne.s32.totalorder %s268, %s269
      %p281 = scmp.eq.s32.totalorder %s28, 1
      %p282 = por %p280, %p281
      %p284 = scmp.ne.s32.totalorder %s269, %s283
      %p285 = scmp.eq.s32.totalorder %s28, 0
      %p286 = por %p284, %p285
      %s288 = sadd.s32 %s287, 1
      %p291 = scmp.eq.s32.totalorder %s22, 1
      %p292 = scmp.ne.s32.totalorder %s287, %s289
      %p293 = scmp.eq.s32.totalorder %s22, 0
      %p294 = por %p292, %p293
      %p295 = scmp.ne.s32.totalorder %s287, %s289
      %p296 = scmp.eq.s32.totalorder %s27, 1
      %p297 = por %p295, %p296
      %p298 = scmp.ne.s32.totalorder %s289, %s290
      %p299 = scmp.eq.s32.totalorder %s27, 0
      %p300 = por %p298, %p299
      %p301 = scmp.ne.s32.totalorder %s289, %s290
      %p302 = scmp.eq.s32.totalorder %s28, 1
      %p303 = por %p301, %p302
      %p305 = scmp.ne.s32.totalorder %s290, %s304
      %p306 = scmp.eq.s32.totalorder %s28, 0
      %p307 = por %p305, %p306
      %s308 = ssub.s32 %s22, %s29
      %p309 = scmp.eq.s32.totalorder %s308, 0
      %s311 = sadd.s32 %s310, 1
      %s312 = scalar_select %p309, %s310, %s311
      %p315 = pneg %p309
      %p316 = scmp.eq.s32.totalorder %s22, 1
      %p317 = por %p315, %p316
      %p318 = scmp.ne.s32.totalorder %s310, %s313
      %p319 = scmp.eq.s32.totalorder %s22, 0
      %p320 = por %p318, %p319
      %p321 = scmp.ne.s32.totalorder %s310, %s313
      %p322 = scmp.eq.s32.totalorder %s27, 1
      %p323 = por %p321, %p322
      %p324 = scmp.ne.s32.totalorder %s313, %s314
      %p325 = scmp.eq.s32.totalorder %s27, 0
      %p326 = por %p324, %p325
      %p327 = scmp.ne.s32.totalorder %s313, %s314
      %p328 = scmp.eq.s32.totalorder %s28, 1
      %p329 = por %p327, %p328
      %p331 = scmp.ne.s32.totalorder %s314, %s330
      %p332 = scmp.eq.s32.totalorder %s28, 0
      %p333 = por %p331, %p332
      %p334 = scmp.le.s32.totalorder 1, %s22
      %p335 = scmp.lt.s32.totalorder %s22, 3
      %p336 = pnand %p334, %p335
      %p337 = pneg %p336
      // Predicated region
      $region9: #{lenet_forward.1} parent=5 // pred_check
        _
      $region10: #{lenet_forward.1} parent=5 // pred_check_branch
        %339 = sbr.rel (%p336) target = $region12
      $region11: #{lenet_forward.1} parent=5 // pred_region
        %s340 = ssub.s32 %s22, 1
        // Predicated region
        $region13: #{lenet_forward.1} parent=11 // pred_check
          %p341 = pneg %p69
        $region14: #{lenet_forward.1} parent=11 // pred_check_branch
          %343 = sbr.rel (%p341) target = $region16
        $region15: #{lenet_forward.1} parent=11 // pred_region
          _
        $region16: #{lenet_forward.1} parent=11 // pred_fallthru
          _
        // Predicated region
        $region17: #{lenet_forward.1} parent=11 // pred_check
          %p344 = pneg %p90
        $region18: #{lenet_forward.1} parent=11 // pred_check_branch
          %346 = sbr.rel (%p344) target = $region20
        $region19: #{lenet_forward.1} parent=11 // pred_region
          _
        $region20: #{lenet_forward.1} parent=11 // pred_fallthru
          _
        // Predicated region
        $region21: #{lenet_forward.1} parent=11 // pred_check
          %p347 = pneg %p111
        $region22: #{lenet_forward.1} parent=11 // pred_check_branch
          %349 = sbr.rel (%p347) target = $region24
        $region23: #{lenet_forward.1} parent=11 // pred_region
          _
        $region24: #{lenet_forward.1} parent=11 // pred_fallthru
          _
        // Predicated region
        $region25: #{lenet_forward.1} parent=11 // pred_check
          %p350 = pneg %p132
        $region26: #{lenet_forward.1} parent=11 // pred_check_branch
          %352 = sbr.rel (%p350) target = $region28
        $region27: #{lenet_forward.1} parent=11 // pred_region
          _
        $region28: #{lenet_forward.1} parent=11 // pred_fallthru
          _
        // Predicated region
        $region29: #{lenet_forward.1} parent=11 // pred_check
          %p353 = pneg %p153
        $region30: #{lenet_forward.1} parent=11 // pred_check_branch
          %355 = sbr.rel (%p353) target = $region32
        $region31: #{lenet_forward.1} parent=11 // pred_region
          _
        $region32: #{lenet_forward.1} parent=11 // pred_fallthru
          _
        // Predicated region
        $region33: #{lenet_forward.1} parent=11 // pred_check
          %p356 = pneg %p174
        $region34: #{lenet_forward.1} parent=11 // pred_check_branch
          %358 = sbr.rel (%p356) target = $region36
        $region35: #{lenet_forward.1} parent=11 // pred_region
          _
        $region36: #{lenet_forward.1} parent=11 // pred_fallthru
          _
        // Predicated region
        $region37: #{lenet_forward.1} parent=11 // pred_check
          %p359 = pneg %p195
        $region38: #{lenet_forward.1} parent=11 // pred_check_branch
          %361 = sbr.rel (%p359) target = $region40
        $region39: #{lenet_forward.1} parent=11 // pred_region
          _
        $region40: #{lenet_forward.1} parent=11 // pred_fallthru
          _
        // Predicated region
        $region41: #{lenet_forward.1} parent=11 // pred_check
          %p362 = pneg %p216
        $region42: #{lenet_forward.1} parent=11 // pred_check_branch
          %364 = sbr.rel (%p362) target = $region44
        $region43: #{lenet_forward.1} parent=11 // pred_region
          _
        $region44: #{lenet_forward.1} parent=11 // pred_fallthru
          _
        // Predicated region
        $region45: #{lenet_forward.1} parent=11 // pred_check
          %p365 = pneg %p237
        $region46: #{lenet_forward.1} parent=11 // pred_check_branch
          %367 = sbr.rel (%p365) target = $region48
        $region47: #{lenet_forward.1} parent=11 // pred_region
          _
        $region48: #{lenet_forward.1} parent=11 // pred_fallthru
          _
        // Predicated region
        $region49: #{lenet_forward.1} parent=11 // pred_check
          %p368 = pneg %p258
        $region50: #{lenet_forward.1} parent=11 // pred_check_branch
          %370 = sbr.rel (%p368) target = $region52
        $region51: #{lenet_forward.1} parent=11 // pred_region
          _
        $region52: #{lenet_forward.1} parent=11 // pred_fallthru
          _
        // Predicated region
        $region53: #{lenet_forward.1} parent=11 // pred_check
          %p371 = pneg %p279
        $region54: #{lenet_forward.1} parent=11 // pred_check_branch
          %373 = sbr.rel (%p371) target = $region56
        $region55: #{lenet_forward.1} parent=11 // pred_region
          _
        $region56: #{lenet_forward.1} parent=11 // pred_fallthru
          _
        // Predicated region
        $region57: #{lenet_forward.1} parent=11 // pred_check
          %p374 = pneg %p300
        $region58: #{lenet_forward.1} parent=11 // pred_check_branch
          %376 = sbr.rel (%p374) target = $region60
        $region59: #{lenet_forward.1} parent=11 // pred_region
          _
        $region60: #{lenet_forward.1} parent=11 // pred_fallthru
          _
      $region12: #{lenet_forward.1} parent=5 // pred_fallthru
        _
      %p377 = scmp.lt.s32.totalorder %s22, 2
      // Predicated region
      $region61: #{lenet_forward.1} parent=5 // pred_check
        %p378 = pneg %p377
      $region62: #{lenet_forward.1} parent=5 // pred_check_branch
        %380 = sbr.rel (%p378) target = $region64
      $region63: #{lenet_forward.1} parent=5 // pred_region
        // Predicated region
        $region65: #{lenet_forward.1} parent=63 // pred_check
          %p381 = pneg %p42
        $region66: #{lenet_forward.1} parent=63 // pred_check_branch
          %383 = sbr.rel (%p381) target = $region68
        $region67: #{lenet_forward.1} parent=63 // pred_region
          %s384 = smul.u32 2, %s22
          %p385 = scmp.lt.s32.totalorder %s384, 3
          %s386 = scalar_select %p385, %s384, 3
          %s387 = smul.addr %s386, 5
          %s388 = smul.addr %s387, 4
          %s389 = scalar_lea.vmem %s0, %s388
          %s390 = smul.u32 2, %s22
        $region68: #{lenet_forward.1} parent=63 // pred_fallthru
          _
      $region64: #{lenet_forward.1} parent=5 // pred_fallthru
        _
      %p391 = scmp.le.s32.totalorder 1, %s22
      %p392 = scmp.lt.s32.totalorder %s22, 3
      %p393 = pnand %p391, %p392
      %p394 = pneg %p393
      // Predicated region
      $region69: #{lenet_forward.1} parent=5 // pred_check
        _
      $region70: #{lenet_forward.1} parent=5 // pred_check_branch
        %396 = sbr.rel (%p393) target = $region72
      $region71: #{lenet_forward.1} parent=5 // pred_region
        %s397 = ssub.s32 %s22, 1
        %s398 = smul.u32 2, %s27
        %p399 = scmp.lt.s32.totalorder %s398, 3
        %s400 = scalar_select %p399, %s398, 3
        %s401 = smul.addr %s400, 5
        %s402 = smul.addr %s401, 4
        %s403 = scalar_lea.vmem %s0, %s402
        %p404 = pneg %p48
        %p405 = pneg %p45
        %p406 = pneg %p69
        %p407 = pneg %p66
        %p408 = pneg %p90
        %p409 = pneg %p87
        %p410 = pneg %p111
        %p411 = pneg %p108
        %p412 = pneg %p132
        %p413 = pneg %p129
        %p414 = pneg %p153
        %p415 = pneg %p150
        %p416 = pneg %p174
        %p417 = pneg %p171
        %p418 = pneg %p195
        %p419 = pneg %p192
        %p420 = pneg %p216
        %p421 = pneg %p213
        %p422 = pneg %p237
        %p423 = pneg %p234
        %p424 = pneg %p258
        %p425 = pneg %p255
        %p426 = pneg %p279
        %p427 = pneg %p276
        %p428 = pneg %p300
        %p429 = pneg %p297
        %p430 = pneg %p326
        %p431 = pneg %p323
        %s432 = sand.u32 %s313, 1
        %s433 = scalar_lea.sflag [#allocation3], %s432
        %s434 = sand.u32 %s313, 1
        %s435 = smul.addr %s434, 2
        %s436 = scalar_lea.vmem [#allocation2], %s435
        %s437 = smul.u32 2, %s27
        %p438 = scmp.lt.s32.totalorder %s437, 3
        %s439 = scalar_select %p438, %s437, 3
        %s440 = smul.addr %s439, 5
        %s441 = smul.addr %s440, 4
        %s442 = scalar_lea.vmem %s0, %s441
        %s443 = smul.u32 2, %s27
        %v445 = vld [vmem:[%s442] sm:$0xf]
        %v446 = vld [vmem:[%s442 + $0x4] sm:$0xf]
        %v447 = vld [vmem:[%s442 + $0x8] sm:$0xf]
        %v448 = vld [vmem:[%s442 + $0xc] sm:$0xf]
        %v449 = vld [vmem:[%s442 + $0x10] sm:$0x3]
        %v450 = vld [vmem:[%s442 + $0x14] sm:$0xf]
        %v451 = vld [vmem:[%s442 + $0x18] sm:$0xf]
        %v452 = vld [vmem:[%s442 + $0x1c] sm:$0xf]
        %v453 = vld [vmem:[%s442 + $0x20] sm:$0xf]
        %v454 = vld [vmem:[%s442 + $0x24] sm:$0x3]
        %v459 = vunpack.c.l.b16 %v445
        %v460 = vunpack.c.l.b16 %v446
        %v461 = vunpack.c.l.b16 %v447
        %v462 = vunpack.c.l.b16 %v448
        %v463 = vpack.c.b16 %v460, %v459
        %v464 = vpack.c.b16 %v462, %v461
        %v468 = vunpack.c.l.b16 %v449
        %v469 = vpack.c.b16 %v468, %v468
        %vm470 = vsmask.f32 7424
        %v472 = vshrl.u32 %v463, 16
        %v474 = vshll.u32 %v463, 16
        %v476 = vrot.slane %v474, 1
        %v477 = vor.u32 %v472, %v476
        %v479 = vshll.u32 %v464, 16
        %v481 = vrot.slane %v479, 1
        %v482 = vsel %vm470, %v477, %v481
        %v483 = vshrl.u32 %v464, 16
        %v485 = vor.u32 %v483, %v481
        %v487 = vshll.u32 %v469, 16
        %v489 = vrot.slane %v487, 1
        %v490 = vsel %vm470, %v485, %v489
        %vm493 = vcmask 1046528
        %v494 = vrot.slane %v463, 1
        %v495 = vrot.slane %v464, 1
        %v496 = vsel %vm493, %v494, %v495
        %v497 = vrot.slane %v469, 1
        %v498 = vsel %vm493, %v495, %v497
        %vm501 = vsmask.f32 6400
        %v502 = vrot.slane %v472, 1
        %v503 = vrot.slane %v474, 2
        %v504 = vor.u32 %v502, %v503
        %v505 = vrot.slane %v483, 1
        %v506 = vrot.slane %v479, 2
        %v507 = vor.u32 %v505, %v506
        %v508 = vsel %vm501, %v504, %v507
        %v509 = vshrl.u32 %v469, 16
        %v511 = vrot.slane %v509, 1
        %v512 = vrot.slane %v487, 2
        %v513 = vor.u32 %v511, %v512
        %v514 = vsel %vm501, %v507, %v513
        %vm517 = vcmask 1045504
        %v518 = vrot.slane %v463, 2
        %v519 = vrot.slane %v464, 2
        %v520 = vsel %vm517, %v518, %v519
        %v521 = vrot.slane %v469, 2
        %v522 = vsel %vm517, %v519, %v521
        %v529 = vunpack.c.l.b16 %v450
        %v530 = vunpack.c.l.b16 %v451
        %v531 = vunpack.c.l.b16 %v452
        %v532 = vunpack.c.l.b16 %v453
        %v533 = vpack.c.b16 %v530, %v529
        %v534 = vpack.c.b16 %v532, %v531
        %v538 = vunpack.c.l.b16 %v454
        %v539 = vpack.c.b16 %v538, %v538
        %v541 = vshrl.u32 %v533, 16
        %v543 = vshll.u32 %v533, 16
        %v545 = vrot.slane %v543, 1
        %v546 = vor.u32 %v541, %v545
        %v548 = vshll.u32 %v534, 16
        %v550 = vrot.slane %v548, 1
        %v551 = vsel %vm470, %v546, %v550
        %v552 = vshrl.u32 %v534, 16
        %v554 = vor.u32 %v552, %v550
        %v556 = vshll.u32 %v539, 16
        %v558 = vrot.slane %v556, 1
        %v559 = vsel %vm470, %v554, %v558
        %v562 = vrot.slane %v533, 1
        %v563 = vrot.slane %v534, 1
        %v564 = vsel %vm493, %v562, %v563
        %v565 = vrot.slane %v539, 1
        %v566 = vsel %vm493, %v563, %v565
        %v569 = vrot.slane %v541, 1
        %v570 = vrot.slane %v543, 2
        %v571 = vor.u32 %v569, %v570
        %v572 = vrot.slane %v552, 1
        %v573 = vrot.slane %v548, 2
        %v574 = vor.u32 %v572, %v573
        %v575 = vsel %vm501, %v571, %v574
        %v576 = vshrl.u32 %v539, 16
        %v578 = vrot.slane %v576, 1
        %v579 = vrot.slane %v556, 2
        %v580 = vor.u32 %v578, %v579
        %v581 = vsel %vm501, %v574, %v580
        %v584 = vrot.slane %v533, 2
        %v585 = vrot.slane %v534, 2
        %v586 = vsel %vm517, %v584, %v585
        %v587 = vrot.slane %v539, 2
        %v588 = vsel %vm517, %v585, %v587
        %v591 = vld [vmem:[%s1] sm:$0xf]
        %v592 = vld [vmem:[%s1 + $0x4] sm:$0xf]
        %v593 = vld [vmem:[%s1 + $0x8] sm:$0xf]
        %v594 = vld [vmem:[%s1 + $0xc] sm:$0xf]
        %v595 = vld [vmem:[%s1 + $0x10] sm:$0xf]
        %v596 = vld [vmem:[%s1 + $0x14] sm:$0xf]
        %v597 = vld [vmem:[%s1 + $0x18] sm:$0xf]
        %v598 = vld [vmem:[%s1 + $0x1c] sm:$0xf]
        %v599 = vld [vmem:[%s1 + $0x20] sm:$0xf]
        %v600 = vld [vmem:[%s1 + $0x24] sm:$0xf]
        %v601 = vld [vmem:[%s1 + $0x28] sm:$0xf]
        %v602 = vld [vmem:[%s1 + $0x2c] sm:$0xf]
        %v603 = vld [vmem:[%s1 + $0x30] sm:$0xf]
        %v604 = vld [vmem:[%s1 + $0x34] sm:$0xf]
        %v605 = vld [vmem:[%s1 + $0x38] sm:$0xf]
        %v606 = vld [vmem:[%s1 + $0x3c] sm:$0xf]
        %v607 = vld [vmem:[%s1 + $0x40] sm:$0xf]
        %v608 = vld [vmem:[%s1 + $0x44] sm:$0xf]
        %v609 = vld [vmem:[%s1 + $0x48] sm:$0xf]
        %v610 = vld [vmem:[%s1 + $0x4c] sm:$0xf]
        %v611 = vld [vmem:[%s1 + $0x50] sm:$0xf]
        %v612 = vld [vmem:[%s1 + $0x54] sm:$0xf]
        %v613 = vld [vmem:[%s1 + $0x58] sm:$0xf]
        %v614 = vld [vmem:[%s1 + $0x5c] sm:$0xf]
        %v615 = vld [vmem:[%s1 + $0x60] sm:$0xf]
        %v616 = vld [vmem:[%s1 + $0x64] sm:$0xf]
        %v617 = vld [vmem:[%s1 + $0x68] sm:$0xf]
        %v618 = vld [vmem:[%s1 + $0x6c] sm:$0xf]
        %v619 = vld [vmem:[%s1 + $0x70] sm:$0xf]
        %v620 = vld [vmem:[%s1 + $0x74] sm:$0xf]
        %v621 = vld [vmem:[%s1 + $0x78] sm:$0xf]
        %v622 = vld [vmem:[%s1 + $0x7c] sm:$0xf]
        %v623 = vld [vmem:[%s1 + $0x80] sm:$0xf]
        %v624 = vld [vmem:[%s1 + $0x84] sm:$0xf]
        %v625 = vld [vmem:[%s1 + $0x88] sm:$0xf]
        %v626 = vld [vmem:[%s1 + $0x8c] sm:$0xf]
        %v627 = vld [vmem:[%s1 + $0x90] sm:$0xf]
        %v628 = vld [vmem:[%s1 + $0x94] sm:$0xf]
        %v629 = vld [vmem:[%s1 + $0x98] sm:$0xf]
        %v630 = vld [vmem:[%s1 + $0x9c] sm:$0xf]
        %v631 = vld [vmem:[%s1 + $0xa0] sm:$0xf]
        %v632 = vld [vmem:[%s1 + $0xa4] sm:$0xf]
        %v633 = vld [vmem:[%s1 + $0xa8] sm:$0xf]
        %v634 = vld [vmem:[%s1 + $0xac] sm:$0xf]
        %v635 = vld [vmem:[%s1 + $0xb0] sm:$0xf]
        %v636 = vld [vmem:[%s1 + $0xb4] sm:$0xf]
        %v637 = vld [vmem:[%s1 + $0xb8] sm:$0xf]
        %v638 = vld [vmem:[%s1 + $0xbc] sm:$0xf]
        %v639 = vld [vmem:[%s1 + $0xc0] sm:$0xf]
        %v640 = vld [vmem:[%s1 + $0xc4] sm:$0xf]
        %v641 = vld [vmem:[%s1 + $0xc8] sm:$0xf]
        %v642 = vld [vmem:[%s1 + $0xcc] sm:$0xf]
        %v643 = vld [vmem:[%s1 + $0xd0] sm:$0xf]
        %v644 = vld [vmem:[%s1 + $0xd4] sm:$0xf]
        %v645 = vld [vmem:[%s1 + $0xd8] sm:$0xf]
        %v646 = vld [vmem:[%s1 + $0xdc] sm:$0xf]
        %v647 = vld [vmem:[%s1 + $0xe0] sm:$0xf]
        %v648 = vld [vmem:[%s1 + $0xe4] sm:$0xf]
        %v649 = vld [vmem:[%s1 + $0xe8] sm:$0xf]
        %v650 = vld [vmem:[%s1 + $0xec] sm:$0xf]
        %v651 = vld [vmem:[%s1 + $0xf0] sm:$0xf]
        %v652 = vld [vmem:[%s1 + $0xf4] sm:$0xf]
        %v653 = vld [vmem:[%s1 + $0xf8] sm:$0xf]
        %v654 = vld [vmem:[%s1 + $0xfc] sm:$0xf]
        %v655 = vld [vmem:[%s1 + $0x100] sm:$0xf]
        %v656 = vld [vmem:[%s1 + $0x104] sm:$0xf]
        %v657 = vld [vmem:[%s1 + $0x108] sm:$0xf]
        %v658 = vld [vmem:[%s1 + $0x10c] sm:$0xf]
        %v659 = vld [vmem:[%s1 + $0x110] sm:$0xf]
        %v660 = vld [vmem:[%s1 + $0x114] sm:$0xf]
        %v661 = vld [vmem:[%s1 + $0x118] sm:$0xf]
        %v662 = vld [vmem:[%s1 + $0x11c] sm:$0xf]
        %v663 = vld [vmem:[%s1 + $0x120] sm:$0xf]
        %v664 = vld [vmem:[%s1 + $0x124] sm:$0xf]
        %v665 = vld [vmem:[%s1 + $0x128] sm:$0xf]
        %v666 = vld [vmem:[%s1 + $0x12c] sm:$0xf]
        %v667 = vld [vmem:[%s1 + $0x130] sm:$0xf]
        %v668 = vld [vmem:[%s1 + $0x134] sm:$0xf]
        %v669 = vld [vmem:[%s1 + $0x138] sm:$0xf]
        %v670 = vld [vmem:[%s1 + $0x13c] sm:$0xf]
        %v751 = vunpack.c.l.b16 %v591
        %v752 = vunpack.c.l.b16 %v592
        %v753 = vunpack.c.l.b16 %v593
        %v754 = vunpack.c.l.b16 %v594
        %v755 = vunpack.c.l.b16 %v595
        %v756 = vunpack.c.l.b16 %v596
        %v757 = vunpack.c.l.b16 %v597
        %v758 = vunpack.c.l.b16 %v598
        %v759 = vunpack.c.l.b16 %v599
        %v760 = vunpack.c.l.b16 %v600
        %v761 = vunpack.c.l.b16 %v601
        %v762 = vunpack.c.l.b16 %v602
        %v763 = vunpack.c.l.b16 %v603
        %v764 = vunpack.c.l.b16 %v604
        %v765 = vunpack.c.l.b16 %v605
        %v766 = vunpack.c.l.b16 %v606
        %v767 = vunpack.c.l.b16 %v607
        %v768 = vunpack.c.l.b16 %v608
        %v769 = vunpack.c.l.b16 %v609
        %v770 = vunpack.c.l.b16 %v610
        %v771 = vunpack.c.l.b16 %v611
        %v772 = vunpack.c.l.b16 %v612
        %v773 = vunpack.c.l.b16 %v613
        %v774 = vunpack.c.l.b16 %v614
        %v775 = vunpack.c.l.b16 %v615
        %v776 = vunpack.c.l.b16 %v616
        %v777 = vunpack.c.l.b16 %v617
        %v778 = vunpack.c.l.b16 %v618
        %v779 = vunpack.c.l.b16 %v619
        %v780 = vunpack.c.l.b16 %v620
        %v781 = vunpack.c.l.b16 %v621
        %v782 = vunpack.c.l.b16 %v622
        %v783 = vunpack.c.l.b16 %v623
        %v784 = vunpack.c.l.b16 %v624
        %v785 = vunpack.c.l.b16 %v625
        %v786 = vunpack.c.l.b16 %v626
        %v787 = vunpack.c.l.b16 %v627
        %v788 = vunpack.c.l.b16 %v628
        %v789 = vunpack.c.l.b16 %v629
        %v790 = vunpack.c.l.b16 %v630
        %v791 = vunpack.c.l.b16 %v631
        %v792 = vunpack.c.l.b16 %v632
        %v793 = vunpack.c.l.b16 %v633
        %v794 = vunpack.c.l.b16 %v634
        %v795 = vunpack.c.l.b16 %v635
        %v796 = vunpack.c.l.b16 %v636
        %v797 = vunpack.c.l.b16 %v637
        %v798 = vunpack.c.l.b16 %v638
        %v799 = vunpack.c.l.b16 %v639
        %v800 = vunpack.c.l.b16 %v640
        %v801 = vunpack.c.l.b16 %v641
        %v802 = vunpack.c.l.b16 %v642
        %v803 = vunpack.c.l.b16 %v643
        %v804 = vunpack.c.l.b16 %v644
        %v805 = vunpack.c.l.b16 %v645
        %v806 = vunpack.c.l.b16 %v646
        %v807 = vunpack.c.l.b16 %v647
        %v808 = vunpack.c.l.b16 %v648
        %v809 = vunpack.c.l.b16 %v649
        %v810 = vunpack.c.l.b16 %v650
        %v811 = vunpack.c.l.b16 %v651
        %v812 = vunpack.c.l.b16 %v652
        %v813 = vunpack.c.l.b16 %v653
        %v814 = vunpack.c.l.b16 %v654
        %v815 = vunpack.c.l.b16 %v655
        %v816 = vunpack.c.l.b16 %v656
        %v817 = vunpack.c.l.b16 %v657
        %v818 = vunpack.c.l.b16 %v658
        %v819 = vunpack.c.l.b16 %v659
        %v820 = vunpack.c.l.b16 %v660
        %v821 = vunpack.c.l.b16 %v661
        %v822 = vunpack.c.l.b16 %v662
        %v823 = vunpack.c.l.b16 %v663
        %v824 = vunpack.c.l.b16 %v664
        %v825 = vunpack.c.l.b16 %v665
        %v826 = vunpack.c.l.b16 %v666
        %v827 = vunpack.c.l.b16 %v667
        %v828 = vunpack.c.l.b16 %v668
        %v829 = vunpack.c.l.b16 %v669
        %v830 = vunpack.c.l.b16 %v670
        %v831 = vpack.c.b16 %v752, %v751
        %v832 = vpack.c.b16 %v754, %v753
        %v833 = vpack.c.b16 %v756, %v755
        %v834 = vpack.c.b16 %v758, %v757
        %v835 = vpack.c.b16 %v760, %v759
        %v836 = vpack.c.b16 %v762, %v761
        %v837 = vpack.c.b16 %v764, %v763
        %v838 = vpack.c.b16 %v766, %v765
        %v839 = vpack.c.b16 %v768, %v767
        %v840 = vpack.c.b16 %v770, %v769
        %v841 = vpack.c.b16 %v772, %v771
        %v842 = vpack.c.b16 %v774, %v773
        %v843 = vpack.c.b16 %v776, %v775
        %v844 = vpack.c.b16 %v778, %v777
        %v845 = vpack.c.b16 %v780, %v779
        %v846 = vpack.c.b16 %v782, %v781
        %v847 = vpack.c.b16 %v784, %v783
        %v848 = vpack.c.b16 %v786, %v785
        %v849 = vpack.c.b16 %v788, %v787
        %v850 = vpack.c.b16 %v790, %v789
        %v851 = vpack.c.b16 %v792, %v791
        %v852 = vpack.c.b16 %v794, %v793
        %v853 = vpack.c.b16 %v796, %v795
        %v854 = vpack.c.b16 %v798, %v797
        %v855 = vpack.c.b16 %v800, %v799
        %v856 = vpack.c.b16 %v802, %v801
        %v857 = vpack.c.b16 %v804, %v803
        %v858 = vpack.c.b16 %v806, %v805
        %v859 = vpack.c.b16 %v808, %v807
        %v860 = vpack.c.b16 %v810, %v809
        %v861 = vpack.c.b16 %v812, %v811
        %v862 = vpack.c.b16 %v814, %v813
        %v863 = vpack.c.b16 %v816, %v815
        %v864 = vpack.c.b16 %v818, %v817
        %v865 = vpack.c.b16 %v820, %v819
        %v866 = vpack.c.b16 %v822, %v821
        %v867 = vpack.c.b16 %v824, %v823
        %v868 = vpack.c.b16 %v826, %v825
        %v869 = vpack.c.b16 %v828, %v827
        %v870 = vpack.c.b16 %v830, %v829
        %911 = vmatprep.subr.bf16.mxu0 0
        %912 = vmatpush1.bf16.msra.mxu0 %v838
        %913 = vmatprep.subr.bf16.mxu0 0
        %914 = vmatpush1.bf16.msra.mxu0 %v837
        %915 = vmatprep.subr.bf16.mxu0 0
        %916 = vmatpush1.bf16.msra.mxu0 %v836
        %917 = vmatprep.subr.bf16.mxu0 0
        %918 = vmatpush1.bf16.msra.mxu0 %v835
        %919 = vmatprep.subr.bf16.mxu0 0
        %920 = vmatpush1.bf16.msra.mxu0 %v834
        %921 = vmatprep.subr.bf16.mxu0 0
        %922 = vmatpush1.bf16.msra.mxu0 %v833
        %923 = vmatprep.subr.bf16.mxu0 0
        %924 = vmatpush1.bf16.msra.mxu0 %v832
        %925 = vmatprep.subr.bf16.mxu0 0
        %926 = vmatpush1.bf16.msra.mxu0 %v831
        %927 = vmatprep.subr.bf16.mxu0 0
        %928 = vmatpush2.bf16.msra.mxu0 %v846
        %929 = vmatprep.subr.bf16.mxu0 0
        %930 = vmatpush2.bf16.msra.mxu0 %v845
        %931 = vmatprep.subr.bf16.mxu0 0
        %932 = vmatpush2.bf16.msra.mxu0 %v844
        %933 = vmatprep.subr.bf16.mxu0 0
        %934 = vmatpush2.bf16.msra.mxu0 %v843
        %935 = vmatprep.subr.bf16.mxu0 0
        %936 = vmatpush2.bf16.msra.mxu0 %v842
        %937 = vmatprep.subr.bf16.mxu0 0
        %938 = vmatpush2.bf16.msra.mxu0 %v841
        %939 = vmatprep.subr.bf16.mxu0 0
        %940 = vmatpush2.bf16.msra.mxu0 %v840
        %941 = vmatprep.subr.bf16.mxu0 0
        %942 = vmatpush2.bf16.msra.mxu0 %v839
        %943 = vmatprep.mubr.bf16.mxu0 %v482
        %944 = vmatmul.mubr.bf16.gmra.mxu0 %v463
        %v945 = vpop.f32.mrf.mxu0
        %v946 = vadd.f32 0.0, %v945
        %v947 = vpop.f32.mrf.mxu0
        %v948 = vpop.f32.mrf.mxu0
        %v949 = vadd.f32 0.0, %v948
        %v950 = vpop.f32.mrf.mxu0
        %951 = vmatprep.mubr.bf16.mxu0 %v490
        %952 = vmatmul.mubr.bf16.gmra.mxu0 %v464
        %v953 = vpop.f32.mrf.mxu0
        %v954 = vadd.f32 0.0, %v953
        %v955 = vpop.f32.mrf.mxu0
        %v956 = vpop.f32.mrf.mxu0
        %v957 = vadd.f32 0.0, %v956
        %v958 = vpop.f32.mrf.mxu0
        %959 = vmatprep.mubr.bf16.mxu0 %v551
        %960 = vmatmul.mubr.bf16.gmra.mxu0 %v533
        %v961 = vpop.f32.mrf.mxu0
        %v962 = vadd.f32 0.0, %v961
        %v963 = vpop.f32.mrf.mxu0
        %v964 = vpop.f32.mrf.mxu0
        %v965 = vadd.f32 0.0, %v964
        %v966 = vpop.f32.mrf.mxu0
        %967 = vmatprep.mubr.bf16.mxu0 %v559
        %968 = vmatmul.mubr.bf16.gmra.mxu0 %v534
        %v969 = vpop.f32.mrf.mxu0
        %v970 = vadd.f32 0.0, %v969
        %v971 = vpop.f32.mrf.mxu0
        %v972 = vpop.f32.mrf.mxu0
        %v973 = vadd.f32 0.0, %v972
        %v974 = vpop.f32.mrf.mxu0
        %975 = vdwg.mxu0
        %976 = vmatprep.subr.bf16.mxu0 0
        %977 = vmatpush1.bf16.msra.mxu0 %v854
        %978 = vmatprep.subr.bf16.mxu0 0
        %979 = vmatpush1.bf16.msra.mxu0 %v853
        %980 = vmatprep.subr.bf16.mxu0 0
        %981 = vmatpush1.bf16.msra.mxu0 %v852
        %982 = vmatprep.subr.bf16.mxu0 0
        %983 = vmatpush1.bf16.msra.mxu0 %v851
        %984 = vmatprep.subr.bf16.mxu0 0
        %985 = vmatpush1.bf16.msra.mxu0 %v850
        %986 = vmatprep.subr.bf16.mxu0 0
        %987 = vmatpush1.bf16.msra.mxu0 %v849
        %988 = vmatprep.subr.bf16.mxu0 0
        %989 = vmatpush1.bf16.msra.mxu0 %v848
        %990 = vmatprep.subr.bf16.mxu0 0
        %991 = vmatpush1.bf16.msra.mxu0 %v847
        %992 = vmatprep.subr.bf16.mxu0 0
        %993 = vmatpush2.bf16.msra.mxu0 %v862
        %994 = vmatprep.subr.bf16.mxu0 0
        %995 = vmatpush2.bf16.msra.mxu0 %v861
        %996 = vmatprep.subr.bf16.mxu0 0
        %997 = vmatpush2.bf16.msra.mxu0 %v860
        %998 = vmatprep.subr.bf16.mxu0 0
        %999 = vmatpush2.bf16.msra.mxu0 %v859
        %1000 = vmatprep.subr.bf16.mxu0 0
        %1001 = vmatpush2.bf16.msra.mxu0 %v858
        %1002 = vmatprep.subr.bf16.mxu0 0
        %1003 = vmatpush2.bf16.msra.mxu0 %v857
        %1004 = vmatprep.subr.bf16.mxu0 0
        %1005 = vmatpush2.bf16.msra.mxu0 %v856
        %1006 = vmatprep.subr.bf16.mxu0 0
        %1007 = vmatpush2.bf16.msra.mxu0 %v855
        %1008 = vmatprep.mubr.bf16.mxu0 %v508
        %1009 = vmatmul.mubr.bf16.gmra.mxu0 %v496
        %v1010 = vpop.f32.mrf.mxu0
        %v1011 = vadd.f32 %v946, %v1010
        %v1012 = vpop.f32.mrf.mxu0
        %v1013 = vpop.f32.mrf.mxu0
        %v1014 = vadd.f32 %v949, %v1013
        %v1015 = vpop.f32.mrf.mxu0
        %1016 = vmatprep.mubr.bf16.mxu0 %v514
        %1017 = vmatmul.mubr.bf16.gmra.mxu0 %v498
        %v1018 = vpop.f32.mrf.mxu0
        %v1019 = vadd.f32 %v954, %v1018
        %v1020 = vpop.f32.mrf.mxu0
        %v1021 = vpop.f32.mrf.mxu0
        %v1022 = vadd.f32 %v957, %v1021
        %v1023 = vpop.f32.mrf.mxu0
        %1024 = vmatprep.mubr.bf16.mxu0 %v575
        %1025 = vmatmul.mubr.bf16.gmra.mxu0 %v564
        %v1026 = vpop.f32.mrf.mxu0
        %v1027 = vadd.f32 %v962, %v1026
        %v1028 = vpop.f32.mrf.mxu0
        %v1029 = vpop.f32.mrf.mxu0
        %v1030 = vadd.f32 %v965, %v1029
        %v1031 = vpop.f32.mrf.mxu0
        %1032 = vmatprep.mubr.bf16.mxu0 %v581
        %1033 = vmatmul.mubr.bf16.gmra.mxu0 %v566
        %v1034 = vpop.f32.mrf.mxu0
        %v1035 = vadd.f32 %v970, %v1034
        %v1036 = vpop.f32.mrf.mxu0
        %v1037 = vpop.f32.mrf.mxu0
        %v1038 = vadd.f32 %v973, %v1037
        %v1039 = vpop.f32.mrf.mxu0
        %1040 = vdwg.mxu0
        %1041 = vmatprep.subr.bf16.mxu0 0
        %1042 = vmatpush1.bf16.msra.mxu0 %v870
        %1043 = vmatprep.subr.bf16.mxu0 0
        %1044 = vmatpush1.bf16.msra.mxu0 %v869
        %1045 = vmatprep.subr.bf16.mxu0 0
        %1046 = vmatpush1.bf16.msra.mxu0 %v868
        %1047 = vmatprep.subr.bf16.mxu0 0
        %1048 = vmatpush1.bf16.msra.mxu0 %v867
        %1049 = vmatprep.subr.bf16.mxu0 0
        %1050 = vmatpush1.bf16.msra.mxu0 %v866
        %1051 = vmatprep.subr.bf16.mxu0 0
        %1052 = vmatpush1.bf16.msra.mxu0 %v865
        %1053 = vmatprep.subr.bf16.mxu0 0
        %1054 = vmatpush1.bf16.msra.mxu0 %v864
        %1055 = vmatprep.subr.bf16.mxu0 0
        %1056 = vmatpush1.bf16.msra.mxu0 %v863
        %1057 = vmatprep.subr.bf16.mxu0 0
        %1058 = vmatpush2.bf16.msra.mxu0 0
        %1059 = vmatprep.subr.bf16.mxu0 0
        %1060 = vmatpush2.bf16.msra.mxu0 0
        %1061 = vmatprep.subr.bf16.mxu0 0
        %1062 = vmatpush2.bf16.msra.mxu0 0
        %1063 = vmatprep.subr.bf16.mxu0 0
        %1064 = vmatpush2.bf16.msra.mxu0 0
        %1065 = vmatprep.subr.bf16.mxu0 0
        %1066 = vmatpush2.bf16.msra.mxu0 0
        %1067 = vmatprep.subr.bf16.mxu0 0
        %1068 = vmatpush2.bf16.msra.mxu0 0
        %1069 = vmatprep.subr.bf16.mxu0 0
        %1070 = vmatpush2.bf16.msra.mxu0 0
        %1071 = vmatprep.subr.bf16.mxu0 0
        %1072 = vmatpush2.bf16.msra.mxu0 0
        %1073 = vmatprep.mubr.bf16.mxu0 0
        %1074 = vmatmul.mubr.bf16.gmra.mxu0 %v520
        %v1075 = vpop.f32.mrf.mxu0
        %v1076 = vadd.f32 %v1011, %v1075
        %v1077 = vpop.f32.mrf.mxu0
        %v1078 = vpop.f32.mrf.mxu0
        %v1079 = vadd.f32 %v1014, %v1078
        %v1080 = vpop.f32.mrf.mxu0
        %1081 = vmatprep.mubr.bf16.mxu0 0
        %1082 = vmatmul.mubr.bf16.gmra.mxu0 %v522
        %v1083 = vpop.f32.mrf.mxu0
        %v1084 = vadd.f32 %v1019, %v1083
        %v1085 = vpop.f32.mrf.mxu0
        %v1086 = vpop.f32.mrf.mxu0
        %v1087 = vadd.f32 %v1022, %v1086
        %v1088 = vpop.f32.mrf.mxu0
        %1089 = vmatprep.mubr.bf16.mxu0 0
        %1090 = vmatmul.mubr.bf16.gmra.mxu0 %v586
        %v1091 = vpop.f32.mrf.mxu0
        %v1092 = vadd.f32 %v1027, %v1091
        %v1093 = vpop.f32.mrf.mxu0
        %v1094 = vpop.f32.mrf.mxu0
        %v1095 = vadd.f32 %v1030, %v1094
        %v1096 = vpop.f32.mrf.mxu0
        %1097 = vmatprep.mubr.bf16.mxu0 0
        %1098 = vmatmul.mubr.bf16.gmra.mxu0 %v588
        %v1099 = vpop.f32.mrf.mxu0
        %v1100 = vadd.f32 %v1035, %v1099
        %v1101 = vpop.f32.mrf.mxu0
        %v1102 = vpop.f32.mrf.mxu0
        %v1103 = vadd.f32 %v1038, %v1102
        %v1104 = vpop.f32.mrf.mxu0
        %1105 = vdwg.mxu0
        %v1106 = vmax.f32 %v1076, 0.0
        %v1107 = vmax.f32 %v1079, 0.0
        %v1108 = vmax.f32 %v1084, 0.0
        %v1109 = vmax.f32 %v1087, 0.0
        %v1110 = vmax.f32 %v1092, 0.0
        %v1111 = vmax.f32 %v1095, 0.0
        %v1112 = vmax.f32 %v1100, 0.0
        %v1113 = vmax.f32 %v1103, 0.0
        %v1114 = vmul.f32 %v1106, %v1106
        %v1115 = vmul.f32 %v1107, %v1107
        %v1116 = vmul.f32 %v1108, %v1108
        %v1117 = vmul.f32 %v1109, %v1109
        %v1118 = vmul.f32 %v1110, %v1110
        %v1119 = vmul.f32 %v1111, %v1111
        %v1120 = vmul.f32 %v1112, %v1112
        %v1121 = vmul.f32 %v1113, %v1113
        %v1122 = vpack.c.bf16 %v1115, %v1114
        %v1123 = vpack.c.bf16 %v1117, %v1116
        %v1124 = vpack.c.bf16 %v1119, %v1118
        %v1125 = vpack.c.bf16 %v1121, %v1120
        %v1126 = vld [vmem:[%s2] sm:$0xf]
        %v1127 = vld [vmem:[%s2 + $0x4] sm:$0xf]
        %v1128 = vld [vmem:[%s2 + $0x8] sm:$0xf]
        %v1129 = vld [vmem:[%s2 + $0xc] sm:$0xf]
        %v1130 = vld [vmem:[%s2 + $0x10] sm:$0xf]
        %v1131 = vld [vmem:[%s2 + $0x14] sm:$0xf]
        %v1132 = vld [vmem:[%s2 + $0x18] sm:$0xf]
        %v1133 = vld [vmem:[%s2 + $0x1c] sm:$0xf]
        %v1134 = vld [vmem:[%s2 + $0x20] sm:$0xf]
        %v1135 = vld [vmem:[%s2 + $0x24] sm:$0xf]
        %v1136 = vld [vmem:[%s2 + $0x28] sm:$0xf]
        %v1137 = vld [vmem:[%s2 + $0x2c] sm:$0xf]
        %v1138 = vld [vmem:[%s2 + $0x30] sm:$0xf]
        %v1139 = vld [vmem:[%s2 + $0x34] sm:$0xf]
        %v1140 = vld [vmem:[%s2 + $0x38] sm:$0xf]
        %v1141 = vld [vmem:[%s2 + $0x3c] sm:$0xf]
        %v1158 = vunpack.c.l.b16 %v1126
        %v1159 = vunpack.c.l.b16 %v1127
        %v1160 = vunpack.c.l.b16 %v1128
        %v1161 = vunpack.c.l.b16 %v1129
        %v1162 = vunpack.c.l.b16 %v1130
        %v1163 = vunpack.c.l.b16 %v1131
        %v1164 = vunpack.c.l.b16 %v1132
        %v1165 = vunpack.c.l.b16 %v1133
        %v1166 = vunpack.c.l.b16 %v1134
        %v1167 = vunpack.c.l.b16 %v1135
        %v1168 = vunpack.c.l.b16 %v1136
        %v1169 = vunpack.c.l.b16 %v1137
        %v1170 = vunpack.c.l.b16 %v1138
        %v1171 = vunpack.c.l.b16 %v1139
        %v1172 = vunpack.c.l.b16 %v1140
        %v1173 = vunpack.c.l.b16 %v1141
        %v1174 = vpack.c.b16 %v1159, %v1158
        %v1175 = vpack.c.b16 %v1161, %v1160
        %v1176 = vpack.c.b16 %v1163, %v1162
        %v1177 = vpack.c.b16 %v1165, %v1164
        %v1178 = vpack.c.b16 %v1167, %v1166
        %v1179 = vpack.c.b16 %v1169, %v1168
        %v1180 = vpack.c.b16 %v1171, %v1170
        %v1181 = vpack.c.b16 %v1173, %v1172
        %1190 = vmatprep.subr.bf16.mxu0 0
        %1191 = vmatpush1.bf16.msra.mxu0 %v1181
        %1192 = vmatprep.subr.bf16.mxu0 0
        %1193 = vmatpush1.bf16.msra.mxu0 %v1180
        %1194 = vmatprep.subr.bf16.mxu0 0
        %1195 = vmatpush1.bf16.msra.mxu0 %v1179
        %1196 = vmatprep.subr.bf16.mxu0 0
        %1197 = vmatpush1.bf16.msra.mxu0 %v1178
        %1198 = vmatprep.subr.bf16.mxu0 0
        %1199 = vmatpush1.bf16.msra.mxu0 %v1177
        %1200 = vmatprep.subr.bf16.mxu0 0
        %1201 = vmatpush1.bf16.msra.mxu0 %v1176
        %1202 = vmatprep.subr.bf16.mxu0 0
        %1203 = vmatpush1.bf16.msra.mxu0 %v1175
        %1204 = vmatprep.subr.bf16.mxu0 0
        %1205 = vmatpush1.bf16.msra.mxu0 %v1174
        %1206 = vmatprep.subr.bf16.mxu0 0
        %1207 = vmatpush2.bf16.msra.mxu0 0
        %1208 = vmatprep.subr.bf16.mxu0 0
        %1209 = vmatpush2.bf16.msra.mxu0 0
        %1210 = vmatprep.subr.bf16.mxu0 0
        %1211 = vmatpush2.bf16.msra.mxu0 0
        %1212 = vmatprep.subr.bf16.mxu0 0
        %1213 = vmatpush2.bf16.msra.mxu0 0
        %1214 = vmatprep.subr.bf16.mxu0 0
        %1215 = vmatpush2.bf16.msra.mxu0 0
        %1216 = vmatprep.subr.bf16.mxu0 0
        %1217 = vmatpush2.bf16.msra.mxu0 0
        %1218 = vmatprep.subr.bf16.mxu0 0
        %1219 = vmatpush2.bf16.msra.mxu0 0
        %1220 = vmatprep.subr.bf16.mxu0 0
        %1221 = vmatpush2.bf16.msra.mxu0 0
        %1222 = vmatprep.mubr.bf16.mxu0 0
        %1223 = vmatmul.mubr.bf16.gmra.mxu0 %v1122
        %v1224 = vpop.f32.mrf.mxu0
        %v1225 = vadd.f32 0.0, %v1224
        %v1226 = vpop.f32.mrf.mxu0
        %v1227 = vpop.f32.mrf.mxu0
        %v1228 = vadd.f32 0.0, %v1227
        %v1229 = vpop.f32.mrf.mxu0
        %1230 = vmatprep.mubr.bf16.mxu0 0
        %1231 = vmatmul.mubr.bf16.gmra.mxu0 %v1123
        %v1232 = vpop.f32.mrf.mxu0
        %v1233 = vadd.f32 0.0, %v1232
        %v1234 = vpop.f32.mrf.mxu0
        %v1235 = vpop.f32.mrf.mxu0
        %v1236 = vadd.f32 0.0, %v1235
        %v1237 = vpop.f32.mrf.mxu0
        %1238 = vmatprep.mubr.bf16.mxu0 0
        %1239 = vmatmul.mubr.bf16.gmra.mxu0 %v1124
        %v1240 = vpop.f32.mrf.mxu0
        %v1241 = vadd.f32 0.0, %v1240
        %v1242 = vpop.f32.mrf.mxu0
        %v1243 = vpop.f32.mrf.mxu0
        %v1244 = vadd.f32 0.0, %v1243
        %v1245 = vpop.f32.mrf.mxu0
        %1246 = vmatprep.mubr.bf16.mxu0 0
        %1247 = vmatmul.mubr.bf16.gmra.mxu0 %v1125
        %v1248 = vpop.f32.mrf.mxu0
        %v1249 = vadd.f32 0.0, %v1248
        %v1250 = vpop.f32.mrf.mxu0
        %v1251 = vpop.f32.mrf.mxu0
        %v1252 = vadd.f32 0.0, %v1251
        %v1253 = vpop.f32.mrf.mxu0
        %1254 = vdwg.mxu0
        %v1255 = vmul.f32 %v1225, 2.7777778e-05
        %v1256 = vmul.f32 %v1228, 2.7777778e-05
        %v1257 = vmul.f32 %v1233, 2.7777778e-05
        %v1258 = vmul.f32 %v1236, 2.7777778e-05
        %v1259 = vmul.f32 %v1241, 2.7777778e-05
        %v1260 = vmul.f32 %v1244, 2.7777778e-05
        %v1261 = vmul.f32 %v1249, 2.7777778e-05
        %v1262 = vmul.f32 %v1252, 2.7777778e-05
        %v1263 = vadd.f32 %v1255, 1.0
        %v1264 = vadd.f32 %v1256, 1.0
        %v1265 = vadd.f32 %v1257, 1.0
        %v1266 = vadd.f32 %v1258, 1.0
        %v1267 = vadd.f32 %v1259, 1.0
        %v1268 = vadd.f32 %v1260, 1.0
        %v1269 = vadd.f32 %v1261, 1.0
        %v1270 = vadd.f32 %v1262, 1.0
        %v1271 = vrsqrt.pop %v1263
        %v1272 = vrsqrt.pop %v1264
        %v1273 = vrsqrt.pop %v1265
        %v1274 = vrsqrt.pop %v1266
        %v1275 = vrsqrt.pop %v1267
        %v1276 = vrsqrt.pop %v1268
        %v1277 = vrsqrt.pop %v1269
        %v1278 = vrsqrt.pop %v1270
        %v1279 = vrsqrt.pop %v1263
        %v1280 = vmul.f32 %v1263, %v1279
        %vm1281 = vcmp.eq.f32.partialorder %v1263, inf
        %v1282 = vsel %vm1281, %v1263, %v1280
        %vm1283 = vcmp.eq.f32.partialorder %v1263, 0.0
        %v1284 = vand.u32 %v1263, 2147483648
        %v1285 = vsel %vm1283, %v1284, %v1282
        %v1286 = vrsqrt.pop %v1264
        %v1287 = vmul.f32 %v1264, %v1286
        %vm1288 = vcmp.eq.f32.partialorder %v1264, inf
        %v1289 = vsel %vm1288, %v1264, %v1287
        %vm1290 = vcmp.eq.f32.partialorder %v1264, 0.0
        %v1291 = vand.u32 %v1264, 2147483648
        %v1292 = vsel %vm1290, %v1291, %v1289
        %v1293 = vrsqrt.pop %v1265
        %v1294 = vmul.f32 %v1265, %v1293
        %vm1295 = vcmp.eq.f32.partialorder %v1265, inf
        %v1296 = vsel %vm1295, %v1265, %v1294
        %vm1297 = vcmp.eq.f32.partialorder %v1265, 0.0
        %v1298 = vand.u32 %v1265, 2147483648
        %v1299 = vsel %vm1297, %v1298, %v1296
        %v1300 = vrsqrt.pop %v1266
        %v1301 = vmul.f32 %v1266, %v1300
        %vm1302 = vcmp.eq.f32.partialorder %v1266, inf
        %v1303 = vsel %vm1302, %v1266, %v1301
        %vm1304 = vcmp.eq.f32.partialorder %v1266, 0.0
        %v1305 = vand.u32 %v1266, 2147483648
        %v1306 = vsel %vm1304, %v1305, %v1303
        %v1307 = vrsqrt.pop %v1267
        %v1308 = vmul.f32 %v1267, %v1307
        %vm1309 = vcmp.eq.f32.partialorder %v1267, inf
        %v1310 = vsel %vm1309, %v1267, %v1308
        %vm1311 = vcmp.eq.f32.partialorder %v1267, 0.0
        %v1312 = vand.u32 %v1267, 2147483648
        %v1313 = vsel %vm1311, %v1312, %v1310
        %v1314 = vrsqrt.pop %v1268
        %v1315 = vmul.f32 %v1268, %v1314
        %vm1316 = vcmp.eq.f32.partialorder %v1268, inf
        %v1317 = vsel %vm1316, %v1268, %v1315
        %vm1318 = vcmp.eq.f32.partialorder %v1268, 0.0
        %v1319 = vand.u32 %v1268, 2147483648
        %v1320 = vsel %vm1318, %v1319, %v1317
        %v1321 = vrsqrt.pop %v1269
        %v1322 = vmul.f32 %v1269, %v1321
        %vm1323 = vcmp.eq.f32.partialorder %v1269, inf
        %v1324 = vsel %vm1323, %v1269, %v1322
        %vm1325 = vcmp.eq.f32.partialorder %v1269, 0.0
        %v1326 = vand.u32 %v1269, 2147483648
        %v1327 = vsel %vm1325, %v1326, %v1324
        %v1328 = vrsqrt.pop %v1270
        %v1329 = vmul.f32 %v1270, %v1328
        %vm1330 = vcmp.eq.f32.partialorder %v1270, inf
        %v1331 = vsel %vm1330, %v1270, %v1329
        %vm1332 = vcmp.eq.f32.partialorder %v1270, 0.0
        %v1333 = vand.u32 %v1270, 2147483648
        %v1334 = vsel %vm1332, %v1333, %v1331
        %v1335 = vrsqrt.pop %v1285
        %v1336 = vrsqrt.pop %v1292
        %v1337 = vrsqrt.pop %v1299
        %v1338 = vrsqrt.pop %v1306
        %v1339 = vrsqrt.pop %v1313
        %v1340 = vrsqrt.pop %v1320
        %v1341 = vrsqrt.pop %v1327
        %v1342 = vrsqrt.pop %v1334
        %v1343 = vmul.f32 %v1271, %v1335
        %v1344 = vmul.f32 %v1272, %v1336
        %v1345 = vmul.f32 %v1273, %v1337
        %v1346 = vmul.f32 %v1274, %v1338
        %v1347 = vmul.f32 %v1275, %v1339
        %v1348 = vmul.f32 %v1276, %v1340
        %v1349 = vmul.f32 %v1277, %v1341
        %v1350 = vmul.f32 %v1278, %v1342
        %v1351 = vmul.f32 %v1106, %v1343
        %v1352 = vmul.f32 %v1107, %v1344
        %v1353 = vmul.f32 %v1108, %v1345
        %v1354 = vmul.f32 %v1109, %v1346
        %v1355 = vmul.f32 %v1110, %v1347
        %v1356 = vmul.f32 %v1111, %v1348
        %v1357 = vmul.f32 %v1112, %v1349
        %v1358 = vmul.f32 %v1113, %v1350
        %v1359 = vpack.c.bf16 %v1352, %v1351
        %v1360 = vpack.c.bf16 %v1354, %v1353
        %v1361 = vpack.c.bf16 %v1356, %v1355
        %v1362 = vpack.c.bf16 %v1358, %v1357
        %v1363 = vld [vmem:[%s3] sm:$0xf]
        %v1364 = vld [vmem:[%s3 + $0x4] sm:$0xf]
        %v1365 = vld [vmem:[%s3 + $0x8] sm:$0xf]
        %v1366 = vld [vmem:[%s3 + $0xc] sm:$0xf]
        %v1367 = vld [vmem:[%s3 + $0x10] sm:$0xf]
        %v1368 = vld [vmem:[%s3 + $0x14] sm:$0xf]
        %v1369 = vld [vmem:[%s3 + $0x18] sm:$0xf]
        %v1370 = vld [vmem:[%s3 + $0x1c] sm:$0xf]
        %v1371 = vld [vmem:[%s3 + $0x20] sm:$0xf]
        %v1372 = vld [vmem:[%s3 + $0x24] sm:$0xf]
        %v1373 = vld [vmem:[%s3 + $0x28] sm:$0xf]
        %v1374 = vld [vmem:[%s3 + $0x2c] sm:$0xf]
        %v1375 = vld [vmem:[%s3 + $0x30] sm:$0xf]
        %v1376 = vld [vmem:[%s3 + $0x34] sm:$0xf]
        %v1377 = vld [vmem:[%s3 + $0x38] sm:$0xf]
        %v1378 = vld [vmem:[%s3 + $0x3c] sm:$0xf]
        %v1395 = vunpack.c.l.b16 %v1363
        %v1396 = vunpack.c.l.b16 %v1364
        %v1397 = vunpack.c.l.b16 %v1365
        %v1398 = vunpack.c.l.b16 %v1366
        %v1399 = vunpack.c.l.b16 %v1367
        %v1400 = vunpack.c.l.b16 %v1368
        %v1401 = vunpack.c.l.b16 %v1369
        %v1402 = vunpack.c.l.b16 %v1370
        %v1403 = vunpack.c.l.b16 %v1371
        %v1404 = vunpack.c.l.b16 %v1372
        %v1405 = vunpack.c.l.b16 %v1373
        %v1406 = vunpack.c.l.b16 %v1374
        %v1407 = vunpack.c.l.b16 %v1375
        %v1408 = vunpack.c.l.b16 %v1376
        %v1409 = vunpack.c.l.b16 %v1377
        %v1410 = vunpack.c.l.b16 %v1378
        %v1411 = vpack.c.b16 %v1396, %v1395
        %v1412 = vpack.c.b16 %v1398, %v1397
        %v1413 = vpack.c.b16 %v1400, %v1399
        %v1414 = vpack.c.b16 %v1402, %v1401
        %v1415 = vpack.c.b16 %v1404, %v1403
        %v1416 = vpack.c.b16 %v1406, %v1405
        %v1417 = vpack.c.b16 %v1408, %v1407
        %v1418 = vpack.c.b16 %v1410, %v1409
        %1427 = vmatprep.subr.bf16.mxu0 0
        %1428 = vmatpush1.bf16.msra.mxu0 %v1418
        %1429 = vmatprep.subr.bf16.mxu0 0
        %1430 = vmatpush1.bf16.msra.mxu0 %v1417
        %1431 = vmatprep.subr.bf16.mxu0 0
        %1432 = vmatpush1.bf16.msra.mxu0 %v1416
        %1433 = vmatprep.subr.bf16.mxu0 0
        %1434 = vmatpush1.bf16.msra.mxu0 %v1415
        %1435 = vmatprep.subr.bf16.mxu0 0
        %1436 = vmatpush1.bf16.msra.mxu0 %v1414
        %1437 = vmatprep.subr.bf16.mxu0 0
        %1438 = vmatpush1.bf16.msra.mxu0 %v1413
        %1439 = vmatprep.subr.bf16.mxu0 0
        %1440 = vmatpush1.bf16.msra.mxu0 %v1412
        %1441 = vmatprep.subr.bf16.mxu0 0
        %1442 = vmatpush1.bf16.msra.mxu0 %v1411
        %1443 = vmatprep.subr.bf16.mxu0 0
        %1444 = vmatpush2.bf16.msra.mxu0 0
        %1445 = vmatprep.subr.bf16.mxu0 0
        %1446 = vmatpush2.bf16.msra.mxu0 0
        %1447 = vmatprep.subr.bf16.mxu0 0
        %1448 = vmatpush2.bf16.msra.mxu0 0
        %1449 = vmatprep.subr.bf16.mxu0 0
        %1450 = vmatpush2.bf16.msra.mxu0 0
        %1451 = vmatprep.subr.bf16.mxu0 0
        %1452 = vmatpush2.bf16.msra.mxu0 0
        %1453 = vmatprep.subr.bf16.mxu0 0
        %1454 = vmatpush2.bf16.msra.mxu0 0
        %1455 = vmatprep.subr.bf16.mxu0 0
        %1456 = vmatpush2.bf16.msra.mxu0 0
        %1457 = vmatprep.subr.bf16.mxu0 0
        %1458 = vmatpush2.bf16.msra.mxu0 0
        %1459 = vmatprep.mubr.bf16.mxu0 0
        %1460 = vmatmul.mubr.bf16.gmra.mxu0 %v1359
        %v1461 = vpop.f32.mrf.mxu0
        %v1462 = vadd.f32 0.0, %v1461
        %v1463 = vpop.f32.mrf.mxu0
        %v1464 = vpop.f32.mrf.mxu0
        %v1465 = vadd.f32 0.0, %v1464
        %v1466 = vpop.f32.mrf.mxu0
        %1467 = vmatprep.mubr.bf16.mxu0 0
        %1468 = vmatmul.mubr.bf16.gmra.mxu0 %v1360
        %v1469 = vpop.f32.mrf.mxu0
        %v1470 = vadd.f32 0.0, %v1469
        %v1471 = vpop.f32.mrf.mxu0
        %v1472 = vpop.f32.mrf.mxu0
        %v1473 = vadd.f32 0.0, %v1472
        %v1474 = vpop.f32.mrf.mxu0
        %1475 = vmatprep.mubr.bf16.mxu0 0
        %1476 = vmatmul.mubr.bf16.gmra.mxu0 %v1361
        %v1477 = vpop.f32.mrf.mxu0
        %v1478 = vadd.f32 0.0, %v1477
        %v1479 = vpop.f32.mrf.mxu0
        %v1480 = vpop.f32.mrf.mxu0
        %v1481 = vadd.f32 0.0, %v1480
        %v1482 = vpop.f32.mrf.mxu0
        %1483 = vmatprep.mubr.bf16.mxu0 0
        %1484 = vmatmul.mubr.bf16.gmra.mxu0 %v1362
        %v1485 = vpop.f32.mrf.mxu0
        %v1486 = vadd.f32 0.0, %v1485
        %v1487 = vpop.f32.mrf.mxu0
        %v1488 = vpop.f32.mrf.mxu0
        %v1489 = vadd.f32 0.0, %v1488
        %v1490 = vpop.f32.mrf.mxu0
        %1491 = vdwg.mxu0
        %s1492 = scalar_lea.vmem %s3, 64
        %v1493 = vld [vmem:[%s1492] sm:$0xf]
        %v1494 = vld [vmem:[%s1492 + $0x4] sm:$0xf]
        %v1495 = vld [vmem:[%s1492 + $0x8] sm:$0xf]
        %v1496 = vld [vmem:[%s1492 + $0xc] sm:$0xf]
        %v1497 = vld [vmem:[%s1492 + $0x10] sm:$0xf]
        %v1498 = vld [vmem:[%s1492 + $0x14] sm:$0xf]
        %v1499 = vld [vmem:[%s1492 + $0x18] sm:$0xf]
        %v1500 = vld [vmem:[%s1492 + $0x1c] sm:$0xf]
        %v1501 = vld [vmem:[%s1492 + $0x20] sm:$0xf]
        %v1502 = vld [vmem:[%s1492 + $0x24] sm:$0xf]
        %v1503 = vld [vmem:[%s1492 + $0x28] sm:$0xf]
        %v1504 = vld [vmem:[%s1492 + $0x2c] sm:$0xf]
        %v1505 = vld [vmem:[%s1492 + $0x30] sm:$0xf]
        %v1506 = vld [vmem:[%s1492 + $0x34] sm:$0xf]
        %v1507 = vld [vmem:[%s1492 + $0x38] sm:$0xf]
        %v1508 = vld [vmem:[%s1492 + $0x3c] sm:$0xf]
        %v1525 = vunpack.c.l.b16 %v1493
        %v1526 = vunpack.c.l.b16 %v1494
        %v1527 = vunpack.c.l.b16 %v1495
        %v1528 = vunpack.c.l.b16 %v1496
        %v1529 = vunpack.c.l.b16 %v1497
        %v1530 = vunpack.c.l.b16 %v1498
        %v1531 = vunpack.c.l.b16 %v1499
        %v1532 = vunpack.c.l.b16 %v1500
        %v1533 = vunpack.c.l.b16 %v1501
        %v1534 = vunpack.c.l.b16 %v1502
        %v1535 = vunpack.c.l.b16 %v1503
        %v1536 = vunpack.c.l.b16 %v1504
        %v1537 = vunpack.c.l.b16 %v1505
        %v1538 = vunpack.c.l.b16 %v1506
        %v1539 = vunpack.c.l.b16 %v1507
        %v1540 = vunpack.c.l.b16 %v1508
        %v1541 = vpack.c.b16 %v1526, %v1525
        %v1542 = vpack.c.b16 %v1528, %v1527
        %v1543 = vpack.c.b16 %v1530, %v1529
        %v1544 = vpack.c.b16 %v1532, %v1531
        %v1545 = vpack.c.b16 %v1534, %v1533
        %v1546 = vpack.c.b16 %v1536, %v1535
        %v1547 = vpack.c.b16 %v1538, %v1537
        %v1548 = vpack.c.b16 %v1540, %v1539
        %1557 = vmatprep.subr.bf16.mxu0 0
        %1558 = vmatpush1.bf16.msra.mxu0 %v1548
        %1559 = vmatprep.subr.bf16.mxu0 0
        %1560 = vmatpush1.bf16.msra.mxu0 %v1547
        %1561 = vmatprep.subr.bf16.mxu0 0
        %1562 = vmatpush1.bf16.msra.mxu0 %v1546
        %1563 = vmatprep.subr.bf16.mxu0 0
        %1564 = vmatpush1.bf16.msra.mxu0 %v1545
        %1565 = vmatprep.subr.bf16.mxu0 0
        %1566 = vmatpush1.bf16.msra.mxu0 %v1544
        %1567 = vmatprep.subr.bf16.mxu0 0
        %1568 = vmatpush1.bf16.msra.mxu0 %v1543
        %1569 = vmatprep.subr.bf16.mxu0 0
        %1570 = vmatpush1.bf16.msra.mxu0 %v1542
        %1571 = vmatprep.subr.bf16.mxu0 0
        %1572 = vmatpush1.bf16.msra.mxu0 %v1541
        %1573 = vmatprep.subr.bf16.mxu0 0
        %1574 = vmatpush2.bf16.msra.mxu0 0
        %1575 = vmatprep.subr.bf16.mxu0 0
        %1576 = vmatpush2.bf16.msra.mxu0 0
        %1577 = vmatprep.subr.bf16.mxu0 0
        %1578 = vmatpush2.bf16.msra.mxu0 0
        %1579 = vmatprep.subr.bf16.mxu0 0
        %1580 = vmatpush2.bf16.msra.mxu0 0
        %1581 = vmatprep.subr.bf16.mxu0 0
        %1582 = vmatpush2.bf16.msra.mxu0 0
        %1583 = vmatprep.subr.bf16.mxu0 0
        %1584 = vmatpush2.bf16.msra.mxu0 0
        %1585 = vmatprep.subr.bf16.mxu0 0
        %1586 = vmatpush2.bf16.msra.mxu0 0
        %1587 = vmatprep.subr.bf16.mxu0 0
        %1588 = vmatpush2.bf16.msra.mxu0 0
        %1589 = vmatprep.mubr.bf16.mxu0 0
        %1590 = vmatmul.mubr.bf16.gmra.mxu0 %v1359
        %v1591 = vpop.f32.mrf.mxu0
        %v1592 = vadd.f32 0.0, %v1591
        %v1593 = vpop.f32.mrf.mxu0
        %v1594 = vpop.f32.mrf.mxu0
        %v1595 = vadd.f32 0.0, %v1594
        %v1596 = vpop.f32.mrf.mxu0
        %1597 = vmatprep.mubr.bf16.mxu0 0
        %1598 = vmatmul.mubr.bf16.gmra.mxu0 %v1360
        %v1599 = vpop.f32.mrf.mxu0
        %v1600 = vadd.f32 0.0, %v1599
        %v1601 = vpop.f32.mrf.mxu0
        %v1602 = vpop.f32.mrf.mxu0
        %v1603 = vadd.f32 0.0, %v1602
        %v1604 = vpop.f32.mrf.mxu0
        %1605 = vmatprep.mubr.bf16.mxu0 0
        %1606 = vmatmul.mubr.bf16.gmra.mxu0 %v1361
        %v1607 = vpop.f32.mrf.mxu0
        %v1608 = vadd.f32 0.0, %v1607
        %v1609 = vpop.f32.mrf.mxu0
        %v1610 = vpop.f32.mrf.mxu0
        %v1611 = vadd.f32 0.0, %v1610
        %v1612 = vpop.f32.mrf.mxu0
        %1613 = vmatprep.mubr.bf16.mxu0 0
        %1614 = vmatmul.mubr.bf16.gmra.mxu0 %v1362
        %v1615 = vpop.f32.mrf.mxu0
        %v1616 = vadd.f32 0.0, %v1615
        %v1617 = vpop.f32.mrf.mxu0
        %v1618 = vpop.f32.mrf.mxu0
        %v1619 = vadd.f32 0.0, %v1618
        %v1620 = vpop.f32.mrf.mxu0
        %1621 = vdwg.mxu0
        %v1622 = vmax.f32 %v1462, %v1592
        %v1623 = vmax.f32 %v1465, %v1595
        %v1624 = vmax.f32 %v1470, %v1600
        %v1625 = vmax.f32 %v1473, %v1603
        %v1626 = vmax.f32 %v1478, %v1608
        %v1627 = vmax.f32 %v1481, %v1611
        %v1628 = vmax.f32 %v1486, %v1616
        %v1629 = vmax.f32 %v1489, %v1619
        %s1630 = scalar_lea.vmem %s3, 128
        %v1631 = vld [vmem:[%s1630] sm:$0xf]
        %v1632 = vld [vmem:[%s1630 + $0x4] sm:$0xf]
        %v1633 = vld [vmem:[%s1630 + $0x8] sm:$0xf]
        %v1634 = vld [vmem:[%s1630 + $0xc] sm:$0xf]
        %v1635 = vld [vmem:[%s1630 + $0x10] sm:$0xf]
        %v1636 = vld [vmem:[%s1630 + $0x14] sm:$0xf]
        %v1637 = vld [vmem:[%s1630 + $0x18] sm:$0xf]
        %v1638 = vld [vmem:[%s1630 + $0x1c] sm:$0xf]
        %v1639 = vld [vmem:[%s1630 + $0x20] sm:$0xf]
        %v1640 = vld [vmem:[%s1630 + $0x24] sm:$0xf]
        %v1641 = vld [vmem:[%s1630 + $0x28] sm:$0xf]
        %v1642 = vld [vmem:[%s1630 + $0x2c] sm:$0xf]
        %v1643 = vld [vmem:[%s1630 + $0x30] sm:$0xf]
        %v1644 = vld [vmem:[%s1630 + $0x34] sm:$0xf]
        %v1645 = vld [vmem:[%s1630 + $0x38] sm:$0xf]
        %v1646 = vld [vmem:[%s1630 + $0x3c] sm:$0xf]
        %v1663 = vunpack.c.l.b16 %v1631
        %v1664 = vunpack.c.l.b16 %v1632
        %v1665 = vunpack.c.l.b16 %v1633
        %v1666 = vunpack.c.l.b16 %v1634
        %v1667 = vunpack.c.l.b16 %v1635
        %v1668 = vunpack.c.l.b16 %v1636
        %v1669 = vunpack.c.l.b16 %v1637
        %v1670 = vunpack.c.l.b16 %v1638
        %v1671 = vunpack.c.l.b16 %v1639
        %v1672 = vunpack.c.l.b16 %v1640
        %v1673 = vunpack.c.l.b16 %v1641
        %v1674 = vunpack.c.l.b16 %v1642
        %v1675 = vunpack.c.l.b16 %v1643
        %v1676 = vunpack.c.l.b16 %v1644
        %v1677 = vunpack.c.l.b16 %v1645
        %v1678 = vunpack.c.l.b16 %v1646
        %v1679 = vpack.c.b16 %v1664, %v1663
        %v1680 = vpack.c.b16 %v1666, %v1665
        %v1681 = vpack.c.b16 %v1668, %v1667
        %v1682 = vpack.c.b16 %v1670, %v1669
        %v1683 = vpack.c.b16 %v1672, %v1671
        %v1684 = vpack.c.b16 %v1674, %v1673
        %v1685 = vpack.c.b16 %v1676, %v1675
        %v1686 = vpack.c.b16 %v1678, %v1677
        %1695 = vmatprep.subr.bf16.mxu0 0
        %1696 = vmatpush1.bf16.msra.mxu0 %v1686
        %1697 = vmatprep.subr.bf16.mxu0 0
        %1698 = vmatpush1.bf16.msra.mxu0 %v1685
        %1699 = vmatprep.subr.bf16.mxu0 0
        %1700 = vmatpush1.bf16.msra.mxu0 %v1684
        %1701 = vmatprep.subr.bf16.mxu0 0
        %1702 = vmatpush1.bf16.msra.mxu0 %v1683
        %1703 = vmatprep.subr.bf16.mxu0 0
        %1704 = vmatpush1.bf16.msra.mxu0 %v1682
        %1705 = vmatprep.subr.bf16.mxu0 0
        %1706 = vmatpush1.bf16.msra.mxu0 %v1681
        %1707 = vmatprep.subr.bf16.mxu0 0
        %1708 = vmatpush1.bf16.msra.mxu0 %v1680
        %1709 = vmatprep.subr.bf16.mxu0 0
        %1710 = vmatpush1.bf16.msra.mxu0 %v1679
        %1711 = vmatprep.subr.bf16.mxu0 0
        %1712 = vmatpush2.bf16.msra.mxu0 0
        %1713 = vmatprep.subr.bf16.mxu0 0
        %1714 = vmatpush2.bf16.msra.mxu0 0
        %1715 = vmatprep.subr.bf16.mxu0 0
        %1716 = vmatpush2.bf16.msra.mxu0 0
        %1717 = vmatprep.subr.bf16.mxu0 0
        %1718 = vmatpush2.bf16.msra.mxu0 0
        %1719 = vmatprep.subr.bf16.mxu0 0
        %1720 = vmatpush2.bf16.msra.mxu0 0
        %1721 = vmatprep.subr.bf16.mxu0 0
        %1722 = vmatpush2.bf16.msra.mxu0 0
        %1723 = vmatprep.subr.bf16.mxu0 0
        %1724 = vmatpush2.bf16.msra.mxu0 0
        %1725 = vmatprep.subr.bf16.mxu0 0
        %1726 = vmatpush2.bf16.msra.mxu0 0
        %1727 = vmatprep.mubr.bf16.mxu0 0
        %1728 = vmatmul.mubr.bf16.gmra.mxu0 %v1359
        %v1729 = vpop.f32.mrf.mxu0
        %v1730 = vadd.f32 0.0, %v1729
        %v1731 = vpop.f32.mrf.mxu0
        %v1732 = vpop.f32.mrf.mxu0
        %v1733 = vadd.f32 0.0, %v1732
        %v1734 = vpop.f32.mrf.mxu0
        %1735 = vmatprep.mubr.bf16.mxu0 0
        %1736 = vmatmul.mubr.bf16.gmra.mxu0 %v1360
        %v1737 = vpop.f32.mrf.mxu0
        %v1738 = vadd.f32 0.0, %v1737
        %v1739 = vpop.f32.mrf.mxu0
        %v1740 = vpop.f32.mrf.mxu0
        %v1741 = vadd.f32 0.0, %v1740
        %v1742 = vpop.f32.mrf.mxu0
        %1743 = vmatprep.mubr.bf16.mxu0 0
        %1744 = vmatmul.mubr.bf16.gmra.mxu0 %v1361
        %v1745 = vpop.f32.mrf.mxu0
        %v1746 = vadd.f32 0.0, %v1745
        %v1747 = vpop.f32.mrf.mxu0
        %v1748 = vpop.f32.mrf.mxu0
        %v1749 = vadd.f32 0.0, %v1748
        %v1750 = vpop.f32.mrf.mxu0
        %1751 = vmatprep.mubr.bf16.mxu0 0
        %1752 = vmatmul.mubr.bf16.gmra.mxu0 %v1362
        %v1753 = vpop.f32.mrf.mxu0
        %v1754 = vadd.f32 0.0, %v1753
        %v1755 = vpop.f32.mrf.mxu0
        %v1756 = vpop.f32.mrf.mxu0
        %v1757 = vadd.f32 0.0, %v1756
        %v1758 = vpop.f32.mrf.mxu0
        %1759 = vdwg.mxu0
        %v1760 = vmax.f32 %v1622, %v1730
        %v1761 = vmax.f32 %v1623, %v1733
        %v1762 = vmax.f32 %v1624, %v1738
        %v1763 = vmax.f32 %v1625, %v1741
        %v1764 = vmax.f32 %v1626, %v1746
        %v1765 = vmax.f32 %v1627, %v1749
        %v1766 = vmax.f32 %v1628, %v1754
        %v1767 = vmax.f32 %v1629, %v1757
        %v1768 = vpack.c.bf16 %v1761, %v1760
        %v1769 = vpack.c.bf16 %v1763, %v1762
        %v1770 = vpack.c.bf16 %v1765, %v1764
        %v1771 = vpack.c.bf16 %v1767, %v1766
        %v1772 = vld [vmem:[%s4] sm:$0xf]
        %v1773 = vld [vmem:[%s4 + $0x4] sm:$0xf]
        %v1774 = vld [vmem:[%s4 + $0x8] sm:$0xf]
        %v1775 = vld [vmem:[%s4 + $0xc] sm:$0xf]
        %v1776 = vld [vmem:[%s4 + $0x10] sm:$0xf]
        %v1782 = vunpack.c.l.b16 %v1772
        %v1783 = vunpack.c.l.b16 %v1773
        %v1784 = vunpack.c.l.b16 %v1774
        %v1785 = vunpack.c.l.b16 %v1775
        %v1786 = vunpack.c.l.b16 %v1776
        %v1787 = vpack.c.b16 %v1783, %v1782
        %v1788 = vpack.c.b16 %v1785, %v1784
        %v1789 = vpack.c.b16 %v1786, %v1786
        %vm1790 = vcmask 523264
        %v1792 = vsel %vm1790, %v1787, 0
        %v1795 = vsel %vm1790, %v1788, 0
        %v1798 = vsel %vm1790, %v1789, 0
        %1800 = vmatprep.subr.bf16.mxu0 0
        %1801 = vmatpush1.bf16.msra.mxu0 0
        %1802 = vmatprep.subr.bf16.mxu0 0
        %1803 = vmatpush1.bf16.msra.mxu0 0
        %1804 = vmatprep.subr.bf16.mxu0 0
        %1805 = vmatpush1.bf16.msra.mxu0 0
        %1806 = vmatprep.subr.bf16.mxu0 0
        %1807 = vmatpush1.bf16.msra.mxu0 0
        %1808 = vmatprep.subr.bf16.mxu0 0
        %1809 = vmatpush1.bf16.msra.mxu0 %v1771
        %1810 = vmatprep.subr.bf16.mxu0 0
        %1811 = vmatpush1.bf16.msra.mxu0 %v1770
        %1812 = vmatprep.subr.bf16.mxu0 0
        %1813 = vmatpush1.bf16.msra.mxu0 %v1769
        %1814 = vmatprep.subr.bf16.mxu0 0
        %1815 = vmatpush1.bf16.msra.mxu0 %v1768
        %1816 = vmatprep.subr.bf16.mxu0 0
        %1817 = vmatpush2.bf16.msra.mxu0 0
        %1818 = vmatprep.subr.bf16.mxu0 0
        %1819 = vmatpush2.bf16.msra.mxu0 0
        %1820 = vmatprep.subr.bf16.mxu0 0
        %1821 = vmatpush2.bf16.msra.mxu0 0
        %1822 = vmatprep.subr.bf16.mxu0 0
        %1823 = vmatpush2.bf16.msra.mxu0 0
        %1824 = vmatprep.subr.bf16.mxu0 0
        %1825 = vmatpush2.bf16.msra.mxu0 0
        %1826 = vmatprep.subr.bf16.mxu0 0
        %1827 = vmatpush2.bf16.msra.mxu0 0
        %1828 = vmatprep.subr.bf16.mxu0 0
        %1829 = vmatpush2.bf16.msra.mxu0 0
        %1830 = vmatprep.subr.bf16.mxu0 0
        %1831 = vmatpush2.bf16.msra.mxu0 0
        %1832 = vmatprep.mubr.bf16.mxu0 0
        %1833 = vmatmul.mubr.bf16.gmra.mxu0 %v1792
        %v1834 = vpop.f32.mrf.mxu0
        %v1835 = vadd.f32 0.0, %v1834
        %v1836 = vpop.f32.mrf.mxu0
        %v1837 = vpop.f32.mrf.mxu0
        %v1838 = vadd.f32 0.0, %v1837
        %v1839 = vpop.f32.mrf.mxu0
        %1840 = vmatprep.mubr.bf16.mxu0 0
        %1841 = vmatmul.mubr.bf16.gmra.mxu0 %v1795
        %v1842 = vpop.f32.mrf.mxu0
        %v1843 = vadd.f32 0.0, %v1842
        %v1844 = vpop.f32.mrf.mxu0
        %v1845 = vpop.f32.mrf.mxu0
        %v1846 = vadd.f32 0.0, %v1845
        %v1847 = vpop.f32.mrf.mxu0
        %1848 = vmatprep.mubr.bf16.mxu0 0
        %1849 = vmatmul.mubr.bf16.gmra.mxu0 %v1798
        %v1850 = vpop.f32.mrf.mxu0
        %v1851 = vadd.f32 0.0, %v1850
        %v1852 = vpop.f32.mrf.mxu0
        %v1853 = vpop.f32.mrf.mxu0
        %v1854 = vpop.f32.mrf.mxu0
        %1855 = vdwg.mxu0
        %s1856 = scalar_lea.vmem %s4, 20
        %v1857 = vld [vmem:[%s1856] sm:$0xf]
        %v1858 = vld [vmem:[%s1856 + $0x4] sm:$0xf]
        %v1859 = vld [vmem:[%s1856 + $0x8] sm:$0xf]
        %v1860 = vld [vmem:[%s1856 + $0xc] sm:$0xf]
        %v1861 = vld [vmem:[%s1856 + $0x10] sm:$0xf]
        %v1867 = vunpack.c.l.b16 %v1857
        %v1868 = vunpack.c.l.b16 %v1858
        %v1869 = vunpack.c.l.b16 %v1859
        %v1870 = vunpack.c.l.b16 %v1860
        %v1871 = vunpack.c.l.b16 %v1861
        %v1872 = vpack.c.b16 %v1868, %v1867
        %v1873 = vpack.c.b16 %v1870, %v1869
        %v1874 = vpack.c.b16 %v1871, %v1871
        %v1876 = vsel %vm1790, %v1872, 0
        %v1879 = vsel %vm1790, %v1873, 0
        %v1882 = vsel %vm1790, %v1874, 0
        %1884 = vmatprep.subr.bf16.mxu0 0
        %1885 = vmatpush1.bf16.msra.mxu0 0
        %1886 = vmatprep.subr.bf16.mxu0 0
        %1887 = vmatpush1.bf16.msra.mxu0 0
        %1888 = vmatprep.subr.bf16.mxu0 0
        %1889 = vmatpush1.bf16.msra.mxu0 0
        %1890 = vmatprep.subr.bf16.mxu0 0
        %1891 = vmatpush1.bf16.msra.mxu0 0
        %1892 = vmatprep.subr.bf16.mxu0 0
        %1893 = vmatpush1.bf16.msra.mxu0 %v1771
        %1894 = vmatprep.subr.bf16.mxu0 0
        %1895 = vmatpush1.bf16.msra.mxu0 %v1770
        %1896 = vmatprep.subr.bf16.mxu0 0
        %1897 = vmatpush1.bf16.msra.mxu0 %v1769
        %1898 = vmatprep.subr.bf16.mxu0 0
        %1899 = vmatpush1.bf16.msra.mxu0 %v1768
        %1900 = vmatprep.subr.bf16.mxu0 0
        %1901 = vmatpush2.bf16.msra.mxu0 0
        %1902 = vmatprep.subr.bf16.mxu0 0
        %1903 = vmatpush2.bf16.msra.mxu0 0
        %1904 = vmatprep.subr.bf16.mxu0 0
        %1905 = vmatpush2.bf16.msra.mxu0 0
        %1906 = vmatprep.subr.bf16.mxu0 0
        %1907 = vmatpush2.bf16.msra.mxu0 0
        %1908 = vmatprep.subr.bf16.mxu0 0
        %1909 = vmatpush2.bf16.msra.mxu0 0
        %1910 = vmatprep.subr.bf16.mxu0 0
        %1911 = vmatpush2.bf16.msra.mxu0 0
        %1912 = vmatprep.subr.bf16.mxu0 0
        %1913 = vmatpush2.bf16.msra.mxu0 0
        %1914 = vmatprep.subr.bf16.mxu0 0
        %1915 = vmatpush2.bf16.msra.mxu0 0
        %1916 = vmatprep.mubr.bf16.mxu0 0
        %1917 = vmatmul.mubr.bf16.gmra.mxu0 %v1876
        %v1918 = vpop.f32.mrf.mxu0
        %v1919 = vadd.f32 0.0, %v1918
        %v1920 = vpop.f32.mrf.mxu0
        %v1921 = vpop.f32.mrf.mxu0
        %v1922 = vadd.f32 0.0, %v1921
        %v1923 = vpop.f32.mrf.mxu0
        %1924 = vmatprep.mubr.bf16.mxu0 0
        %1925 = vmatmul.mubr.bf16.gmra.mxu0 %v1879
        %v1926 = vpop.f32.mrf.mxu0
        %v1927 = vadd.f32 0.0, %v1926
        %v1928 = vpop.f32.mrf.mxu0
        %v1929 = vpop.f32.mrf.mxu0
        %v1930 = vadd.f32 0.0, %v1929
        %v1931 = vpop.f32.mrf.mxu0
        %1932 = vmatprep.mubr.bf16.mxu0 0
        %1933 = vmatmul.mubr.bf16.gmra.mxu0 %v1882
        %v1934 = vpop.f32.mrf.mxu0
        %v1935 = vadd.f32 0.0, %v1934
        %v1936 = vpop.f32.mrf.mxu0
        %v1937 = vpop.f32.mrf.mxu0
        %v1938 = vpop.f32.mrf.mxu0
        %1939 = vdwg.mxu0
        %v1940 = vmax.f32 %v1835, %v1919
        %v1941 = vmax.f32 %v1838, %v1922
        %v1942 = vmax.f32 %v1843, %v1927
        %v1943 = vmax.f32 %v1846, %v1930
        %v1944 = vmax.f32 %v1851, %v1935
        %s1945 = scalar_lea.vmem %s4, 40
        %v1946 = vld [vmem:[%s1945] sm:$0xf]
        %v1947 = vld [vmem:[%s1945 + $0x4] sm:$0xf]
        %v1948 = vld [vmem:[%s1945 + $0x8] sm:$0xf]
        %v1949 = vld [vmem:[%s1945 + $0xc] sm:$0xf]
        %v1950 = vld [vmem:[%s1945 + $0x10] sm:$0xf]
        %v1956 = vunpack.c.l.b16 %v1946
        %v1957 = vunpack.c.l.b16 %v1947
        %v1958 = vunpack.c.l.b16 %v1948
        %v1959 = vunpack.c.l.b16 %v1949
        %v1960 = vunpack.c.l.b16 %v1950
        %v1961 = vpack.c.b16 %v1957, %v1956
        %v1962 = vpack.c.b16 %v1959, %v1958
        %v1963 = vpack.c.b16 %v1960, %v1960
        %v1965 = vsel %vm1790, %v1961, 0
        %v1968 = vsel %vm1790, %v1962, 0
        %v1971 = vsel %vm1790, %v1963, 0
        %1973 = vmatprep.subr.bf16.mxu0 0
        %1974 = vmatpush1.bf16.msra.mxu0 0
        %1975 = vmatprep.subr.bf16.mxu0 0
        %1976 = vmatpush1.bf16.msra.mxu0 0
        %1977 = vmatprep.subr.bf16.mxu0 0
        %1978 = vmatpush1.bf16.msra.mxu0 0
        %1979 = vmatprep.subr.bf16.mxu0 0
        %1980 = vmatpush1.bf16.msra.mxu0 0
        %1981 = vmatprep.subr.bf16.mxu0 0
        %1982 = vmatpush1.bf16.msra.mxu0 %v1771
        %1983 = vmatprep.subr.bf16.mxu0 0
        %1984 = vmatpush1.bf16.msra.mxu0 %v1770
        %1985 = vmatprep.subr.bf16.mxu0 0
        %1986 = vmatpush1.bf16.msra.mxu0 %v1769
        %1987 = vmatprep.subr.bf16.mxu0 0
        %1988 = vmatpush1.bf16.msra.mxu0 %v1768
        %1989 = vmatprep.subr.bf16.mxu0 0
        %1990 = vmatpush2.bf16.msra.mxu0 0
        %1991 = vmatprep.subr.bf16.mxu0 0
        %1992 = vmatpush2.bf16.msra.mxu0 0
        %1993 = vmatprep.subr.bf16.mxu0 0
        %1994 = vmatpush2.bf16.msra.mxu0 0
        %1995 = vmatprep.subr.bf16.mxu0 0
        %1996 = vmatpush2.bf16.msra.mxu0 0
        %1997 = vmatprep.subr.bf16.mxu0 0
        %1998 = vmatpush2.bf16.msra.mxu0 0
        %1999 = vmatprep.subr.bf16.mxu0 0
        %2000 = vmatpush2.bf16.msra.mxu0 0
        %2001 = vmatprep.subr.bf16.mxu0 0
        %2002 = vmatpush2.bf16.msra.mxu0 0
        %2003 = vmatprep.subr.bf16.mxu0 0
        %2004 = vmatpush2.bf16.msra.mxu0 0
        %2005 = vmatprep.mubr.bf16.mxu0 0
        %2006 = vmatmul.mubr.bf16.gmra.mxu0 %v1965
        %v2007 = vpop.f32.mrf.mxu0
        %v2008 = vadd.f32 0.0, %v2007
        %v2009 = vpop.f32.mrf.mxu0
        %v2010 = vpop.f32.mrf.mxu0
        %v2011 = vadd.f32 0.0, %v2010
        %v2012 = vpop.f32.mrf.mxu0
        %2013 = vmatprep.mubr.bf16.mxu0 0
        %2014 = vmatmul.mubr.bf16.gmra.mxu0 %v1968
        %v2015 = vpop.f32.mrf.mxu0
        %v2016 = vadd.f32 0.0, %v2015
        %v2017 = vpop.f32.mrf.mxu0
        %v2018 = vpop.f32.mrf.mxu0
        %v2019 = vadd.f32 0.0, %v2018
        %v2020 = vpop.f32.mrf.mxu0
        %2021 = vmatprep.mubr.bf16.mxu0 0
        %2022 = vmatmul.mubr.bf16.gmra.mxu0 %v1971
        %v2023 = vpop.f32.mrf.mxu0
        %v2024 = vadd.f32 0.0, %v2023
        %v2025 = vpop.f32.mrf.mxu0
        %v2026 = vpop.f32.mrf.mxu0
        %v2027 = vpop.f32.mrf.mxu0
        %2028 = vdwg.mxu0
        %v2029 = vmax.f32 %v1940, %v2008
        %v2030 = vmax.f32 %v1941, %v2011
        %v2031 = vmax.f32 %v1942, %v2016
        %v2032 = vmax.f32 %v1943, %v2019
        %v2033 = vmax.f32 %v1944, %v2024
        %v2034 = vpack.c.bf16 %v2030, %v2029
        %v2035 = vpack.c.bf16 %v2032, %v2031
        %v2036 = vpack.c.bf16 %v2033, %v2033
        %v2038 = vshrl.u32 %v2034, 16
        %v2040 = vshll.u32 %v2034, 16
        %v2042 = vrot.slane %v2040, 1
        %v2043 = vor.u32 %v2038, %v2042
        %v2045 = vshll.u32 %v2035, 16
        %v2047 = vrot.slane %v2045, 1
        %v2048 = vsel %vm470, %v2043, %v2047
        %v2052 = vrot.slane %v2034, 1
        %v2053 = vrot.slane %v2035, 1
        %v2054 = vsel %vm493, %v2052, %v2053
        %v2056 = vrot.slane %v2038, 1
        %v2057 = vrot.slane %v2040, 2
        %v2058 = vor.u32 %v2056, %v2057
        %v2059 = vshrl.u32 %v2035, 16
        %v2061 = vrot.slane %v2059, 1
        %v2062 = vrot.slane %v2045, 2
        %v2063 = vor.u32 %v2061, %v2062
        %v2064 = vsel %vm501, %v2058, %v2063
        %v2066 = vrot.slane %v2034, 2
        %v2067 = vrot.slane %v2035, 2
        %v2068 = vsel %vm517, %v2066, %v2067
        %v2070 = vor.u32 %v2059, %v2047
        %v2072 = vshll.u32 %v2036, 16
        %v2074 = vrot.slane %v2072, 1
        %v2075 = vsel %vm470, %v2070, %v2074
        %v2076 = vshrl.u32 %v2036, 16
        %v2078 = vor.u32 %v2076, %v2074
        %v2080 = vrot.slane %v2036, 1
        %v2081 = vsel %vm493, %v2053, %v2080
        %v2082 = vrot.slane %v2076, 1
        %v2083 = vrot.slane %v2072, 2
        %v2084 = vor.u32 %v2082, %v2083
        %v2085 = vsel %vm501, %v2063, %v2084
        %v2086 = vrot.slane %v2036, 2
        %v2087 = vsel %vm517, %v2067, %v2086
        %v2088 = vrot.slane %v2075, 2
        %v2089 = vrot.slane %v2078, 2
        %v2090 = vsel %vm517, %v2088, %v2089
        %v2091 = vrot.slane %v2081, 2
        %v2092 = vrot.slane %v2080, 2
        %v2093 = vsel %vm517, %v2091, %v2092
        %v2094 = vrot.slane %v2085, 2
        %v2095 = vrot.slane %v2084, 2
        %v2096 = vsel %vm517, %v2094, %v2095
        %v2097 = vrot.slane %v2087, 2
        %v2098 = vrot.slane %v2086, 2
        %v2099 = vsel %vm517, %v2097, %v2098
        %v2105 = vld [vmem:[%s5] sm:$0xff]
        %v2106 = vld [vmem:[%s5 + $0x8] sm:$0xff]
        %v2107 = vld [vmem:[%s5 + $0x10] sm:$0xff]
        %v2108 = vld [vmem:[%s5 + $0x18] sm:$0xff]
        %v2109 = vld [vmem:[%s5 + $0x20] sm:$0xff]
        %v2110 = vld [vmem:[%s5 + $0x28] sm:$0xff]
        %v2111 = vld [vmem:[%s5 + $0x30] sm:$0xff]
        %v2112 = vld [vmem:[%s5 + $0x38] sm:$0xff]
        %v2113 = vld [vmem:[%s5 + $0x40] sm:$0xff]
        %v2114 = vld [vmem:[%s5 + $0x48] sm:$0xff]
        %v2115 = vld [vmem:[%s5 + $0x50] sm:$0xff]
        %v2116 = vld [vmem:[%s5 + $0x58] sm:$0xff]
        %v2117 = vld [vmem:[%s5 + $0x60] sm:$0xff]
        %v2118 = vld [vmem:[%s5 + $0x68] sm:$0xff]
        %v2119 = vld [vmem:[%s5 + $0x70] sm:$0xff]
        %v2120 = vld [vmem:[%s5 + $0x78] sm:$0xff]
        %v2121 = vld [vmem:[%s5 + $0x80] sm:$0xff]
        %v2122 = vld [vmem:[%s5 + $0x88] sm:$0xff]
        %v2123 = vld [vmem:[%s5 + $0x90] sm:$0xff]
        %v2124 = vld [vmem:[%s5 + $0x98] sm:$0xff]
        %v2125 = vld [vmem:[%s5 + $0xa0] sm:$0xff]
        %v2126 = vld [vmem:[%s5 + $0xa8] sm:$0xff]
        %v2127 = vld [vmem:[%s5 + $0xb0] sm:$0xff]
        %v2128 = vld [vmem:[%s5 + $0xb8] sm:$0xff]
        %v2129 = vld [vmem:[%s5 + $0xc0] sm:$0xff]
        %v2130 = vld [vmem:[%s5 + $0xc8] sm:$0xff]
        %v2131 = vld [vmem:[%s5 + $0xd0] sm:$0xff]
        %v2132 = vld [vmem:[%s5 + $0xd8] sm:$0xff]
        %v2133 = vld [vmem:[%s5 + $0xe0] sm:$0xff]
        %v2134 = vld [vmem:[%s5 + $0xe8] sm:$0xff]
        %v2135 = vld [vmem:[%s5 + $0xf0] sm:$0xff]
        %v2136 = vld [vmem:[%s5 + $0xf8] sm:$0xff]
        %v2137 = vld [vmem:[%s5 + $0x100] sm:$0xff]
        %v2138 = vld [vmem:[%s5 + $0x108] sm:$0xff]
        %v2139 = vld [vmem:[%s5 + $0x110] sm:$0xff]
        %v2140 = vld [vmem:[%s5 + $0x118] sm:$0xff]
        %v2141 = vld [vmem:[%s5 + $0x120] sm:$0xff]
        %v2142 = vld [vmem:[%s5 + $0x128] sm:$0xff]
        %v2143 = vld [vmem:[%s5 + $0x130] sm:$0xff]
        %v2144 = vld [vmem:[%s5 + $0x138] sm:$0xff]
        %v2145 = vld [vmem:[%s5 + $0x140] sm:$0xff]
        %v2146 = vld [vmem:[%s5 + $0x148] sm:$0xff]
        %v2147 = vld [vmem:[%s5 + $0x150] sm:$0xff]
        %v2148 = vld [vmem:[%s5 + $0x158] sm:$0xff]
        %v2149 = vld [vmem:[%s5 + $0x160] sm:$0xff]
        %v2150 = vld [vmem:[%s5 + $0x168] sm:$0xff]
        %v2151 = vld [vmem:[%s5 + $0x170] sm:$0xff]
        %v2152 = vld [vmem:[%s5 + $0x178] sm:$0xff]
        %v2153 = vld [vmem:[%s5 + $0x180] sm:$0xff]
        %v2154 = vld [vmem:[%s5 + $0x188] sm:$0xff]
        %v2155 = vld [vmem:[%s5 + $0x190] sm:$0xff]
        %v2156 = vld [vmem:[%s5 + $0x198] sm:$0xff]
        %v2157 = vld [vmem:[%s5 + $0x1a0] sm:$0xff]
        %v2158 = vld [vmem:[%s5 + $0x1a8] sm:$0xff]
        %v2159 = vld [vmem:[%s5 + $0x1b0] sm:$0xff]
        %v2160 = vld [vmem:[%s5 + $0x1b8] sm:$0xff]
        %v2161 = vld [vmem:[%s5 + $0x1c0] sm:$0xff]
        %v2162 = vld [vmem:[%s5 + $0x1c8] sm:$0xff]
        %v2163 = vld [vmem:[%s5 + $0x1d0] sm:$0xff]
        %v2164 = vld [vmem:[%s5 + $0x1d8] sm:$0xff]
        %v2165 = vld [vmem:[%s5 + $0x1e0] sm:$0xff]
        %v2166 = vld [vmem:[%s5 + $0x1e8] sm:$0xff]
        %v2167 = vld [vmem:[%s5 + $0x1f0] sm:$0xff]
        %v2168 = vld [vmem:[%s5 + $0x1f8] sm:$0xff]
        %v2169 = vld [vmem:[%s5 + $0x200] sm:$0xff]
        %v2170 = vld [vmem:[%s5 + $0x208] sm:$0xff]
        %v2171 = vld [vmem:[%s5 + $0x210] sm:$0xff]
        %v2172 = vld [vmem:[%s5 + $0x218] sm:$0xff]
        %v2173 = vld [vmem:[%s5 + $0x220] sm:$0xff]
        %v2174 = vld [vmem:[%s5 + $0x228] sm:$0xff]
        %v2175 = vld [vmem:[%s5 + $0x230] sm:$0xff]
        %v2176 = vld [vmem:[%s5 + $0x238] sm:$0xff]
        %v2177 = vld [vmem:[%s5 + $0x240] sm:$0xff]
        %v2178 = vld [vmem:[%s5 + $0x248] sm:$0xff]
        %v2179 = vld [vmem:[%s5 + $0x250] sm:$0xff]
        %v2180 = vld [vmem:[%s5 + $0x258] sm:$0xff]
        %v2181 = vld [vmem:[%s5 + $0x260] sm:$0xff]
        %v2182 = vld [vmem:[%s5 + $0x268] sm:$0xff]
        %v2183 = vld [vmem:[%s5 + $0x270] sm:$0xff]
        %v2184 = vld [vmem:[%s5 + $0x278] sm:$0xff]
        %v2265 = vunpack.c.l.b16 %v2105
        %v2266 = vunpack.c.h.b16 %v2105
        %v2267 = vunpack.c.l.b16 %v2106
        %v2268 = vunpack.c.h.b16 %v2106
        %v2269 = vunpack.c.l.b16 %v2107
        %v2270 = vunpack.c.h.b16 %v2107
        %v2271 = vunpack.c.l.b16 %v2108
        %v2272 = vunpack.c.h.b16 %v2108
        %v2273 = vunpack.c.l.b16 %v2109
        %v2274 = vunpack.c.h.b16 %v2109
        %v2275 = vunpack.c.l.b16 %v2110
        %v2276 = vunpack.c.h.b16 %v2110
        %v2277 = vunpack.c.l.b16 %v2111
        %v2278 = vunpack.c.h.b16 %v2111
        %v2279 = vunpack.c.l.b16 %v2112
        %v2280 = vunpack.c.h.b16 %v2112
        %v2281 = vunpack.c.l.b16 %v2113
        %v2282 = vunpack.c.h.b16 %v2113
        %v2283 = vunpack.c.l.b16 %v2114
        %v2284 = vunpack.c.h.b16 %v2114
        %v2285 = vunpack.c.l.b16 %v2115
        %v2286 = vunpack.c.h.b16 %v2115
        %v2287 = vunpack.c.l.b16 %v2116
        %v2288 = vunpack.c.h.b16 %v2116
        %v2289 = vunpack.c.l.b16 %v2117
        %v2290 = vunpack.c.h.b16 %v2117
        %v2291 = vunpack.c.l.b16 %v2118
        %v2292 = vunpack.c.h.b16 %v2118
        %v2293 = vunpack.c.l.b16 %v2119
        %v2294 = vunpack.c.h.b16 %v2119
        %v2295 = vunpack.c.l.b16 %v2120
        %v2296 = vunpack.c.h.b16 %v2120
        %v2297 = vunpack.c.l.b16 %v2121
        %v2298 = vunpack.c.h.b16 %v2121
        %v2299 = vunpack.c.l.b16 %v2122
        %v2300 = vunpack.c.h.b16 %v2122
        %v2301 = vunpack.c.l.b16 %v2123
        %v2302 = vunpack.c.h.b16 %v2123
        %v2303 = vunpack.c.l.b16 %v2124
        %v2304 = vunpack.c.h.b16 %v2124
        %v2305 = vunpack.c.l.b16 %v2125
        %v2306 = vunpack.c.h.b16 %v2125
        %v2307 = vunpack.c.l.b16 %v2126
        %v2308 = vunpack.c.h.b16 %v2126
        %v2309 = vunpack.c.l.b16 %v2127
        %v2310 = vunpack.c.h.b16 %v2127
        %v2311 = vunpack.c.l.b16 %v2128
        %v2312 = vunpack.c.h.b16 %v2128
        %v2313 = vunpack.c.l.b16 %v2129
        %v2314 = vunpack.c.h.b16 %v2129
        %v2315 = vunpack.c.l.b16 %v2130
        %v2316 = vunpack.c.h.b16 %v2130
        %v2317 = vunpack.c.l.b16 %v2131
        %v2318 = vunpack.c.h.b16 %v2131
        %v2319 = vunpack.c.l.b16 %v2132
        %v2320 = vunpack.c.h.b16 %v2132
        %v2321 = vunpack.c.l.b16 %v2133
        %v2322 = vunpack.c.h.b16 %v2133
        %v2323 = vunpack.c.l.b16 %v2134
        %v2324 = vunpack.c.h.b16 %v2134
        %v2325 = vunpack.c.l.b16 %v2135
        %v2326 = vunpack.c.h.b16 %v2135
        %v2327 = vunpack.c.l.b16 %v2136
        %v2328 = vunpack.c.h.b16 %v2136
        %v2329 = vunpack.c.l.b16 %v2137
        %v2330 = vunpack.c.h.b16 %v2137
        %v2331 = vunpack.c.l.b16 %v2138
        %v2332 = vunpack.c.h.b16 %v2138
        %v2333 = vunpack.c.l.b16 %v2139
        %v2334 = vunpack.c.h.b16 %v2139
        %v2335 = vunpack.c.l.b16 %v2140
        %v2336 = vunpack.c.h.b16 %v2140
        %v2337 = vunpack.c.l.b16 %v2141
        %v2338 = vunpack.c.h.b16 %v2141
        %v2339 = vunpack.c.l.b16 %v2142
        %v2340 = vunpack.c.h.b16 %v2142
        %v2341 = vunpack.c.l.b16 %v2143
        %v2342 = vunpack.c.h.b16 %v2143
        %v2343 = vunpack.c.l.b16 %v2144
        %v2344 = vunpack.c.h.b16 %v2144
        %v2345 = vunpack.c.l.b16 %v2145
        %v2346 = vunpack.c.h.b16 %v2145
        %v2347 = vunpack.c.l.b16 %v2146
        %v2348 = vunpack.c.h.b16 %v2146
        %v2349 = vunpack.c.l.b16 %v2147
        %v2350 = vunpack.c.h.b16 %v2147
        %v2351 = vunpack.c.l.b16 %v2148
        %v2352 = vunpack.c.h.b16 %v2148
        %v2353 = vunpack.c.l.b16 %v2149
        %v2354 = vunpack.c.h.b16 %v2149
        %v2355 = vunpack.c.l.b16 %v2150
        %v2356 = vunpack.c.h.b16 %v2150
        %v2357 = vunpack.c.l.b16 %v2151
        %v2358 = vunpack.c.h.b16 %v2151
        %v2359 = vunpack.c.l.b16 %v2152
        %v2360 = vunpack.c.h.b16 %v2152
        %v2361 = vunpack.c.l.b16 %v2153
        %v2362 = vunpack.c.h.b16 %v2153
        %v2363 = vunpack.c.l.b16 %v2154
        %v2364 = vunpack.c.h.b16 %v2154
        %v2365 = vunpack.c.l.b16 %v2155
        %v2366 = vunpack.c.h.b16 %v2155
        %v2367 = vunpack.c.l.b16 %v2156
        %v2368 = vunpack.c.h.b16 %v2156
        %v2369 = vunpack.c.l.b16 %v2157
        %v2370 = vunpack.c.h.b16 %v2157
        %v2371 = vunpack.c.l.b16 %v2158
        %v2372 = vunpack.c.h.b16 %v2158
        %v2373 = vunpack.c.l.b16 %v2159
        %v2374 = vunpack.c.h.b16 %v2159
        %v2375 = vunpack.c.l.b16 %v2160
        %v2376 = vunpack.c.h.b16 %v2160
        %v2377 = vunpack.c.l.b16 %v2161
        %v2378 = vunpack.c.h.b16 %v2161
        %v2379 = vunpack.c.l.b16 %v2162
        %v2380 = vunpack.c.h.b16 %v2162
        %v2381 = vunpack.c.l.b16 %v2163
        %v2382 = vunpack.c.h.b16 %v2163
        %v2383 = vunpack.c.l.b16 %v2164
        %v2384 = vunpack.c.h.b16 %v2164
        %v2385 = vunpack.c.l.b16 %v2165
        %v2386 = vunpack.c.h.b16 %v2165
        %v2387 = vunpack.c.l.b16 %v2166
        %v2388 = vunpack.c.h.b16 %v2166
        %v2389 = vunpack.c.l.b16 %v2167
        %v2390 = vunpack.c.h.b16 %v2167
        %v2391 = vunpack.c.l.b16 %v2168
        %v2392 = vunpack.c.h.b16 %v2168
        %v2393 = vunpack.c.l.b16 %v2169
        %v2394 = vunpack.c.h.b16 %v2169
        %v2395 = vunpack.c.l.b16 %v2170
        %v2396 = vunpack.c.h.b16 %v2170
        %v2397 = vunpack.c.l.b16 %v2171
        %v2398 = vunpack.c.h.b16 %v2171
        %v2399 = vunpack.c.l.b16 %v2172
        %v2400 = vunpack.c.h.b16 %v2172
        %v2401 = vunpack.c.l.b16 %v2173
        %v2402 = vunpack.c.h.b16 %v2173
        %v2403 = vunpack.c.l.b16 %v2174
        %v2404 = vunpack.c.h.b16 %v2174
        %v2405 = vunpack.c.l.b16 %v2175
        %v2406 = vunpack.c.h.b16 %v2175
        %v2407 = vunpack.c.l.b16 %v2176
        %v2408 = vunpack.c.h.b16 %v2176
        %v2409 = vunpack.c.l.b16 %v2177
        %v2410 = vunpack.c.h.b16 %v2177
        %v2411 = vunpack.c.l.b16 %v2178
        %v2412 = vunpack.c.h.b16 %v2178
        %v2413 = vunpack.c.l.b16 %v2179
        %v2414 = vunpack.c.h.b16 %v2179
        %v2415 = vunpack.c.l.b16 %v2180
        %v2416 = vunpack.c.h.b16 %v2180
        %v2417 = vunpack.c.l.b16 %v2181
        %v2418 = vunpack.c.h.b16 %v2181
        %v2419 = vunpack.c.l.b16 %v2182
        %v2420 = vunpack.c.h.b16 %v2182
        %v2421 = vunpack.c.l.b16 %v2183
        %v2422 = vunpack.c.h.b16 %v2183
        %v2423 = vunpack.c.l.b16 %v2184
        %v2424 = vunpack.c.h.b16 %v2184
        %v2425 = vpack.c.b16 %v2267, %v2265
        %v2426 = vpack.c.b16 %v2268, %v2266
        %v2427 = vpack.c.b16 %v2271, %v2269
        %v2428 = vpack.c.b16 %v2272, %v2270
        %v2429 = vpack.c.b16 %v2275, %v2273
        %v2430 = vpack.c.b16 %v2276, %v2274
        %v2431 = vpack.c.b16 %v2279, %v2277
        %v2432 = vpack.c.b16 %v2280, %v2278
        %v2433 = vpack.c.b16 %v2283, %v2281
        %v2434 = vpack.c.b16 %v2284, %v2282
        %v2435 = vpack.c.b16 %v2287, %v2285
        %v2436 = vpack.c.b16 %v2288, %v2286
        %v2437 = vpack.c.b16 %v2291, %v2289
        %v2438 = vpack.c.b16 %v2292, %v2290
        %v2439 = vpack.c.b16 %v2295, %v2293
        %v2440 = vpack.c.b16 %v2296, %v2294
        %v2441 = vpack.c.b16 %v2299, %v2297
        %v2442 = vpack.c.b16 %v2300, %v2298
        %v2443 = vpack.c.b16 %v2303, %v2301
        %v2444 = vpack.c.b16 %v2304, %v2302
        %v2445 = vpack.c.b16 %v2307, %v2305
        %v2446 = vpack.c.b16 %v2308, %v2306
        %v2447 = vpack.c.b16 %v2311, %v2309
        %v2448 = vpack.c.b16 %v2312, %v2310
        %v2449 = vpack.c.b16 %v2315, %v2313
        %v2450 = vpack.c.b16 %v2316, %v2314
        %v2451 = vpack.c.b16 %v2319, %v2317
        %v2452 = vpack.c.b16 %v2320, %v2318
        %v2453 = vpack.c.b16 %v2323, %v2321
        %v2454 = vpack.c.b16 %v2324, %v2322
        %v2455 = vpack.c.b16 %v2327, %v2325
        %v2456 = vpack.c.b16 %v2328, %v2326
        %v2457 = vpack.c.b16 %v2331, %v2329
        %v2458 = vpack.c.b16 %v2332, %v2330
        %v2459 = vpack.c.b16 %v2335, %v2333
        %v2460 = vpack.c.b16 %v2336, %v2334
        %v2461 = vpack.c.b16 %v2339, %v2337
        %v2462 = vpack.c.b16 %v2340, %v2338
        %v2463 = vpack.c.b16 %v2343, %v2341
        %v2464 = vpack.c.b16 %v2344, %v2342
        %v2465 = vpack.c.b16 %v2347, %v2345
        %v2466 = vpack.c.b16 %v2348, %v2346
        %v2467 = vpack.c.b16 %v2351, %v2349
        %v2468 = vpack.c.b16 %v2352, %v2350
        %v2469 = vpack.c.b16 %v2355, %v2353
        %v2470 = vpack.c.b16 %v2356, %v2354
        %v2471 = vpack.c.b16 %v2359, %v2357
        %v2472 = vpack.c.b16 %v2360, %v2358
        %v2473 = vpack.c.b16 %v2363, %v2361
        %v2474 = vpack.c.b16 %v2364, %v2362
        %v2475 = vpack.c.b16 %v2367, %v2365
        %v2476 = vpack.c.b16 %v2368, %v2366
        %v2477 = vpack.c.b16 %v2371, %v2369
        %v2478 = vpack.c.b16 %v2372, %v2370
        %v2479 = vpack.c.b16 %v2375, %v2373
        %v2480 = vpack.c.b16 %v2376, %v2374
        %v2481 = vpack.c.b16 %v2379, %v2377
        %v2482 = vpack.c.b16 %v2380, %v2378
        %v2483 = vpack.c.b16 %v2383, %v2381
        %v2484 = vpack.c.b16 %v2384, %v2382
        %v2485 = vpack.c.b16 %v2387, %v2385
        %v2486 = vpack.c.b16 %v2388, %v2386
        %v2487 = vpack.c.b16 %v2391, %v2389
        %v2488 = vpack.c.b16 %v2392, %v2390
        %v2489 = vpack.c.b16 %v2395, %v2393
        %v2490 = vpack.c.b16 %v2396, %v2394
        %v2491 = vpack.c.b16 %v2399, %v2397
        %v2492 = vpack.c.b16 %v2400, %v2398
        %v2493 = vpack.c.b16 %v2403, %v2401
        %v2494 = vpack.c.b16 %v2404, %v2402
        %v2495 = vpack.c.b16 %v2407, %v2405
        %v2496 = vpack.c.b16 %v2408, %v2406
        %v2497 = vpack.c.b16 %v2411, %v2409
        %v2498 = vpack.c.b16 %v2412, %v2410
        %v2499 = vpack.c.b16 %v2415, %v2413
        %v2500 = vpack.c.b16 %v2416, %v2414
        %v2501 = vpack.c.b16 %v2419, %v2417
        %v2502 = vpack.c.b16 %v2420, %v2418
        %v2503 = vpack.c.b16 %v2423, %v2421
        %v2504 = vpack.c.b16 %v2424, %v2422
        %2585 = vmatprep.subr.bf16.mxu0 %v2440
        %2586 = vmatpush1.bf16.msra.mxu0 %v2439
        %2587 = vmatprep.subr.bf16.mxu0 %v2438
        %2588 = vmatpush1.bf16.msra.mxu0 %v2437
        %2589 = vmatprep.subr.bf16.mxu0 %v2436
        %2590 = vmatpush1.bf16.msra.mxu0 %v2435
        %2591 = vmatprep.subr.bf16.mxu0 %v2434
        %2592 = vmatpush1.bf16.msra.mxu0 %v2433
        %2593 = vmatprep.subr.bf16.mxu0 %v2432
        %2594 = vmatpush1.bf16.msra.mxu0 %v2431
        %2595 = vmatprep.subr.bf16.mxu0 %v2430
        %2596 = vmatpush1.bf16.msra.mxu0 %v2429
        %2597 = vmatprep.subr.bf16.mxu0 %v2428
        %2598 = vmatpush1.bf16.msra.mxu0 %v2427
        %2599 = vmatprep.subr.bf16.mxu0 %v2426
        %2600 = vmatpush1.bf16.msra.mxu0 %v2425
        %2601 = vmatprep.subr.bf16.mxu0 %v2456
        %2602 = vmatpush2.bf16.msra.mxu0 %v2455
        %2603 = vmatprep.subr.bf16.mxu0 %v2454
        %2604 = vmatpush2.bf16.msra.mxu0 %v2453
        %2605 = vmatprep.subr.bf16.mxu0 %v2452
        %2606 = vmatpush2.bf16.msra.mxu0 %v2451
        %2607 = vmatprep.subr.bf16.mxu0 %v2450
        %2608 = vmatpush2.bf16.msra.mxu0 %v2449
        %2609 = vmatprep.subr.bf16.mxu0 %v2448
        %2610 = vmatpush2.bf16.msra.mxu0 %v2447
        %2611 = vmatprep.subr.bf16.mxu0 %v2446
        %2612 = vmatpush2.bf16.msra.mxu0 %v2445
        %2613 = vmatprep.subr.bf16.mxu0 %v2444
        %2614 = vmatpush2.bf16.msra.mxu0 %v2443
        %2615 = vmatprep.subr.bf16.mxu0 %v2442
        %2616 = vmatpush2.bf16.msra.mxu0 %v2441
        %2617 = vmatprep.mubr.bf16.mxu0 %v2048
        %2618 = vmatmul.mubr.bf16.gmra.mxu0 %v2034
        %v2619 = vpop.f32.mrf.mxu0
        %v2620 = vadd.f32 0.0, %v2619
        %v2621 = vpop.f32.mrf.mxu0
        %v2622 = vadd.f32 0.0, %v2621
        %v2623 = vpop.f32.mrf.mxu0
        %v2624 = vadd.f32 0.0, %v2623
        %v2625 = vpop.f32.mrf.mxu0
        %v2626 = vadd.f32 0.0, %v2625
        %2627 = vmatprep.mubr.bf16.mxu0 %v2090
        %2628 = vmatmul.mubr.bf16.gmra.mxu0 %v2087
        %v2629 = vpop.f32.mrf.mxu0
        %v2630 = vadd.f32 0.0, %v2629
        %v2631 = vpop.f32.mrf.mxu0
        %v2632 = vadd.f32 0.0, %v2631
        %v2633 = vpop.f32.mrf.mxu0
        %v2634 = vadd.f32 0.0, %v2633
        %v2635 = vpop.f32.mrf.mxu0
        %v2636 = vadd.f32 0.0, %v2635
        %2637 = vdwg.mxu0
        %2638 = vmatprep.subr.bf16.mxu0 %v2472
        %2639 = vmatpush1.bf16.msra.mxu0 %v2471
        %2640 = vmatprep.subr.bf16.mxu0 %v2470
        %2641 = vmatpush1.bf16.msra.mxu0 %v2469
        %2642 = vmatprep.subr.bf16.mxu0 %v2468
        %2643 = vmatpush1.bf16.msra.mxu0 %v2467
        %2644 = vmatprep.subr.bf16.mxu0 %v2466
        %2645 = vmatpush1.bf16.msra.mxu0 %v2465
        %2646 = vmatprep.subr.bf16.mxu0 %v2464
        %2647 = vmatpush1.bf16.msra.mxu0 %v2463
        %2648 = vmatprep.subr.bf16.mxu0 %v2462
        %2649 = vmatpush1.bf16.msra.mxu0 %v2461
        %2650 = vmatprep.subr.bf16.mxu0 %v2460
        %2651 = vmatpush1.bf16.msra.mxu0 %v2459
        %2652 = vmatprep.subr.bf16.mxu0 %v2458
        %2653 = vmatpush1.bf16.msra.mxu0 %v2457
        %2654 = vmatprep.subr.bf16.mxu0 %v2488
        %2655 = vmatpush2.bf16.msra.mxu0 %v2487
        %2656 = vmatprep.subr.bf16.mxu0 %v2486
        %2657 = vmatpush2.bf16.msra.mxu0 %v2485
        %2658 = vmatprep.subr.bf16.mxu0 %v2484
        %2659 = vmatpush2.bf16.msra.mxu0 %v2483
        %2660 = vmatprep.subr.bf16.mxu0 %v2482
        %2661 = vmatpush2.bf16.msra.mxu0 %v2481
        %2662 = vmatprep.subr.bf16.mxu0 %v2480
        %2663 = vmatpush2.bf16.msra.mxu0 %v2479
        %2664 = vmatprep.subr.bf16.mxu0 %v2478
        %2665 = vmatpush2.bf16.msra.mxu0 %v2477
        %2666 = vmatprep.subr.bf16.mxu0 %v2476
        %2667 = vmatpush2.bf16.msra.mxu0 %v2475
        %2668 = vmatprep.subr.bf16.mxu0 %v2474
        %2669 = vmatpush2.bf16.msra.mxu0 %v2473
        %2670 = vmatprep.mubr.bf16.mxu0 %v2064
        %2671 = vmatmul.mubr.bf16.gmra.mxu0 %v2054
        %v2672 = vpop.f32.mrf.mxu0
        %v2673 = vadd.f32 %v2620, %v2672
        %v2674 = vpop.f32.mrf.mxu0
        %v2675 = vadd.f32 %v2622, %v2674
        %v2676 = vpop.f32.mrf.mxu0
        %v2677 = vadd.f32 %v2624, %v2676
        %v2678 = vpop.f32.mrf.mxu0
        %v2679 = vadd.f32 %v2626, %v2678
        %2680 = vmatprep.mubr.bf16.mxu0 %v2096
        %2681 = vmatmul.mubr.bf16.gmra.mxu0 %v2093
        %v2682 = vpop.f32.mrf.mxu0
        %v2683 = vadd.f32 %v2630, %v2682
        %v2684 = vpop.f32.mrf.mxu0
        %v2685 = vadd.f32 %v2632, %v2684
        %v2686 = vpop.f32.mrf.mxu0
        %v2687 = vadd.f32 %v2634, %v2686
        %v2688 = vpop.f32.mrf.mxu0
        %v2689 = vadd.f32 %v2636, %v2688
        %2690 = vdwg.mxu0
        %2691 = vmatprep.subr.bf16.mxu0 %v2504
        %2692 = vmatpush1.bf16.msra.mxu0 %v2503
        %2693 = vmatprep.subr.bf16.mxu0 %v2502
        %2694 = vmatpush1.bf16.msra.mxu0 %v2501
        %2695 = vmatprep.subr.bf16.mxu0 %v2500
        %2696 = vmatpush1.bf16.msra.mxu0 %v2499
        %2697 = vmatprep.subr.bf16.mxu0 %v2498
        %2698 = vmatpush1.bf16.msra.mxu0 %v2497
        %2699 = vmatprep.subr.bf16.mxu0 %v2496
        %2700 = vmatpush1.bf16.msra.mxu0 %v2495
        %2701 = vmatprep.subr.bf16.mxu0 %v2494
        %2702 = vmatpush1.bf16.msra.mxu0 %v2493
        %2703 = vmatprep.subr.bf16.mxu0 %v2492
        %2704 = vmatpush1.bf16.msra.mxu0 %v2491
        %2705 = vmatprep.subr.bf16.mxu0 %v2490
        %2706 = vmatpush1.bf16.msra.mxu0 %v2489
        %2707 = vmatprep.subr.bf16.mxu0 0
        %2708 = vmatpush2.bf16.msra.mxu0 0
        %2709 = vmatprep.subr.bf16.mxu0 0
        %2710 = vmatpush2.bf16.msra.mxu0 0
        %2711 = vmatprep.subr.bf16.mxu0 0
        %2712 = vmatpush2.bf16.msra.mxu0 0
        %2713 = vmatprep.subr.bf16.mxu0 0
        %2714 = vmatpush2.bf16.msra.mxu0 0
        %2715 = vmatprep.subr.bf16.mxu0 0
        %2716 = vmatpush2.bf16.msra.mxu0 0
        %2717 = vmatprep.subr.bf16.mxu0 0
        %2718 = vmatpush2.bf16.msra.mxu0 0
        %2719 = vmatprep.subr.bf16.mxu0 0
        %2720 = vmatpush2.bf16.msra.mxu0 0
        %2721 = vmatprep.subr.bf16.mxu0 0
        %2722 = vmatpush2.bf16.msra.mxu0 0
        %2723 = vmatprep.mubr.bf16.mxu0 0
        %2724 = vmatmul.mubr.bf16.gmra.mxu0 %v2068
        %v2725 = vpop.f32.mrf.mxu0
        %v2726 = vadd.f32 %v2673, %v2725
        %v2727 = vpop.f32.mrf.mxu0
        %v2728 = vadd.f32 %v2675, %v2727
        %v2729 = vpop.f32.mrf.mxu0
        %v2730 = vadd.f32 %v2677, %v2729
        %v2731 = vpop.f32.mrf.mxu0
        %v2732 = vadd.f32 %v2679, %v2731
        %2733 = vmatprep.mubr.bf16.mxu0 0
        %2734 = vmatmul.mubr.bf16.gmra.mxu0 %v2099
        %v2735 = vpop.f32.mrf.mxu0
        %v2736 = vadd.f32 %v2683, %v2735
        %v2737 = vpop.f32.mrf.mxu0
        %v2738 = vadd.f32 %v2685, %v2737
        %v2739 = vpop.f32.mrf.mxu0
        %v2740 = vadd.f32 %v2687, %v2739
        %v2741 = vpop.f32.mrf.mxu0
        %v2742 = vadd.f32 %v2689, %v2741
        %2743 = vdwg.mxu0
        %v2744 = vmax.f32 %v2726, 0.0
        %v2745 = vmax.f32 %v2728, 0.0
        %v2746 = vmax.f32 %v2730, 0.0
        %v2747 = vmax.f32 %v2732, 0.0
        %v2748 = vmax.f32 %v2736, 0.0
        %v2749 = vmax.f32 %v2738, 0.0
        %v2750 = vmax.f32 %v2740, 0.0
        %v2751 = vmax.f32 %v2742, 0.0
        %v2752 = vmul.f32 %v2744, %v2744
        %v2753 = vmul.f32 %v2745, %v2745
        %v2754 = vmul.f32 %v2746, %v2746
        %v2755 = vmul.f32 %v2747, %v2747
        %v2756 = vmul.f32 %v2748, %v2748
        %v2757 = vmul.f32 %v2749, %v2749
        %v2758 = vmul.f32 %v2750, %v2750
        %v2759 = vmul.f32 %v2751, %v2751
        %v2760 = vpack.c.bf16 %v2754, %v2752
        %v2761 = vpack.c.bf16 %v2755, %v2753
        %v2762 = vpack.c.bf16 %v2758, %v2756
        %v2763 = vpack.c.bf16 %v2759, %v2757
        %v2764 = vld [vmem:[%s6] sm:$0xff]
        %v2765 = vld [vmem:[%s6 + $0x8] sm:$0xff]
        %v2766 = vld [vmem:[%s6 + $0x10] sm:$0xff]
        %v2767 = vld [vmem:[%s6 + $0x18] sm:$0xff]
        %v2768 = vld [vmem:[%s6 + $0x20] sm:$0xff]
        %v2769 = vld [vmem:[%s6 + $0x28] sm:$0xff]
        %v2770 = vld [vmem:[%s6 + $0x30] sm:$0xff]
        %v2771 = vld [vmem:[%s6 + $0x38] sm:$0xff]
        %v2772 = vld [vmem:[%s6 + $0x40] sm:$0xff]
        %v2773 = vld [vmem:[%s6 + $0x48] sm:$0xff]
        %v2774 = vld [vmem:[%s6 + $0x50] sm:$0xff]
        %v2775 = vld [vmem:[%s6 + $0x58] sm:$0xff]
        %v2776 = vld [vmem:[%s6 + $0x60] sm:$0xff]
        %v2777 = vld [vmem:[%s6 + $0x68] sm:$0xff]
        %v2778 = vld [vmem:[%s6 + $0x70] sm:$0xff]
        %v2779 = vld [vmem:[%s6 + $0x78] sm:$0xff]
        %v2780 = vld [vmem:[%s6 + $0x80] sm:$0xff]
        %v2781 = vld [vmem:[%s6 + $0x88] sm:$0xff]
        %v2782 = vld [vmem:[%s6 + $0x90] sm:$0xff]
        %v2783 = vld [vmem:[%s6 + $0x98] sm:$0xff]
        %v2804 = vunpack.c.l.b16 %v2764
        %v2805 = vunpack.c.h.b16 %v2764
        %v2806 = vunpack.c.l.b16 %v2765
        %v2807 = vunpack.c.h.b16 %v2765
        %v2808 = vunpack.c.l.b16 %v2766
        %v2809 = vunpack.c.h.b16 %v2766
        %v2810 = vunpack.c.l.b16 %v2767
        %v2811 = vunpack.c.h.b16 %v2767
        %v2812 = vunpack.c.l.b16 %v2768
        %v2813 = vunpack.c.h.b16 %v2768
        %v2814 = vunpack.c.l.b16 %v2769
        %v2815 = vunpack.c.h.b16 %v2769
        %v2816 = vunpack.c.l.b16 %v2770
        %v2817 = vunpack.c.h.b16 %v2770
        %v2818 = vunpack.c.l.b16 %v2771
        %v2819 = vunpack.c.h.b16 %v2771
        %v2820 = vunpack.c.l.b16 %v2772
        %v2821 = vunpack.c.h.b16 %v2772
        %v2822 = vunpack.c.l.b16 %v2773
        %v2823 = vunpack.c.h.b16 %v2773
        %v2824 = vunpack.c.l.b16 %v2774
        %v2825 = vunpack.c.h.b16 %v2774
        %v2826 = vunpack.c.l.b16 %v2775
        %v2827 = vunpack.c.h.b16 %v2775
        %v2828 = vunpack.c.l.b16 %v2776
        %v2829 = vunpack.c.h.b16 %v2776
        %v2830 = vunpack.c.l.b16 %v2777
        %v2831 = vunpack.c.h.b16 %v2777
        %v2832 = vunpack.c.l.b16 %v2778
        %v2833 = vunpack.c.h.b16 %v2778
        %v2834 = vunpack.c.l.b16 %v2779
        %v2835 = vunpack.c.h.b16 %v2779
        %v2836 = vunpack.c.l.b16 %v2780
        %v2837 = vunpack.c.h.b16 %v2780
        %v2838 = vunpack.c.l.b16 %v2781
        %v2839 = vunpack.c.h.b16 %v2781
        %v2840 = vunpack.c.l.b16 %v2782
        %v2841 = vunpack.c.h.b16 %v2782
        %v2842 = vunpack.c.l.b16 %v2783
        %v2843 = vunpack.c.h.b16 %v2783
        %v2844 = vpack.c.b16 %v2806, %v2804
        %v2845 = vpack.c.b16 %v2807, %v2805
        %v2846 = vpack.c.b16 %v2810, %v2808
        %v2847 = vpack.c.b16 %v2811, %v2809
        %v2848 = vpack.c.b16 %v2814, %v2812
        %v2849 = vpack.c.b16 %v2815, %v2813
        %v2850 = vpack.c.b16 %v2818, %v2816
        %v2851 = vpack.c.b16 %v2819, %v2817
        %v2852 = vpack.c.b16 %v2822, %v2820
        %v2853 = vpack.c.b16 %v2823, %v2821
        %v2854 = vpack.c.b16 %v2826, %v2824
        %v2855 = vpack.c.b16 %v2827, %v2825
        %v2856 = vpack.c.b16 %v2830, %v2828
        %v2857 = vpack.c.b16 %v2831, %v2829
        %v2858 = vpack.c.b16 %v2834, %v2832
        %v2859 = vpack.c.b16 %v2835, %v2833
        %v2860 = vpack.c.b16 %v2838, %v2836
        %v2861 = vpack.c.b16 %v2839, %v2837
        %v2862 = vpack.c.b16 %v2842, %v2840
        %v2863 = vpack.c.b16 %v2843, %v2841
        %vm2884 = vcmask 261120
        %v2886 = vsel %vm2884, %v2761, 0
        %v2889 = vsel %vm2884, %v2763, 0
        %2891 = vmatprep.subr.bf16.mxu0 %v2859
        %2892 = vmatpush1.bf16.msra.mxu0 %v2858
        %2893 = vmatprep.subr.bf16.mxu0 %v2857
        %2894 = vmatpush1.bf16.msra.mxu0 %v2856
        %2895 = vmatprep.subr.bf16.mxu0 %v2855
        %2896 = vmatpush1.bf16.msra.mxu0 %v2854
        %2897 = vmatprep.subr.bf16.mxu0 %v2853
        %2898 = vmatpush1.bf16.msra.mxu0 %v2852
        %2899 = vmatprep.subr.bf16.mxu0 %v2851
        %2900 = vmatpush1.bf16.msra.mxu0 %v2850
        %2901 = vmatprep.subr.bf16.mxu0 %v2849
        %2902 = vmatpush1.bf16.msra.mxu0 %v2848
        %2903 = vmatprep.subr.bf16.mxu0 %v2847
        %2904 = vmatpush1.bf16.msra.mxu0 %v2846
        %2905 = vmatprep.subr.bf16.mxu0 %v2845
        %2906 = vmatpush1.bf16.msra.mxu0 %v2844
        %2907 = vmatprep.subr.bf16.mxu0 0
        %2908 = vmatpush2.bf16.msra.mxu0 0
        %2909 = vmatprep.subr.bf16.mxu0 0
        %2910 = vmatpush2.bf16.msra.mxu0 0
        %2911 = vmatprep.subr.bf16.mxu0 0
        %2912 = vmatpush2.bf16.msra.mxu0 0
        %2913 = vmatprep.subr.bf16.mxu0 0
        %2914 = vmatpush2.bf16.msra.mxu0 0
        %2915 = vmatprep.subr.bf16.mxu0 0
        %2916 = vmatpush2.bf16.msra.mxu0 0
        %2917 = vmatprep.subr.bf16.mxu0 0
        %2918 = vmatpush2.bf16.msra.mxu0 0
        %2919 = vmatprep.subr.bf16.mxu0 %v2863
        %2920 = vmatpush2.bf16.msra.mxu0 %v2862
        %2921 = vmatprep.subr.bf16.mxu0 %v2861
        %2922 = vmatpush2.bf16.msra.mxu0 %v2860
        %2923 = vmatprep.mubr.bf16.mxu0 %v2886
        %2924 = vmatmul.mubr.bf16.gmra.mxu0 %v2760
        %v2925 = vpop.f32.mrf.mxu0
        %v2926 = vadd.f32 0.0, %v2925
        %v2927 = vpop.f32.mrf.mxu0
        %v2928 = vadd.f32 0.0, %v2927
        %v2929 = vpop.f32.mrf.mxu0
        %v2930 = vadd.f32 0.0, %v2929
        %v2931 = vpop.f32.mrf.mxu0
        %v2932 = vadd.f32 0.0, %v2931
        %2933 = vmatprep.mubr.bf16.mxu0 %v2889
        %2934 = vmatmul.mubr.bf16.gmra.mxu0 %v2762
        %v2935 = vpop.f32.mrf.mxu0
        %v2936 = vadd.f32 0.0, %v2935
        %v2937 = vpop.f32.mrf.mxu0
        %v2938 = vadd.f32 0.0, %v2937
        %v2939 = vpop.f32.mrf.mxu0
        %v2940 = vadd.f32 0.0, %v2939
        %v2941 = vpop.f32.mrf.mxu0
        %v2942 = vadd.f32 0.0, %v2941
        %2943 = vdwg.mxu0
        %v2944 = vmul.f32 %v2926, 2.7777778e-05
        %v2945 = vmul.f32 %v2928, 2.7777778e-05
        %v2946 = vmul.f32 %v2930, 2.7777778e-05
        %v2947 = vmul.f32 %v2932, 2.7777778e-05
        %v2948 = vmul.f32 %v2936, 2.7777778e-05
        %v2949 = vmul.f32 %v2938, 2.7777778e-05
        %v2950 = vmul.f32 %v2940, 2.7777778e-05
        %v2951 = vmul.f32 %v2942, 2.7777778e-05
        %v2952 = vadd.f32 %v2944, 1.0
        %v2953 = vadd.f32 %v2945, 1.0
        %v2954 = vadd.f32 %v2946, 1.0
        %v2955 = vadd.f32 %v2947, 1.0
        %v2956 = vadd.f32 %v2948, 1.0
        %v2957 = vadd.f32 %v2949, 1.0
        %v2958 = vadd.f32 %v2950, 1.0
        %v2959 = vadd.f32 %v2951, 1.0
        %v2960 = vrsqrt.pop %v2952
        %v2961 = vrsqrt.pop %v2953
        %v2962 = vrsqrt.pop %v2954
        %v2963 = vrsqrt.pop %v2955
        %v2964 = vrsqrt.pop %v2956
        %v2965 = vrsqrt.pop %v2957
        %v2966 = vrsqrt.pop %v2958
        %v2967 = vrsqrt.pop %v2959
        %v2968 = vrsqrt.pop %v2952
        %v2969 = vmul.f32 %v2952, %v2968
        %vm2970 = vcmp.eq.f32.partialorder %v2952, inf
        %v2971 = vsel %vm2970, %v2952, %v2969
        %vm2972 = vcmp.eq.f32.partialorder %v2952, 0.0
        %v2973 = vand.u32 %v2952, 2147483648
        %v2974 = vsel %vm2972, %v2973, %v2971
        %v2975 = vrsqrt.pop %v2953
        %v2976 = vmul.f32 %v2953, %v2975
        %vm2977 = vcmp.eq.f32.partialorder %v2953, inf
        %v2978 = vsel %vm2977, %v2953, %v2976
        %vm2979 = vcmp.eq.f32.partialorder %v2953, 0.0
        %v2980 = vand.u32 %v2953, 2147483648
        %v2981 = vsel %vm2979, %v2980, %v2978
        %v2982 = vrsqrt.pop %v2954
        %v2983 = vmul.f32 %v2954, %v2982
        %vm2984 = vcmp.eq.f32.partialorder %v2954, inf
        %v2985 = vsel %vm2984, %v2954, %v2983
        %vm2986 = vcmp.eq.f32.partialorder %v2954, 0.0
        %v2987 = vand.u32 %v2954, 2147483648
        %v2988 = vsel %vm2986, %v2987, %v2985
        %v2989 = vrsqrt.pop %v2955
        %v2990 = vmul.f32 %v2955, %v2989
        %vm2991 = vcmp.eq.f32.partialorder %v2955, inf
        %v2992 = vsel %vm2991, %v2955, %v2990
        %vm2993 = vcmp.eq.f32.partialorder %v2955, 0.0
        %v2994 = vand.u32 %v2955, 2147483648
        %v2995 = vsel %vm2993, %v2994, %v2992
        %v2996 = vrsqrt.pop %v2956
        %v2997 = vmul.f32 %v2956, %v2996
        %vm2998 = vcmp.eq.f32.partialorder %v2956, inf
        %v2999 = vsel %vm2998, %v2956, %v2997
        %vm3000 = vcmp.eq.f32.partialorder %v2956, 0.0
        %v3001 = vand.u32 %v2956, 2147483648
        %v3002 = vsel %vm3000, %v3001, %v2999
        %v3003 = vrsqrt.pop %v2957
        %v3004 = vmul.f32 %v2957, %v3003
        %vm3005 = vcmp.eq.f32.partialorder %v2957, inf
        %v3006 = vsel %vm3005, %v2957, %v3004
        %vm3007 = vcmp.eq.f32.partialorder %v2957, 0.0
        %v3008 = vand.u32 %v2957, 2147483648
        %v3009 = vsel %vm3007, %v3008, %v3006
        %v3010 = vrsqrt.pop %v2958
        %v3011 = vmul.f32 %v2958, %v3010
        %vm3012 = vcmp.eq.f32.partialorder %v2958, inf
        %v3013 = vsel %vm3012, %v2958, %v3011
        %vm3014 = vcmp.eq.f32.partialorder %v2958, 0.0
        %v3015 = vand.u32 %v2958, 2147483648
        %v3016 = vsel %vm3014, %v3015, %v3013
        %v3017 = vrsqrt.pop %v2959
        %v3018 = vmul.f32 %v2959, %v3017
        %vm3019 = vcmp.eq.f32.partialorder %v2959, inf
        %v3020 = vsel %vm3019, %v2959, %v3018
        %vm3021 = vcmp.eq.f32.partialorder %v2959, 0.0
        %v3022 = vand.u32 %v2959, 2147483648
        %v3023 = vsel %vm3021, %v3022, %v3020
        %v3024 = vrsqrt.pop %v2974
        %v3025 = vrsqrt.pop %v2981
        %v3026 = vrsqrt.pop %v2988
        %v3027 = vrsqrt.pop %v2995
        %v3028 = vrsqrt.pop %v3002
        %v3029 = vrsqrt.pop %v3009
        %v3030 = vrsqrt.pop %v3016
        %v3031 = vrsqrt.pop %v3023
        %v3032 = vmul.f32 %v2960, %v3024
        %v3033 = vmul.f32 %v2961, %v3025
        %v3034 = vmul.f32 %v2962, %v3026
        %v3035 = vmul.f32 %v2963, %v3027
        %v3036 = vmul.f32 %v2964, %v3028
        %v3037 = vmul.f32 %v2965, %v3029
        %v3038 = vmul.f32 %v2966, %v3030
        %v3039 = vmul.f32 %v2967, %v3031
        %v3040 = vmul.f32 %v2744, %v3032
        %v3041 = vmul.f32 %v2745, %v3033
        %v3042 = vmul.f32 %v2746, %v3034
        %v3043 = vmul.f32 %v2747, %v3035
        %v3044 = vmul.f32 %v2748, %v3036
        %v3045 = vmul.f32 %v2749, %v3037
        %v3046 = vmul.f32 %v2750, %v3038
        %v3047 = vmul.f32 %v2751, %v3039
        %v3048 = vpack.c.bf16 %v3042, %v3040
        %v3049 = vpack.c.bf16 %v3043, %v3041
        %v3050 = vpack.c.bf16 %v3046, %v3044
        %v3051 = vpack.c.bf16 %v3047, %v3045
        %v3052 = vld [vmem:[%s7] sm:$0xf]
        %v3053 = vld [vmem:[%s7 + $0x4] sm:$0xf]
        %v3054 = vld [vmem:[%s7 + $0x8] sm:$0xf]
        %v3055 = vld [vmem:[%s7 + $0xc] sm:$0xf]
        %v3056 = vld [vmem:[%s7 + $0x10] sm:$0xf]
        %v3057 = vld [vmem:[%s7 + $0x14] sm:$0xf]
        %v3058 = vld [vmem:[%s7 + $0x18] sm:$0xf]
        %v3059 = vld [vmem:[%s7 + $0x1c] sm:$0xf]
        %v3060 = vld [vmem:[%s7 + $0x20] sm:$0xf]
        %v3061 = vld [vmem:[%s7 + $0x24] sm:$0xf]
        %v3062 = vld [vmem:[%s7 + $0x28] sm:$0xf]
        %v3063 = vld [vmem:[%s7 + $0x2c] sm:$0xf]
        %v3064 = vld [vmem:[%s7 + $0x30] sm:$0xf]
        %v3065 = vld [vmem:[%s7 + $0x34] sm:$0xf]
        %v3066 = vld [vmem:[%s7 + $0x38] sm:$0xf]
        %v3067 = vld [vmem:[%s7 + $0x3c] sm:$0xf]
        %v3068 = vld [vmem:[%s7 + $0x40] sm:$0xf]
        %v3069 = vld [vmem:[%s7 + $0x44] sm:$0xf]
        %v3070 = vld [vmem:[%s7 + $0x48] sm:$0xf]
        %v3071 = vld [vmem:[%s7 + $0x4c] sm:$0xf]
        %v3092 = vunpack.c.l.b16 %v3052
        %v3093 = vunpack.c.l.b16 %v3053
        %v3094 = vunpack.c.l.b16 %v3054
        %v3095 = vunpack.c.l.b16 %v3055
        %v3096 = vunpack.c.l.b16 %v3056
        %v3097 = vunpack.c.l.b16 %v3057
        %v3098 = vunpack.c.l.b16 %v3058
        %v3099 = vunpack.c.l.b16 %v3059
        %v3100 = vunpack.c.l.b16 %v3060
        %v3101 = vunpack.c.l.b16 %v3061
        %v3102 = vunpack.c.l.b16 %v3062
        %v3103 = vunpack.c.l.b16 %v3063
        %v3104 = vunpack.c.l.b16 %v3064
        %v3105 = vunpack.c.l.b16 %v3065
        %v3106 = vunpack.c.l.b16 %v3066
        %v3107 = vunpack.c.l.b16 %v3067
        %v3108 = vunpack.c.l.b16 %v3068
        %v3109 = vunpack.c.l.b16 %v3069
        %v3110 = vunpack.c.l.b16 %v3070
        %v3111 = vunpack.c.l.b16 %v3071
        %v3112 = vpack.c.b16 %v3093, %v3092
        %v3113 = vpack.c.b16 %v3095, %v3094
        %v3114 = vpack.c.b16 %v3097, %v3096
        %v3115 = vpack.c.b16 %v3099, %v3098
        %v3116 = vpack.c.b16 %v3101, %v3100
        %v3117 = vpack.c.b16 %v3103, %v3102
        %v3118 = vpack.c.b16 %v3105, %v3104
        %v3119 = vpack.c.b16 %v3107, %v3106
        %v3120 = vpack.c.b16 %v3109, %v3108
        %v3121 = vpack.c.b16 %v3111, %v3110
        %v3133 = vsel %vm2884, %v3049, 0
        %v3136 = vsel %vm2884, %v3051, 0
        %3138 = vmatprep.subr.bf16.mxu0 0
        %3139 = vmatpush1.bf16.msra.mxu0 %v3119
        %3140 = vmatprep.subr.bf16.mxu0 0
        %3141 = vmatpush1.bf16.msra.mxu0 %v3118
        %3142 = vmatprep.subr.bf16.mxu0 0
        %3143 = vmatpush1.bf16.msra.mxu0 %v3117
        %3144 = vmatprep.subr.bf16.mxu0 0
        %3145 = vmatpush1.bf16.msra.mxu0 %v3116
        %3146 = vmatprep.subr.bf16.mxu0 0
        %3147 = vmatpush1.bf16.msra.mxu0 %v3115
        %3148 = vmatprep.subr.bf16.mxu0 0
        %3149 = vmatpush1.bf16.msra.mxu0 %v3114
        %3150 = vmatprep.subr.bf16.mxu0 0
        %3151 = vmatpush1.bf16.msra.mxu0 %v3113
        %3152 = vmatprep.subr.bf16.mxu0 0
        %3153 = vmatpush1.bf16.msra.mxu0 %v3112
        %3154 = vmatprep.subr.bf16.mxu0 0
        %3155 = vmatpush2.bf16.msra.mxu0 0
        %3156 = vmatprep.subr.bf16.mxu0 0
        %3157 = vmatpush2.bf16.msra.mxu0 0
        %3158 = vmatprep.subr.bf16.mxu0 0
        %3159 = vmatpush2.bf16.msra.mxu0 0
        %3160 = vmatprep.subr.bf16.mxu0 0
        %3161 = vmatpush2.bf16.msra.mxu0 0
        %3162 = vmatprep.subr.bf16.mxu0 0
        %3163 = vmatpush2.bf16.msra.mxu0 0
        %3164 = vmatprep.subr.bf16.mxu0 0
        %3165 = vmatpush2.bf16.msra.mxu0 0
        %3166 = vmatprep.subr.bf16.mxu0 0
        %3167 = vmatpush2.bf16.msra.mxu0 %v3121
        %3168 = vmatprep.subr.bf16.mxu0 0
        %3169 = vmatpush2.bf16.msra.mxu0 %v3120
        %3170 = vmatprep.mubr.bf16.mxu0 %v3133
        %3171 = vmatmul.mubr.bf16.gmra.mxu0 %v3048
        %v3172 = vpop.f32.mrf.mxu0
        %v3173 = vadd.f32 0.0, %v3172
        %v3174 = vpop.f32.mrf.mxu0
        %v3175 = vpop.f32.mrf.mxu0
        %v3176 = vadd.f32 0.0, %v3175
        %v3177 = vpop.f32.mrf.mxu0
        %3178 = vmatprep.mubr.bf16.mxu0 %v3136
        %3179 = vmatmul.mubr.bf16.gmra.mxu0 %v3050
        %v3180 = vpop.f32.mrf.mxu0
        %v3181 = vadd.f32 0.0, %v3180
        %v3182 = vpop.f32.mrf.mxu0
        %v3183 = vpop.f32.mrf.mxu0
        %v3184 = vadd.f32 0.0, %v3183
        %v3185 = vpop.f32.mrf.mxu0
        %3186 = vdwg.mxu0
        %s3187 = scalar_lea.vmem %s7, 80
        %v3188 = vld [vmem:[%s3187] sm:$0xf]
        %v3189 = vld [vmem:[%s3187 + $0x4] sm:$0xf]
        %v3190 = vld [vmem:[%s3187 + $0x8] sm:$0xf]
        %v3191 = vld [vmem:[%s3187 + $0xc] sm:$0xf]
        %v3192 = vld [vmem:[%s3187 + $0x10] sm:$0xf]
        %v3193 = vld [vmem:[%s3187 + $0x14] sm:$0xf]
        %v3194 = vld [vmem:[%s3187 + $0x18] sm:$0xf]
        %v3195 = vld [vmem:[%s3187 + $0x1c] sm:$0xf]
        %v3196 = vld [vmem:[%s3187 + $0x20] sm:$0xf]
        %v3197 = vld [vmem:[%s3187 + $0x24] sm:$0xf]
        %v3198 = vld [vmem:[%s3187 + $0x28] sm:$0xf]
        %v3199 = vld [vmem:[%s3187 + $0x2c] sm:$0xf]
        %v3200 = vld [vmem:[%s3187 + $0x30] sm:$0xf]
        %v3201 = vld [vmem:[%s3187 + $0x34] sm:$0xf]
        %v3202 = vld [vmem:[%s3187 + $0x38] sm:$0xf]
        %v3203 = vld [vmem:[%s3187 + $0x3c] sm:$0xf]
        %v3204 = vld [vmem:[%s3187 + $0x40] sm:$0xf]
        %v3205 = vld [vmem:[%s3187 + $0x44] sm:$0xf]
        %v3206 = vld [vmem:[%s3187 + $0x48] sm:$0xf]
        %v3207 = vld [vmem:[%s3187 + $0x4c] sm:$0xf]
        %v3228 = vunpack.c.l.b16 %v3188
        %v3229 = vunpack.c.l.b16 %v3189
        %v3230 = vunpack.c.l.b16 %v3190
        %v3231 = vunpack.c.l.b16 %v3191
        %v3232 = vunpack.c.l.b16 %v3192
        %v3233 = vunpack.c.l.b16 %v3193
        %v3234 = vunpack.c.l.b16 %v3194
        %v3235 = vunpack.c.l.b16 %v3195
        %v3236 = vunpack.c.l.b16 %v3196
        %v3237 = vunpack.c.l.b16 %v3197
        %v3238 = vunpack.c.l.b16 %v3198
        %v3239 = vunpack.c.l.b16 %v3199
        %v3240 = vunpack.c.l.b16 %v3200
        %v3241 = vunpack.c.l.b16 %v3201
        %v3242 = vunpack.c.l.b16 %v3202
        %v3243 = vunpack.c.l.b16 %v3203
        %v3244 = vunpack.c.l.b16 %v3204
        %v3245 = vunpack.c.l.b16 %v3205
        %v3246 = vunpack.c.l.b16 %v3206
        %v3247 = vunpack.c.l.b16 %v3207
        %v3248 = vpack.c.b16 %v3229, %v3228
        %v3249 = vpack.c.b16 %v3231, %v3230
        %v3250 = vpack.c.b16 %v3233, %v3232
        %v3251 = vpack.c.b16 %v3235, %v3234
        %v3252 = vpack.c.b16 %v3237, %v3236
        %v3253 = vpack.c.b16 %v3239, %v3238
        %v3254 = vpack.c.b16 %v3241, %v3240
        %v3255 = vpack.c.b16 %v3243, %v3242
        %v3256 = vpack.c.b16 %v3245, %v3244
        %v3257 = vpack.c.b16 %v3247, %v3246
        %3268 = vmatprep.subr.bf16.mxu0 0
        %3269 = vmatpush1.bf16.msra.mxu0 %v3255
        %3270 = vmatprep.subr.bf16.mxu0 0
        %3271 = vmatpush1.bf16.msra.mxu0 %v3254
        %3272 = vmatprep.subr.bf16.mxu0 0
        %3273 = vmatpush1.bf16.msra.mxu0 %v3253
        %3274 = vmatprep.subr.bf16.mxu0 0
        %3275 = vmatpush1.bf16.msra.mxu0 %v3252
        %3276 = vmatprep.subr.bf16.mxu0 0
        %3277 = vmatpush1.bf16.msra.mxu0 %v3251
        %3278 = vmatprep.subr.bf16.mxu0 0
        %3279 = vmatpush1.bf16.msra.mxu0 %v3250
        %3280 = vmatprep.subr.bf16.mxu0 0
        %3281 = vmatpush1.bf16.msra.mxu0 %v3249
        %3282 = vmatprep.subr.bf16.mxu0 0
        %3283 = vmatpush1.bf16.msra.mxu0 %v3248
        %3284 = vmatprep.subr.bf16.mxu0 0
        %3285 = vmatpush2.bf16.msra.mxu0 0
        %3286 = vmatprep.subr.bf16.mxu0 0
        %3287 = vmatpush2.bf16.msra.mxu0 0
        %3288 = vmatprep.subr.bf16.mxu0 0
        %3289 = vmatpush2.bf16.msra.mxu0 0
        %3290 = vmatprep.subr.bf16.mxu0 0
        %3291 = vmatpush2.bf16.msra.mxu0 0
        %3292 = vmatprep.subr.bf16.mxu0 0
        %3293 = vmatpush2.bf16.msra.mxu0 0
        %3294 = vmatprep.subr.bf16.mxu0 0
        %3295 = vmatpush2.bf16.msra.mxu0 0
        %3296 = vmatprep.subr.bf16.mxu0 0
        %3297 = vmatpush2.bf16.msra.mxu0 %v3257
        %3298 = vmatprep.subr.bf16.mxu0 0
        %3299 = vmatpush2.bf16.msra.mxu0 %v3256
        %3300 = vmatprep.mubr.bf16.mxu0 %v3133
        %3301 = vmatmul.mubr.bf16.gmra.mxu0 %v3048
        %v3302 = vpop.f32.mrf.mxu0
        %v3303 = vadd.f32 0.0, %v3302
        %v3304 = vpop.f32.mrf.mxu0
        %v3305 = vpop.f32.mrf.mxu0
        %v3306 = vadd.f32 0.0, %v3305
        %v3307 = vpop.f32.mrf.mxu0
        %3308 = vmatprep.mubr.bf16.mxu0 %v3136
        %3309 = vmatmul.mubr.bf16.gmra.mxu0 %v3050
        %v3310 = vpop.f32.mrf.mxu0
        %v3311 = vadd.f32 0.0, %v3310
        %v3312 = vpop.f32.mrf.mxu0
        %v3313 = vpop.f32.mrf.mxu0
        %v3314 = vadd.f32 0.0, %v3313
        %v3315 = vpop.f32.mrf.mxu0
        %3316 = vdwg.mxu0
        %v3317 = vmax.f32 %v3173, %v3303
        %v3318 = vmax.f32 %v3176, %v3306
        %v3319 = vmax.f32 %v3181, %v3311
        %v3320 = vmax.f32 %v3184, %v3314
        %s3321 = scalar_lea.vmem %s7, 160
        %v3322 = vld [vmem:[%s3321] sm:$0xf]
        %v3323 = vld [vmem:[%s3321 + $0x4] sm:$0xf]
        %v3324 = vld [vmem:[%s3321 + $0x8] sm:$0xf]
        %v3325 = vld [vmem:[%s3321 + $0xc] sm:$0xf]
        %v3326 = vld [vmem:[%s3321 + $0x10] sm:$0xf]
        %v3327 = vld [vmem:[%s3321 + $0x14] sm:$0xf]
        %v3328 = vld [vmem:[%s3321 + $0x18] sm:$0xf]
        %v3329 = vld [vmem:[%s3321 + $0x1c] sm:$0xf]
        %v3330 = vld [vmem:[%s3321 + $0x20] sm:$0xf]
        %v3331 = vld [vmem:[%s3321 + $0x24] sm:$0xf]
        %v3332 = vld [vmem:[%s3321 + $0x28] sm:$0xf]
        %v3333 = vld [vmem:[%s3321 + $0x2c] sm:$0xf]
        %v3334 = vld [vmem:[%s3321 + $0x30] sm:$0xf]
        %v3335 = vld [vmem:[%s3321 + $0x34] sm:$0xf]
        %v3336 = vld [vmem:[%s3321 + $0x38] sm:$0xf]
        %v3337 = vld [vmem:[%s3321 + $0x3c] sm:$0xf]
        %v3338 = vld [vmem:[%s3321 + $0x40] sm:$0xf]
        %v3339 = vld [vmem:[%s3321 + $0x44] sm:$0xf]
        %v3340 = vld [vmem:[%s3321 + $0x48] sm:$0xf]
        %v3341 = vld [vmem:[%s3321 + $0x4c] sm:$0xf]
        %v3362 = vunpack.c.l.b16 %v3322
        %v3363 = vunpack.c.l.b16 %v3323
        %v3364 = vunpack.c.l.b16 %v3324
        %v3365 = vunpack.c.l.b16 %v3325
        %v3366 = vunpack.c.l.b16 %v3326
        %v3367 = vunpack.c.l.b16 %v3327
        %v3368 = vunpack.c.l.b16 %v3328
        %v3369 = vunpack.c.l.b16 %v3329
        %v3370 = vunpack.c.l.b16 %v3330
        %v3371 = vunpack.c.l.b16 %v3331
        %v3372 = vunpack.c.l.b16 %v3332
        %v3373 = vunpack.c.l.b16 %v3333
        %v3374 = vunpack.c.l.b16 %v3334
        %v3375 = vunpack.c.l.b16 %v3335
        %v3376 = vunpack.c.l.b16 %v3336
        %v3377 = vunpack.c.l.b16 %v3337
        %v3378 = vunpack.c.l.b16 %v3338
        %v3379 = vunpack.c.l.b16 %v3339
        %v3380 = vunpack.c.l.b16 %v3340
        %v3381 = vunpack.c.l.b16 %v3341
        %v3382 = vpack.c.b16 %v3363, %v3362
        %v3383 = vpack.c.b16 %v3365, %v3364
        %v3384 = vpack.c.b16 %v3367, %v3366
        %v3385 = vpack.c.b16 %v3369, %v3368
        %v3386 = vpack.c.b16 %v3371, %v3370
        %v3387 = vpack.c.b16 %v3373, %v3372
        %v3388 = vpack.c.b16 %v3375, %v3374
        %v3389 = vpack.c.b16 %v3377, %v3376
        %v3390 = vpack.c.b16 %v3379, %v3378
        %v3391 = vpack.c.b16 %v3381, %v3380
        %3402 = vmatprep.subr.bf16.mxu0 0
        %3403 = vmatpush1.bf16.msra.mxu0 %v3389
        %3404 = vmatprep.subr.bf16.mxu0 0
        %3405 = vmatpush1.bf16.msra.mxu0 %v3388
        %3406 = vmatprep.subr.bf16.mxu0 0
        %3407 = vmatpush1.bf16.msra.mxu0 %v3387
        %3408 = vmatprep.subr.bf16.mxu0 0
        %3409 = vmatpush1.bf16.msra.mxu0 %v3386
        %3410 = vmatprep.subr.bf16.mxu0 0
        %3411 = vmatpush1.bf16.msra.mxu0 %v3385
        %3412 = vmatprep.subr.bf16.mxu0 0
        %3413 = vmatpush1.bf16.msra.mxu0 %v3384
        %3414 = vmatprep.subr.bf16.mxu0 0
        %3415 = vmatpush1.bf16.msra.mxu0 %v3383
        %3416 = vmatprep.subr.bf16.mxu0 0
        %3417 = vmatpush1.bf16.msra.mxu0 %v3382
        %3418 = vmatprep.subr.bf16.mxu0 0
        %3419 = vmatpush2.bf16.msra.mxu0 0
        %3420 = vmatprep.subr.bf16.mxu0 0
        %3421 = vmatpush2.bf16.msra.mxu0 0
        %3422 = vmatprep.subr.bf16.mxu0 0
        %3423 = vmatpush2.bf16.msra.mxu0 0
        %3424 = vmatprep.subr.bf16.mxu0 0
        %3425 = vmatpush2.bf16.msra.mxu0 0
        %3426 = vmatprep.subr.bf16.mxu0 0
        %3427 = vmatpush2.bf16.msra.mxu0 0
        %3428 = vmatprep.subr.bf16.mxu0 0
        %3429 = vmatpush2.bf16.msra.mxu0 0
        %3430 = vmatprep.subr.bf16.mxu0 0
        %3431 = vmatpush2.bf16.msra.mxu0 %v3391
        %3432 = vmatprep.subr.bf16.mxu0 0
        %3433 = vmatpush2.bf16.msra.mxu0 %v3390
        %3434 = vmatprep.mubr.bf16.mxu0 %v3133
        %3435 = vmatmul.mubr.bf16.gmra.mxu0 %v3048
        %v3436 = vpop.f32.mrf.mxu0
        %v3437 = vadd.f32 0.0, %v3436
        %v3438 = vpop.f32.mrf.mxu0
        %v3439 = vpop.f32.mrf.mxu0
        %v3440 = vadd.f32 0.0, %v3439
        %v3441 = vpop.f32.mrf.mxu0
        %3442 = vmatprep.mubr.bf16.mxu0 %v3136
        %3443 = vmatmul.mubr.bf16.gmra.mxu0 %v3050
        %v3444 = vpop.f32.mrf.mxu0
        %v3445 = vadd.f32 0.0, %v3444
        %v3446 = vpop.f32.mrf.mxu0
        %v3447 = vpop.f32.mrf.mxu0
        %v3448 = vadd.f32 0.0, %v3447
        %v3449 = vpop.f32.mrf.mxu0
        %3450 = vdwg.mxu0
        %v3451 = vmax.f32 %v3317, %v3437
        %v3452 = vmax.f32 %v3318, %v3440
        %v3453 = vmax.f32 %v3319, %v3445
        %v3454 = vmax.f32 %v3320, %v3448
        %v3455 = vpack.c.bf16 %v3452, %v3451
        %v3456 = vpack.c.bf16 %v3454, %v3453
        %v3457 = vld [vmem:[%s8] sm:$0xf]
        %v3458 = vld [vmem:[%s8 + $0x4] sm:$0xf]
        %v3461 = vunpack.c.l.b16 %v3457
        %v3462 = vunpack.c.l.b16 %v3458
        %v3463 = vpack.c.b16 %v3462, %v3461
        %v3465 = vsel %vm2884, %v3463, 0
        %3467 = vmatprep.subr.bf16.mxu0 0
        %3468 = vmatpush1.bf16.msra.mxu0 0
        %3469 = vmatprep.subr.bf16.mxu0 0
        %3470 = vmatpush1.bf16.msra.mxu0 0
        %3471 = vmatprep.subr.bf16.mxu0 0
        %3472 = vmatpush1.bf16.msra.mxu0 0
        %3473 = vmatprep.subr.bf16.mxu0 0
        %3474 = vmatpush1.bf16.msra.mxu0 0
        %3475 = vmatprep.subr.bf16.mxu0 0
        %3476 = vmatpush1.bf16.msra.mxu0 0
        %3477 = vmatprep.subr.bf16.mxu0 0
        %3478 = vmatpush1.bf16.msra.mxu0 0
        %3479 = vmatprep.subr.bf16.mxu0 0
        %3480 = vmatpush1.bf16.msra.mxu0 %v3456
        %3481 = vmatprep.subr.bf16.mxu0 0
        %3482 = vmatpush1.bf16.msra.mxu0 %v3455
        %3483 = vmatprep.subr.bf16.mxu0 0
        %3484 = vmatpush2.bf16.msra.mxu0 0
        %3485 = vmatprep.subr.bf16.mxu0 0
        %3486 = vmatpush2.bf16.msra.mxu0 0
        %3487 = vmatprep.subr.bf16.mxu0 0
        %3488 = vmatpush2.bf16.msra.mxu0 0
        %3489 = vmatprep.subr.bf16.mxu0 0
        %3490 = vmatpush2.bf16.msra.mxu0 0
        %3491 = vmatprep.subr.bf16.mxu0 0
        %3492 = vmatpush2.bf16.msra.mxu0 0
        %3493 = vmatprep.subr.bf16.mxu0 0
        %3494 = vmatpush2.bf16.msra.mxu0 0
        %3495 = vmatprep.subr.bf16.mxu0 0
        %3496 = vmatpush2.bf16.msra.mxu0 0
        %3497 = vmatprep.subr.bf16.mxu0 0
        %3498 = vmatpush2.bf16.msra.mxu0 0
        %3499 = vmatprep.mubr.bf16.mxu0 0
        %3500 = vmatmul.mubr.bf16.gmra.mxu0 %v3465
        %v3501 = vpop.f32.mrf.mxu0
        %v3502 = vadd.f32 0.0, %v3501
        %v3503 = vpop.f32.mrf.mxu0
        %v3504 = vpop.f32.mrf.mxu0
        %v3505 = vadd.f32 0.0, %v3504
        %v3506 = vpop.f32.mrf.mxu0
        %3507 = vdwg.mxu0
        %s3508 = scalar_lea.vmem %s8, 8
        %v3509 = vld [vmem:[%s3508] sm:$0xf]
        %v3510 = vld [vmem:[%s3508 + $0x4] sm:$0xf]
        %v3513 = vunpack.c.l.b16 %v3509
        %v3514 = vunpack.c.l.b16 %v3510
        %v3515 = vpack.c.b16 %v3514, %v3513
        %v3517 = vsel %vm2884, %v3515, 0
        %3519 = vmatprep.subr.bf16.mxu0 0
        %3520 = vmatpush1.bf16.msra.mxu0 0
        %3521 = vmatprep.subr.bf16.mxu0 0
        %3522 = vmatpush1.bf16.msra.mxu0 0
        %3523 = vmatprep.subr.bf16.mxu0 0
        %3524 = vmatpush1.bf16.msra.mxu0 0
        %3525 = vmatprep.subr.bf16.mxu0 0
        %3526 = vmatpush1.bf16.msra.mxu0 0
        %3527 = vmatprep.subr.bf16.mxu0 0
        %3528 = vmatpush1.bf16.msra.mxu0 0
        %3529 = vmatprep.subr.bf16.mxu0 0
        %3530 = vmatpush1.bf16.msra.mxu0 0
        %3531 = vmatprep.subr.bf16.mxu0 0
        %3532 = vmatpush1.bf16.msra.mxu0 %v3456
        %3533 = vmatprep.subr.bf16.mxu0 0
        %3534 = vmatpush1.bf16.msra.mxu0 %v3455
        %3535 = vmatprep.subr.bf16.mxu0 0
        %3536 = vmatpush2.bf16.msra.mxu0 0
        %3537 = vmatprep.subr.bf16.mxu0 0
        %3538 = vmatpush2.bf16.msra.mxu0 0
        %3539 = vmatprep.subr.bf16.mxu0 0
        %3540 = vmatpush2.bf16.msra.mxu0 0
        %3541 = vmatprep.subr.bf16.mxu0 0
        %3542 = vmatpush2.bf16.msra.mxu0 0
        %3543 = vmatprep.subr.bf16.mxu0 0
        %3544 = vmatpush2.bf16.msra.mxu0 0
        %3545 = vmatprep.subr.bf16.mxu0 0
        %3546 = vmatpush2.bf16.msra.mxu0 0
        %3547 = vmatprep.subr.bf16.mxu0 0
        %3548 = vmatpush2.bf16.msra.mxu0 0
        %3549 = vmatprep.subr.bf16.mxu0 0
        %3550 = vmatpush2.bf16.msra.mxu0 0
        %3551 = vmatprep.mubr.bf16.mxu0 0
        %3552 = vmatmul.mubr.bf16.gmra.mxu0 %v3517
        %v3553 = vpop.f32.mrf.mxu0
        %v3554 = vadd.f32 0.0, %v3553
        %v3555 = vpop.f32.mrf.mxu0
        %v3556 = vpop.f32.mrf.mxu0
        %v3557 = vadd.f32 0.0, %v3556
        %v3558 = vpop.f32.mrf.mxu0
        %3559 = vdwg.mxu0
        %v3560 = vmax.f32 %v3502, %v3554
        %v3561 = vmax.f32 %v3505, %v3557
        %s3562 = scalar_lea.vmem %s8, 16
        %v3563 = vld [vmem:[%s3562] sm:$0xf]
        %v3564 = vld [vmem:[%s3562 + $0x4] sm:$0xf]
        %v3567 = vunpack.c.l.b16 %v3563
        %v3568 = vunpack.c.l.b16 %v3564
        %v3569 = vpack.c.b16 %v3568, %v3567
        %v3571 = vsel %vm2884, %v3569, 0
        %3573 = vmatprep.subr.bf16.mxu0 0
        %3574 = vmatpush1.bf16.msra.mxu0 0
        %3575 = vmatprep.subr.bf16.mxu0 0
        %3576 = vmatpush1.bf16.msra.mxu0 0
        %3577 = vmatprep.subr.bf16.mxu0 0
        %3578 = vmatpush1.bf16.msra.mxu0 0
        %3579 = vmatprep.subr.bf16.mxu0 0
        %3580 = vmatpush1.bf16.msra.mxu0 0
        %3581 = vmatprep.subr.bf16.mxu0 0
        %3582 = vmatpush1.bf16.msra.mxu0 0
        %3583 = vmatprep.subr.bf16.mxu0 0
        %3584 = vmatpush1.bf16.msra.mxu0 0
        %3585 = vmatprep.subr.bf16.mxu0 0
        %3586 = vmatpush1.bf16.msra.mxu0 %v3456
        %3587 = vmatprep.subr.bf16.mxu0 0
        %3588 = vmatpush1.bf16.msra.mxu0 %v3455
        %3589 = vmatprep.subr.bf16.mxu0 0
        %3590 = vmatpush2.bf16.msra.mxu0 0
        %3591 = vmatprep.subr.bf16.mxu0 0
        %3592 = vmatpush2.bf16.msra.mxu0 0
        %3593 = vmatprep.subr.bf16.mxu0 0
        %3594 = vmatpush2.bf16.msra.mxu0 0
        %3595 = vmatprep.subr.bf16.mxu0 0
        %3596 = vmatpush2.bf16.msra.mxu0 0
        %3597 = vmatprep.subr.bf16.mxu0 0
        %3598 = vmatpush2.bf16.msra.mxu0 0
        %3599 = vmatprep.subr.bf16.mxu0 0
        %3600 = vmatpush2.bf16.msra.mxu0 0
        %3601 = vmatprep.subr.bf16.mxu0 0
        %3602 = vmatpush2.bf16.msra.mxu0 0
        %3603 = vmatprep.subr.bf16.mxu0 0
        %3604 = vmatpush2.bf16.msra.mxu0 0
        %3605 = vmatprep.mubr.bf16.mxu0 0
        %3606 = vmatmul.mubr.bf16.gmra.mxu0 %v3571
        %v3607 = vpop.f32.mrf.mxu0
        %v3608 = vadd.f32 0.0, %v3607
        %v3609 = vpop.f32.mrf.mxu0
        %v3610 = vpop.f32.mrf.mxu0
        %v3611 = vadd.f32 0.0, %v3610
        %v3612 = vpop.f32.mrf.mxu0
        %3613 = vdwg.mxu0
        %v3614 = vmax.f32 %v3560, %v3608
        %v3615 = vmax.f32 %v3561, %v3611
        %v3616 = vpack.c.bf16 %v3615, %v3614
        %v3617 = vld [vmem:[%s9] sm:$0xff]
        %v3618 = vld [vmem:[%s9 + $0x8] sm:$0xff]
        %v3619 = vld [vmem:[%s9 + $0x10] sm:$0xff]
        %v3620 = vld [vmem:[%s9 + $0x18] sm:$0xff]
        %v3621 = vld [vmem:[%s9 + $0x20] sm:$0xff]
        %v3622 = vld [vmem:[%s9 + $0x28] sm:$0xff]
        %v3623 = vld [vmem:[%s9 + $0x30] sm:$0xff]
        %v3624 = vld [vmem:[%s9 + $0x38] sm:$0xff]
        %v3625 = vld [vmem:[%s9 + $0x40] sm:$0xff]
        %v3626 = vld [vmem:[%s9 + $0x48] sm:$0xff]
        %v3627 = vld [vmem:[%s9 + $0x50] sm:$0xff]
        %v3628 = vld [vmem:[%s9 + $0x58] sm:$0xff]
        %v3629 = vld [vmem:[%s9 + $0x60] sm:$0xff]
        %v3630 = vld [vmem:[%s9 + $0x68] sm:$0xff]
        %v3631 = vld [vmem:[%s9 + $0x70] sm:$0xff]
        %v3632 = vld [vmem:[%s9 + $0x78] sm:$0xff]
        %s3633 = scalar_lea.vmem %s9, 128
        %v3634 = vld [vmem:[%s3633] sm:$0xff]
        %v3635 = vld [vmem:[%s3633 + $0x8] sm:$0xff]
        %v3636 = vld [vmem:[%s3633 + $0x10] sm:$0xff]
        %v3637 = vld [vmem:[%s3633 + $0x18] sm:$0xff]
        %v3638 = vld [vmem:[%s3633 + $0x20] sm:$0xff]
        %v3639 = vld [vmem:[%s3633 + $0x28] sm:$0xff]
        %v3640 = vld [vmem:[%s3633 + $0x30] sm:$0xff]
        %v3641 = vld [vmem:[%s3633 + $0x38] sm:$0xff]
        %v3642 = vld [vmem:[%s3633 + $0x40] sm:$0xff]
        %v3643 = vld [vmem:[%s3633 + $0x48] sm:$0xff]
        %v3644 = vld [vmem:[%s3633 + $0x50] sm:$0xff]
        %v3645 = vld [vmem:[%s3633 + $0x58] sm:$0xff]
        %v3646 = vld [vmem:[%s3633 + $0x60] sm:$0xff]
        %v3647 = vld [vmem:[%s3633 + $0x68] sm:$0xff]
        %v3648 = vld [vmem:[%s3633 + $0x70] sm:$0xff]
        %v3649 = vld [vmem:[%s3633 + $0x78] sm:$0xff]
        %v3651 = vrot.slane %v3616, 1
        %v3669 = vunpack.c.l.b16 %v3634
        %v3670 = vunpack.c.h.b16 %v3634
        %v3671 = vunpack.c.l.b16 %v3635
        %v3672 = vunpack.c.h.b16 %v3635
        %v3673 = vunpack.c.l.b16 %v3636
        %v3674 = vunpack.c.h.b16 %v3636
        %v3675 = vunpack.c.l.b16 %v3637
        %v3676 = vunpack.c.h.b16 %v3637
        %v3677 = vunpack.c.l.b16 %v3638
        %v3678 = vunpack.c.h.b16 %v3638
        %v3679 = vunpack.c.l.b16 %v3639
        %v3680 = vunpack.c.h.b16 %v3639
        %v3681 = vunpack.c.l.b16 %v3640
        %v3682 = vunpack.c.h.b16 %v3640
        %v3683 = vunpack.c.l.b16 %v3641
        %v3684 = vunpack.c.h.b16 %v3641
        %v3685 = vunpack.c.l.b16 %v3642
        %v3686 = vunpack.c.h.b16 %v3642
        %v3687 = vunpack.c.l.b16 %v3643
        %v3688 = vunpack.c.h.b16 %v3643
        %v3689 = vunpack.c.l.b16 %v3644
        %v3690 = vunpack.c.h.b16 %v3644
        %v3691 = vunpack.c.l.b16 %v3645
        %v3692 = vunpack.c.h.b16 %v3645
        %v3693 = vunpack.c.l.b16 %v3646
        %v3694 = vunpack.c.h.b16 %v3646
        %v3695 = vunpack.c.l.b16 %v3647
        %v3696 = vunpack.c.h.b16 %v3647
        %v3697 = vunpack.c.l.b16 %v3648
        %v3698 = vunpack.c.h.b16 %v3648
        %v3699 = vunpack.c.l.b16 %v3649
        %v3700 = vunpack.c.h.b16 %v3649
        %v3701 = vpack.c.b16 %v3671, %v3669
        %v3702 = vpack.c.b16 %v3672, %v3670
        %v3703 = vpack.c.b16 %v3675, %v3673
        %v3704 = vpack.c.b16 %v3676, %v3674
        %v3705 = vpack.c.b16 %v3679, %v3677
        %v3706 = vpack.c.b16 %v3680, %v3678
        %v3707 = vpack.c.b16 %v3683, %v3681
        %v3708 = vpack.c.b16 %v3684, %v3682
        %v3709 = vpack.c.b16 %v3687, %v3685
        %v3710 = vpack.c.b16 %v3688, %v3686
        %v3711 = vpack.c.b16 %v3691, %v3689
        %v3712 = vpack.c.b16 %v3692, %v3690
        %v3713 = vpack.c.b16 %v3695, %v3693
        %v3714 = vpack.c.b16 %v3696, %v3694
        %v3715 = vpack.c.b16 %v3699, %v3697
        %v3716 = vpack.c.b16 %v3700, %v3698
        %3733 = vmatprep.subr.bf16.mxu0 %v3716
        %3734 = vmatpush1.bf16.msra.mxu0 %v3715
        %3735 = vmatprep.subr.bf16.mxu0 %v3714
        %3736 = vmatpush1.bf16.msra.mxu0 %v3713
        %3737 = vmatprep.subr.bf16.mxu0 %v3712
        %3738 = vmatpush1.bf16.msra.mxu0 %v3711
        %3739 = vmatprep.subr.bf16.mxu0 %v3710
        %3740 = vmatpush1.bf16.msra.mxu0 %v3709
        %3741 = vmatprep.subr.bf16.mxu0 %v3708
        %3742 = vmatpush1.bf16.msra.mxu0 %v3707
        %3743 = vmatprep.subr.bf16.mxu0 %v3706
        %3744 = vmatpush1.bf16.msra.mxu0 %v3705
        %3745 = vmatprep.subr.bf16.mxu0 %v3704
        %3746 = vmatpush1.bf16.msra.mxu0 %v3703
        %3747 = vmatprep.subr.bf16.mxu0 %v3702
        %3748 = vmatpush1.bf16.msra.mxu0 %v3701
        %3749 = vmatprep.subr.bf16.mxu0 0
        %3750 = vmatpush2.bf16.msra.mxu0 0
        %3751 = vmatprep.subr.bf16.mxu0 0
        %3752 = vmatpush2.bf16.msra.mxu0 0
        %3753 = vmatprep.subr.bf16.mxu0 0
        %3754 = vmatpush2.bf16.msra.mxu0 0
        %3755 = vmatprep.subr.bf16.mxu0 0
        %3756 = vmatpush2.bf16.msra.mxu0 0
        %3757 = vmatprep.subr.bf16.mxu0 0
        %3758 = vmatpush2.bf16.msra.mxu0 0
        %3759 = vmatprep.subr.bf16.mxu0 0
        %3760 = vmatpush2.bf16.msra.mxu0 0
        %3761 = vmatprep.subr.bf16.mxu0 0
        %3762 = vmatpush2.bf16.msra.mxu0 0
        %3763 = vmatprep.subr.bf16.mxu0 0
        %3764 = vmatpush2.bf16.msra.mxu0 0
        %3765 = vmatprep.mubr.bf16.mxu0 0
        %3766 = vmatmul.mubr.bf16.gmra.mxu0 %v3651
        %v3767 = vpop.f32.mrf.mxu0
        %v3768 = vadd.f32 0.0, %v3767
        %v3769 = vpop.f32.mrf.mxu0
        %v3770 = vadd.f32 0.0, %v3769
        %v3771 = vpop.f32.mrf.mxu0
        %v3772 = vpop.f32.mrf.mxu0
        %3773 = vdwg.mxu0
        %v3790 = vunpack.c.l.b16 %v3617
        %v3791 = vunpack.c.h.b16 %v3617
        %v3792 = vunpack.c.l.b16 %v3618
        %v3793 = vunpack.c.h.b16 %v3618
        %v3794 = vunpack.c.l.b16 %v3619
        %v3795 = vunpack.c.h.b16 %v3619
        %v3796 = vunpack.c.l.b16 %v3620
        %v3797 = vunpack.c.h.b16 %v3620
        %v3798 = vunpack.c.l.b16 %v3621
        %v3799 = vunpack.c.h.b16 %v3621
        %v3800 = vunpack.c.l.b16 %v3622
        %v3801 = vunpack.c.h.b16 %v3622
        %v3802 = vunpack.c.l.b16 %v3623
        %v3803 = vunpack.c.h.b16 %v3623
        %v3804 = vunpack.c.l.b16 %v3624
        %v3805 = vunpack.c.h.b16 %v3624
        %v3806 = vunpack.c.l.b16 %v3625
        %v3807 = vunpack.c.h.b16 %v3625
        %v3808 = vunpack.c.l.b16 %v3626
        %v3809 = vunpack.c.h.b16 %v3626
        %v3810 = vunpack.c.l.b16 %v3627
        %v3811 = vunpack.c.h.b16 %v3627
        %v3812 = vunpack.c.l.b16 %v3628
        %v3813 = vunpack.c.h.b16 %v3628
        %v3814 = vunpack.c.l.b16 %v3629
        %v3815 = vunpack.c.h.b16 %v3629
        %v3816 = vunpack.c.l.b16 %v3630
        %v3817 = vunpack.c.h.b16 %v3630
        %v3818 = vunpack.c.l.b16 %v3631
        %v3819 = vunpack.c.h.b16 %v3631
        %v3820 = vunpack.c.l.b16 %v3632
        %v3821 = vunpack.c.h.b16 %v3632
        %v3822 = vpack.c.b16 %v3792, %v3790
        %v3823 = vpack.c.b16 %v3793, %v3791
        %v3824 = vpack.c.b16 %v3796, %v3794
        %v3825 = vpack.c.b16 %v3797, %v3795
        %v3826 = vpack.c.b16 %v3800, %v3798
        %v3827 = vpack.c.b16 %v3801, %v3799
        %v3828 = vpack.c.b16 %v3804, %v3802
        %v3829 = vpack.c.b16 %v3805, %v3803
        %v3830 = vpack.c.b16 %v3808, %v3806
        %v3831 = vpack.c.b16 %v3809, %v3807
        %v3832 = vpack.c.b16 %v3812, %v3810
        %v3833 = vpack.c.b16 %v3813, %v3811
        %v3834 = vpack.c.b16 %v3816, %v3814
        %v3835 = vpack.c.b16 %v3817, %v3815
        %v3836 = vpack.c.b16 %v3820, %v3818
        %v3837 = vpack.c.b16 %v3821, %v3819
        %3854 = vmatprep.subr.bf16.mxu0 %v3837
        %3855 = vmatpush1.bf16.msra.mxu0 %v3836
        %3856 = vmatprep.subr.bf16.mxu0 %v3835
        %3857 = vmatpush1.bf16.msra.mxu0 %v3834
        %3858 = vmatprep.subr.bf16.mxu0 %v3833
        %3859 = vmatpush1.bf16.msra.mxu0 %v3832
        %3860 = vmatprep.subr.bf16.mxu0 %v3831
        %3861 = vmatpush1.bf16.msra.mxu0 %v3830
        %3862 = vmatprep.subr.bf16.mxu0 %v3829
        %3863 = vmatpush1.bf16.msra.mxu0 %v3828
        %3864 = vmatprep.subr.bf16.mxu0 %v3827
        %3865 = vmatpush1.bf16.msra.mxu0 %v3826
        %3866 = vmatprep.subr.bf16.mxu0 %v3825
        %3867 = vmatpush1.bf16.msra.mxu0 %v3824
        %3868 = vmatprep.subr.bf16.mxu0 %v3823
        %3869 = vmatpush1.bf16.msra.mxu0 %v3822
        %3870 = vmatprep.subr.bf16.mxu0 0
        %3871 = vmatpush2.bf16.msra.mxu0 0
        %3872 = vmatprep.subr.bf16.mxu0 0
        %3873 = vmatpush2.bf16.msra.mxu0 0
        %3874 = vmatprep.subr.bf16.mxu0 0
        %3875 = vmatpush2.bf16.msra.mxu0 0
        %3876 = vmatprep.subr.bf16.mxu0 0
        %3877 = vmatpush2.bf16.msra.mxu0 0
        %3878 = vmatprep.subr.bf16.mxu0 0
        %3879 = vmatpush2.bf16.msra.mxu0 0
        %3880 = vmatprep.subr.bf16.mxu0 0
        %3881 = vmatpush2.bf16.msra.mxu0 0
        %3882 = vmatprep.subr.bf16.mxu0 0
        %3883 = vmatpush2.bf16.msra.mxu0 0
        %3884 = vmatprep.subr.bf16.mxu0 0
        %3885 = vmatpush2.bf16.msra.mxu0 0
        %3886 = vmatprep.mubr.bf16.mxu0 0
        %3887 = vmatmul.mubr.bf16.gmra.mxu0 %v3616
        %v3888 = vpop.f32.mrf.mxu0
        %v3889 = vadd.f32 %v3768, %v3888
        %v3890 = vpop.f32.mrf.mxu0
        %v3891 = vadd.f32 %v3770, %v3890
        %v3892 = vpop.f32.mrf.mxu0
        %v3893 = vpop.f32.mrf.mxu0
        %3894 = vdwg.mxu0
        %s3895 = scalar_lea.vmem %s9, 256
        %v3896 = vld [vmem:[%s3895] sm:$0xff]
        %v3897 = vld [vmem:[%s3895 + $0x8] sm:$0xff]
        %v3898 = vld [vmem:[%s3895 + $0x10] sm:$0xff]
        %v3899 = vld [vmem:[%s3895 + $0x18] sm:$0xff]
        %v3900 = vld [vmem:[%s3895 + $0x20] sm:$0xff]
        %v3901 = vld [vmem:[%s3895 + $0x28] sm:$0xff]
        %v3902 = vld [vmem:[%s3895 + $0x30] sm:$0xff]
        %v3903 = vld [vmem:[%s3895 + $0x38] sm:$0xff]
        %v3904 = vld [vmem:[%s3895 + $0x40] sm:$0xff]
        %v3905 = vld [vmem:[%s3895 + $0x48] sm:$0xff]
        %v3906 = vld [vmem:[%s3895 + $0x50] sm:$0xff]
        %v3907 = vld [vmem:[%s3895 + $0x58] sm:$0xff]
        %v3908 = vld [vmem:[%s3895 + $0x60] sm:$0xff]
        %v3909 = vld [vmem:[%s3895 + $0x68] sm:$0xff]
        %v3910 = vld [vmem:[%s3895 + $0x70] sm:$0xff]
        %v3911 = vld [vmem:[%s3895 + $0x78] sm:$0xff]
        %v3912 = vrot.slane %v3616, 2
        %v3930 = vunpack.c.l.b16 %v3896
        %v3931 = vunpack.c.h.b16 %v3896
        %v3932 = vunpack.c.l.b16 %v3897
        %v3933 = vunpack.c.h.b16 %v3897
        %v3934 = vunpack.c.l.b16 %v3898
        %v3935 = vunpack.c.h.b16 %v3898
        %v3936 = vunpack.c.l.b16 %v3899
        %v3937 = vunpack.c.h.b16 %v3899
        %v3938 = vunpack.c.l.b16 %v3900
        %v3939 = vunpack.c.h.b16 %v3900
        %v3940 = vunpack.c.l.b16 %v3901
        %v3941 = vunpack.c.h.b16 %v3901
        %v3942 = vunpack.c.l.b16 %v3902
        %v3943 = vunpack.c.h.b16 %v3902
        %v3944 = vunpack.c.l.b16 %v3903
        %v3945 = vunpack.c.h.b16 %v3903
        %v3946 = vunpack.c.l.b16 %v3904
        %v3947 = vunpack.c.h.b16 %v3904
        %v3948 = vunpack.c.l.b16 %v3905
        %v3949 = vunpack.c.h.b16 %v3905
        %v3950 = vunpack.c.l.b16 %v3906
        %v3951 = vunpack.c.h.b16 %v3906
        %v3952 = vunpack.c.l.b16 %v3907
        %v3953 = vunpack.c.h.b16 %v3907
        %v3954 = vunpack.c.l.b16 %v3908
        %v3955 = vunpack.c.h.b16 %v3908
        %v3956 = vunpack.c.l.b16 %v3909
        %v3957 = vunpack.c.h.b16 %v3909
        %v3958 = vunpack.c.l.b16 %v3910
        %v3959 = vunpack.c.h.b16 %v3910
        %v3960 = vunpack.c.l.b16 %v3911
        %v3961 = vunpack.c.h.b16 %v3911
        %v3962 = vpack.c.b16 %v3932, %v3930
        %v3963 = vpack.c.b16 %v3933, %v3931
        %v3964 = vpack.c.b16 %v3936, %v3934
        %v3965 = vpack.c.b16 %v3937, %v3935
        %v3966 = vpack.c.b16 %v3940, %v3938
        %v3967 = vpack.c.b16 %v3941, %v3939
        %v3968 = vpack.c.b16 %v3944, %v3942
        %v3969 = vpack.c.b16 %v3945, %v3943
        %v3970 = vpack.c.b16 %v3948, %v3946
        %v3971 = vpack.c.b16 %v3949, %v3947
        %v3972 = vpack.c.b16 %v3952, %v3950
        %v3973 = vpack.c.b16 %v3953, %v3951
        %v3974 = vpack.c.b16 %v3956, %v3954
        %v3975 = vpack.c.b16 %v3957, %v3955
        %v3976 = vpack.c.b16 %v3960, %v3958
        %v3977 = vpack.c.b16 %v3961, %v3959
        %3994 = vmatprep.subr.bf16.mxu0 %v3977
        %3995 = vmatpush1.bf16.msra.mxu0 %v3976
        %3996 = vmatprep.subr.bf16.mxu0 %v3975
        %3997 = vmatpush1.bf16.msra.mxu0 %v3974
        %3998 = vmatprep.subr.bf16.mxu0 %v3973
        %3999 = vmatpush1.bf16.msra.mxu0 %v3972
        %4000 = vmatprep.subr.bf16.mxu0 %v3971
        %4001 = vmatpush1.bf16.msra.mxu0 %v3970
        %4002 = vmatprep.subr.bf16.mxu0 %v3969
        %4003 = vmatpush1.bf16.msra.mxu0 %v3968
        %4004 = vmatprep.subr.bf16.mxu0 %v3967
        %4005 = vmatpush1.bf16.msra.mxu0 %v3966
        %4006 = vmatprep.subr.bf16.mxu0 %v3965
        %4007 = vmatpush1.bf16.msra.mxu0 %v3964
        %4008 = vmatprep.subr.bf16.mxu0 %v3963
        %4009 = vmatpush1.bf16.msra.mxu0 %v3962
        %4010 = vmatprep.subr.bf16.mxu0 0
        %4011 = vmatpush2.bf16.msra.mxu0 0
        %4012 = vmatprep.subr.bf16.mxu0 0
        %4013 = vmatpush2.bf16.msra.mxu0 0
        %4014 = vmatprep.subr.bf16.mxu0 0
        %4015 = vmatpush2.bf16.msra.mxu0 0
        %4016 = vmatprep.subr.bf16.mxu0 0
        %4017 = vmatpush2.bf16.msra.mxu0 0
        %4018 = vmatprep.subr.bf16.mxu0 0
        %4019 = vmatpush2.bf16.msra.mxu0 0
        %4020 = vmatprep.subr.bf16.mxu0 0
        %4021 = vmatpush2.bf16.msra.mxu0 0
        %4022 = vmatprep.subr.bf16.mxu0 0
        %4023 = vmatpush2.bf16.msra.mxu0 0
        %4024 = vmatprep.subr.bf16.mxu0 0
        %4025 = vmatpush2.bf16.msra.mxu0 0
        %4026 = vmatprep.mubr.bf16.mxu0 0
        %4027 = vmatmul.mubr.bf16.gmra.mxu0 %v3912
        %v4028 = vpop.f32.mrf.mxu0
        %v4029 = vadd.f32 0.0, %v4028
        %v4030 = vpop.f32.mrf.mxu0
        %v4031 = vadd.f32 0.0, %v4030
        %v4032 = vpop.f32.mrf.mxu0
        %v4033 = vpop.f32.mrf.mxu0
        %4034 = vdwg.mxu0
        %v4035 = vadd.f32 %v3889, %v4029
        %v4036 = vadd.f32 %v3891, %v4031
        %s4037 = scalar_lea.vmem %s9, 384
        %v4038 = vld [vmem:[%s4037] sm:$0xff]
        %v4039 = vld [vmem:[%s4037 + $0x8] sm:$0xff]
        %v4040 = vld [vmem:[%s4037 + $0x10] sm:$0xff]
        %v4041 = vld [vmem:[%s4037 + $0x18] sm:$0xff]
        %v4042 = vld [vmem:[%s4037 + $0x20] sm:$0xff]
        %v4043 = vld [vmem:[%s4037 + $0x28] sm:$0xff]
        %v4044 = vld [vmem:[%s4037 + $0x30] sm:$0xff]
        %v4045 = vld [vmem:[%s4037 + $0x38] sm:$0xff]
        %v4046 = vld [vmem:[%s4037 + $0x40] sm:$0xff]
        %v4047 = vld [vmem:[%s4037 + $0x48] sm:$0xff]
        %v4048 = vld [vmem:[%s4037 + $0x50] sm:$0xff]
        %v4049 = vld [vmem:[%s4037 + $0x58] sm:$0xff]
        %v4050 = vld [vmem:[%s4037 + $0x60] sm:$0xff]
        %v4051 = vld [vmem:[%s4037 + $0x68] sm:$0xff]
        %v4052 = vld [vmem:[%s4037 + $0x70] sm:$0xff]
        %v4053 = vld [vmem:[%s4037 + $0x78] sm:$0xff]
        %v4054 = vrot.slane %v3616, 3
        %v4072 = vunpack.c.l.b16 %v4038
        %v4073 = vunpack.c.h.b16 %v4038
        %v4074 = vunpack.c.l.b16 %v4039
        %v4075 = vunpack.c.h.b16 %v4039
        %v4076 = vunpack.c.l.b16 %v4040
        %v4077 = vunpack.c.h.b16 %v4040
        %v4078 = vunpack.c.l.b16 %v4041
        %v4079 = vunpack.c.h.b16 %v4041
        %v4080 = vunpack.c.l.b16 %v4042
        %v4081 = vunpack.c.h.b16 %v4042
        %v4082 = vunpack.c.l.b16 %v4043
        %v4083 = vunpack.c.h.b16 %v4043
        %v4084 = vunpack.c.l.b16 %v4044
        %v4085 = vunpack.c.h.b16 %v4044
        %v4086 = vunpack.c.l.b16 %v4045
        %v4087 = vunpack.c.h.b16 %v4045
        %v4088 = vunpack.c.l.b16 %v4046
        %v4089 = vunpack.c.h.b16 %v4046
        %v4090 = vunpack.c.l.b16 %v4047
        %v4091 = vunpack.c.h.b16 %v4047
        %v4092 = vunpack.c.l.b16 %v4048
        %v4093 = vunpack.c.h.b16 %v4048
        %v4094 = vunpack.c.l.b16 %v4049
        %v4095 = vunpack.c.h.b16 %v4049
        %v4096 = vunpack.c.l.b16 %v4050
        %v4097 = vunpack.c.h.b16 %v4050
        %v4098 = vunpack.c.l.b16 %v4051
        %v4099 = vunpack.c.h.b16 %v4051
        %v4100 = vunpack.c.l.b16 %v4052
        %v4101 = vunpack.c.h.b16 %v4052
        %v4102 = vunpack.c.l.b16 %v4053
        %v4103 = vunpack.c.h.b16 %v4053
        %v4104 = vpack.c.b16 %v4074, %v4072
        %v4105 = vpack.c.b16 %v4075, %v4073
        %v4106 = vpack.c.b16 %v4078, %v4076
        %v4107 = vpack.c.b16 %v4079, %v4077
        %v4108 = vpack.c.b16 %v4082, %v4080
        %v4109 = vpack.c.b16 %v4083, %v4081
        %v4110 = vpack.c.b16 %v4086, %v4084
        %v4111 = vpack.c.b16 %v4087, %v4085
        %v4112 = vpack.c.b16 %v4090, %v4088
        %v4113 = vpack.c.b16 %v4091, %v4089
        %v4114 = vpack.c.b16 %v4094, %v4092
        %v4115 = vpack.c.b16 %v4095, %v4093
        %v4116 = vpack.c.b16 %v4098, %v4096
        %v4117 = vpack.c.b16 %v4099, %v4097
        %v4118 = vpack.c.b16 %v4102, %v4100
        %v4119 = vpack.c.b16 %v4103, %v4101
        %4136 = vmatprep.subr.bf16.mxu0 %v4119
        %4137 = vmatpush1.bf16.msra.mxu0 %v4118
        %4138 = vmatprep.subr.bf16.mxu0 %v4117
        %4139 = vmatpush1.bf16.msra.mxu0 %v4116
        %4140 = vmatprep.subr.bf16.mxu0 %v4115
        %4141 = vmatpush1.bf16.msra.mxu0 %v4114
        %4142 = vmatprep.subr.bf16.mxu0 %v4113
        %4143 = vmatpush1.bf16.msra.mxu0 %v4112
        %4144 = vmatprep.subr.bf16.mxu0 %v4111
        %4145 = vmatpush1.bf16.msra.mxu0 %v4110
        %4146 = vmatprep.subr.bf16.mxu0 %v4109
        %4147 = vmatpush1.bf16.msra.mxu0 %v4108
        %4148 = vmatprep.subr.bf16.mxu0 %v4107
        %4149 = vmatpush1.bf16.msra.mxu0 %v4106
        %4150 = vmatprep.subr.bf16.mxu0 %v4105
        %4151 = vmatpush1.bf16.msra.mxu0 %v4104
        %4152 = vmatprep.subr.bf16.mxu0 0
        %4153 = vmatpush2.bf16.msra.mxu0 0
        %4154 = vmatprep.subr.bf16.mxu0 0
        %4155 = vmatpush2.bf16.msra.mxu0 0
        %4156 = vmatprep.subr.bf16.mxu0 0
        %4157 = vmatpush2.bf16.msra.mxu0 0
        %4158 = vmatprep.subr.bf16.mxu0 0
        %4159 = vmatpush2.bf16.msra.mxu0 0
        %4160 = vmatprep.subr.bf16.mxu0 0
        %4161 = vmatpush2.bf16.msra.mxu0 0
        %4162 = vmatprep.subr.bf16.mxu0 0
        %4163 = vmatpush2.bf16.msra.mxu0 0
        %4164 = vmatprep.subr.bf16.mxu0 0
        %4165 = vmatpush2.bf16.msra.mxu0 0
        %4166 = vmatprep.subr.bf16.mxu0 0
        %4167 = vmatpush2.bf16.msra.mxu0 0
        %4168 = vmatprep.mubr.bf16.mxu0 0
        %4169 = vmatmul.mubr.bf16.gmra.mxu0 %v4054
        %v4170 = vpop.f32.mrf.mxu0
        %v4171 = vadd.f32 0.0, %v4170
        %v4172 = vpop.f32.mrf.mxu0
        %v4173 = vadd.f32 0.0, %v4172
        %v4174 = vpop.f32.mrf.mxu0
        %v4175 = vpop.f32.mrf.mxu0
        %4176 = vdwg.mxu0
        %v4177 = vadd.f32 %v4035, %v4171
        %v4178 = vadd.f32 %v4036, %v4173
        %s4179 = scalar_lea.vmem %s9, 512
        %v4180 = vld [vmem:[%s4179] sm:$0xff]
        %v4181 = vld [vmem:[%s4179 + $0x8] sm:$0xff]
        %v4182 = vld [vmem:[%s4179 + $0x10] sm:$0xff]
        %v4183 = vld [vmem:[%s4179 + $0x18] sm:$0xff]
        %v4184 = vld [vmem:[%s4179 + $0x20] sm:$0xff]
        %v4185 = vld [vmem:[%s4179 + $0x28] sm:$0xff]
        %v4186 = vld [vmem:[%s4179 + $0x30] sm:$0xff]
        %v4187 = vld [vmem:[%s4179 + $0x38] sm:$0xff]
        %v4188 = vld [vmem:[%s4179 + $0x40] sm:$0xff]
        %v4189 = vld [vmem:[%s4179 + $0x48] sm:$0xff]
        %v4190 = vld [vmem:[%s4179 + $0x50] sm:$0xff]
        %v4191 = vld [vmem:[%s4179 + $0x58] sm:$0xff]
        %v4192 = vld [vmem:[%s4179 + $0x60] sm:$0xff]
        %v4193 = vld [vmem:[%s4179 + $0x68] sm:$0xff]
        %v4194 = vld [vmem:[%s4179 + $0x70] sm:$0xff]
        %v4195 = vld [vmem:[%s4179 + $0x78] sm:$0xff]
        %v4196 = vrot.slane %v3616, 4
        %v4214 = vunpack.c.l.b16 %v4180
        %v4215 = vunpack.c.h.b16 %v4180
        %v4216 = vunpack.c.l.b16 %v4181
        %v4217 = vunpack.c.h.b16 %v4181
        %v4218 = vunpack.c.l.b16 %v4182
        %v4219 = vunpack.c.h.b16 %v4182
        %v4220 = vunpack.c.l.b16 %v4183
        %v4221 = vunpack.c.h.b16 %v4183
        %v4222 = vunpack.c.l.b16 %v4184
        %v4223 = vunpack.c.h.b16 %v4184
        %v4224 = vunpack.c.l.b16 %v4185
        %v4225 = vunpack.c.h.b16 %v4185
        %v4226 = vunpack.c.l.b16 %v4186
        %v4227 = vunpack.c.h.b16 %v4186
        %v4228 = vunpack.c.l.b16 %v4187
        %v4229 = vunpack.c.h.b16 %v4187
        %v4230 = vunpack.c.l.b16 %v4188
        %v4231 = vunpack.c.h.b16 %v4188
        %v4232 = vunpack.c.l.b16 %v4189
        %v4233 = vunpack.c.h.b16 %v4189
        %v4234 = vunpack.c.l.b16 %v4190
        %v4235 = vunpack.c.h.b16 %v4190
        %v4236 = vunpack.c.l.b16 %v4191
        %v4237 = vunpack.c.h.b16 %v4191
        %v4238 = vunpack.c.l.b16 %v4192
        %v4239 = vunpack.c.h.b16 %v4192
        %v4240 = vunpack.c.l.b16 %v4193
        %v4241 = vunpack.c.h.b16 %v4193
        %v4242 = vunpack.c.l.b16 %v4194
        %v4243 = vunpack.c.h.b16 %v4194
        %v4244 = vunpack.c.l.b16 %v4195
        %v4245 = vunpack.c.h.b16 %v4195
        %v4246 = vpack.c.b16 %v4216, %v4214
        %v4247 = vpack.c.b16 %v4217, %v4215
        %v4248 = vpack.c.b16 %v4220, %v4218
        %v4249 = vpack.c.b16 %v4221, %v4219
        %v4250 = vpack.c.b16 %v4224, %v4222
        %v4251 = vpack.c.b16 %v4225, %v4223
        %v4252 = vpack.c.b16 %v4228, %v4226
        %v4253 = vpack.c.b16 %v4229, %v4227
        %v4254 = vpack.c.b16 %v4232, %v4230
        %v4255 = vpack.c.b16 %v4233, %v4231
        %v4256 = vpack.c.b16 %v4236, %v4234
        %v4257 = vpack.c.b16 %v4237, %v4235
        %v4258 = vpack.c.b16 %v4240, %v4238
        %v4259 = vpack.c.b16 %v4241, %v4239
        %v4260 = vpack.c.b16 %v4244, %v4242
        %v4261 = vpack.c.b16 %v4245, %v4243
        %4278 = vmatprep.subr.bf16.mxu0 %v4261
        %4279 = vmatpush1.bf16.msra.mxu0 %v4260
        %4280 = vmatprep.subr.bf16.mxu0 %v4259
        %4281 = vmatpush1.bf16.msra.mxu0 %v4258
        %4282 = vmatprep.subr.bf16.mxu0 %v4257
        %4283 = vmatpush1.bf16.msra.mxu0 %v4256
        %4284 = vmatprep.subr.bf16.mxu0 %v4255
        %4285 = vmatpush1.bf16.msra.mxu0 %v4254
        %4286 = vmatprep.subr.bf16.mxu0 %v4253
        %4287 = vmatpush1.bf16.msra.mxu0 %v4252
        %4288 = vmatprep.subr.bf16.mxu0 %v4251
        %4289 = vmatpush1.bf16.msra.mxu0 %v4250
        %4290 = vmatprep.subr.bf16.mxu0 %v4249
        %4291 = vmatpush1.bf16.msra.mxu0 %v4248
        %4292 = vmatprep.subr.bf16.mxu0 %v4247
        %4293 = vmatpush1.bf16.msra.mxu0 %v4246
        %4294 = vmatprep.subr.bf16.mxu0 0
        %4295 = vmatpush2.bf16.msra.mxu0 0
        %4296 = vmatprep.subr.bf16.mxu0 0
        %4297 = vmatpush2.bf16.msra.mxu0 0
        %4298 = vmatprep.subr.bf16.mxu0 0
        %4299 = vmatpush2.bf16.msra.mxu0 0
        %4300 = vmatprep.subr.bf16.mxu0 0
        %4301 = vmatpush2.bf16.msra.mxu0 0
        %4302 = vmatprep.subr.bf16.mxu0 0
        %4303 = vmatpush2.bf16.msra.mxu0 0
        %4304 = vmatprep.subr.bf16.mxu0 0
        %4305 = vmatpush2.bf16.msra.mxu0 0
        %4306 = vmatprep.subr.bf16.mxu0 0
        %4307 = vmatpush2.bf16.msra.mxu0 0
        %4308 = vmatprep.subr.bf16.mxu0 0
        %4309 = vmatpush2.bf16.msra.mxu0 0
        %4310 = vmatprep.mubr.bf16.mxu0 0
        %4311 = vmatmul.mubr.bf16.gmra.mxu0 %v4196
        %v4312 = vpop.f32.mrf.mxu0
        %v4313 = vadd.f32 0.0, %v4312
        %v4314 = vpop.f32.mrf.mxu0
        %v4315 = vadd.f32 0.0, %v4314
        %v4316 = vpop.f32.mrf.mxu0
        %v4317 = vpop.f32.mrf.mxu0
        %4318 = vdwg.mxu0
        %v4319 = vadd.f32 %v4177, %v4313
        %v4320 = vadd.f32 %v4178, %v4315
        %s4321 = scalar_lea.vmem %s9, 640
        %v4322 = vld [vmem:[%s4321] sm:$0xff]
        %v4323 = vld [vmem:[%s4321 + $0x8] sm:$0xff]
        %v4324 = vld [vmem:[%s4321 + $0x10] sm:$0xff]
        %v4325 = vld [vmem:[%s4321 + $0x18] sm:$0xff]
        %v4326 = vld [vmem:[%s4321 + $0x20] sm:$0xff]
        %v4327 = vld [vmem:[%s4321 + $0x28] sm:$0xff]
        %v4328 = vld [vmem:[%s4321 + $0x30] sm:$0xff]
        %v4329 = vld [vmem:[%s4321 + $0x38] sm:$0xff]
        %v4330 = vld [vmem:[%s4321 + $0x40] sm:$0xff]
        %v4331 = vld [vmem:[%s4321 + $0x48] sm:$0xff]
        %v4332 = vld [vmem:[%s4321 + $0x50] sm:$0xff]
        %v4333 = vld [vmem:[%s4321 + $0x58] sm:$0xff]
        %v4334 = vld [vmem:[%s4321 + $0x60] sm:$0xff]
        %v4335 = vld [vmem:[%s4321 + $0x68] sm:$0xff]
        %v4336 = vld [vmem:[%s4321 + $0x70] sm:$0xff]
        %v4337 = vld [vmem:[%s4321 + $0x78] sm:$0xff]
        %v4338 = vrot.slane %v3616, 5
        %v4356 = vunpack.c.l.b16 %v4322
        %v4357 = vunpack.c.h.b16 %v4322
        %v4358 = vunpack.c.l.b16 %v4323
        %v4359 = vunpack.c.h.b16 %v4323
        %v4360 = vunpack.c.l.b16 %v4324
        %v4361 = vunpack.c.h.b16 %v4324
        %v4362 = vunpack.c.l.b16 %v4325
        %v4363 = vunpack.c.h.b16 %v4325
        %v4364 = vunpack.c.l.b16 %v4326
        %v4365 = vunpack.c.h.b16 %v4326
        %v4366 = vunpack.c.l.b16 %v4327
        %v4367 = vunpack.c.h.b16 %v4327
        %v4368 = vunpack.c.l.b16 %v4328
        %v4369 = vunpack.c.h.b16 %v4328
        %v4370 = vunpack.c.l.b16 %v4329
        %v4371 = vunpack.c.h.b16 %v4329
        %v4372 = vunpack.c.l.b16 %v4330
        %v4373 = vunpack.c.h.b16 %v4330
        %v4374 = vunpack.c.l.b16 %v4331
        %v4375 = vunpack.c.h.b16 %v4331
        %v4376 = vunpack.c.l.b16 %v4332
        %v4377 = vunpack.c.h.b16 %v4332
        %v4378 = vunpack.c.l.b16 %v4333
        %v4379 = vunpack.c.h.b16 %v4333
        %v4380 = vunpack.c.l.b16 %v4334
        %v4381 = vunpack.c.h.b16 %v4334
        %v4382 = vunpack.c.l.b16 %v4335
        %v4383 = vunpack.c.h.b16 %v4335
        %v4384 = vunpack.c.l.b16 %v4336
        %v4385 = vunpack.c.h.b16 %v4336
        %v4386 = vunpack.c.l.b16 %v4337
        %v4387 = vunpack.c.h.b16 %v4337
        %v4388 = vpack.c.b16 %v4358, %v4356
        %v4389 = vpack.c.b16 %v4359, %v4357
        %v4390 = vpack.c.b16 %v4362, %v4360
        %v4391 = vpack.c.b16 %v4363, %v4361
        %v4392 = vpack.c.b16 %v4366, %v4364
        %v4393 = vpack.c.b16 %v4367, %v4365
        %v4394 = vpack.c.b16 %v4370, %v4368
        %v4395 = vpack.c.b16 %v4371, %v4369
        %v4396 = vpack.c.b16 %v4374, %v4372
        %v4397 = vpack.c.b16 %v4375, %v4373
        %v4398 = vpack.c.b16 %v4378, %v4376
        %v4399 = vpack.c.b16 %v4379, %v4377
        %v4400 = vpack.c.b16 %v4382, %v4380
        %v4401 = vpack.c.b16 %v4383, %v4381
        %v4402 = vpack.c.b16 %v4386, %v4384
        %v4403 = vpack.c.b16 %v4387, %v4385
        %4420 = vmatprep.subr.bf16.mxu0 %v4403
        %4421 = vmatpush1.bf16.msra.mxu0 %v4402
        %4422 = vmatprep.subr.bf16.mxu0 %v4401
        %4423 = vmatpush1.bf16.msra.mxu0 %v4400
        %4424 = vmatprep.subr.bf16.mxu0 %v4399
        %4425 = vmatpush1.bf16.msra.mxu0 %v4398
        %4426 = vmatprep.subr.bf16.mxu0 %v4397
        %4427 = vmatpush1.bf16.msra.mxu0 %v4396
        %4428 = vmatprep.subr.bf16.mxu0 %v4395
        %4429 = vmatpush1.bf16.msra.mxu0 %v4394
        %4430 = vmatprep.subr.bf16.mxu0 %v4393
        %4431 = vmatpush1.bf16.msra.mxu0 %v4392
        %4432 = vmatprep.subr.bf16.mxu0 %v4391
        %4433 = vmatpush1.bf16.msra.mxu0 %v4390
        %4434 = vmatprep.subr.bf16.mxu0 %v4389
        %4435 = vmatpush1.bf16.msra.mxu0 %v4388
        %4436 = vmatprep.subr.bf16.mxu0 0
        %4437 = vmatpush2.bf16.msra.mxu0 0
        %4438 = vmatprep.subr.bf16.mxu0 0
        %4439 = vmatpush2.bf16.msra.mxu0 0
        %4440 = vmatprep.subr.bf16.mxu0 0
        %4441 = vmatpush2.bf16.msra.mxu0 0
        %4442 = vmatprep.subr.bf16.mxu0 0
        %4443 = vmatpush2.bf16.msra.mxu0 0
        %4444 = vmatprep.subr.bf16.mxu0 0
        %4445 = vmatpush2.bf16.msra.mxu0 0
        %4446 = vmatprep.subr.bf16.mxu0 0
        %4447 = vmatpush2.bf16.msra.mxu0 0
        %4448 = vmatprep.subr.bf16.mxu0 0
        %4449 = vmatpush2.bf16.msra.mxu0 0
        %4450 = vmatprep.subr.bf16.mxu0 0
        %4451 = vmatpush2.bf16.msra.mxu0 0
        %4452 = vmatprep.mubr.bf16.mxu0 0
        %4453 = vmatmul.mubr.bf16.gmra.mxu0 %v4338
        %v4454 = vpop.f32.mrf.mxu0
        %v4455 = vadd.f32 0.0, %v4454
        %v4456 = vpop.f32.mrf.mxu0
        %v4457 = vadd.f32 0.0, %v4456
        %v4458 = vpop.f32.mrf.mxu0
        %v4459 = vpop.f32.mrf.mxu0
        %4460 = vdwg.mxu0
        %v4461 = vadd.f32 %v4319, %v4455
        %v4462 = vadd.f32 %v4320, %v4457
        %s4463 = scalar_lea.vmem %s9, 768
        %v4464 = vld [vmem:[%s4463] sm:$0xff]
        %v4465 = vld [vmem:[%s4463 + $0x8] sm:$0xff]
        %v4466 = vld [vmem:[%s4463 + $0x10] sm:$0xff]
        %v4467 = vld [vmem:[%s4463 + $0x18] sm:$0xff]
        %v4468 = vld [vmem:[%s4463 + $0x20] sm:$0xff]
        %v4469 = vld [vmem:[%s4463 + $0x28] sm:$0xff]
        %v4470 = vld [vmem:[%s4463 + $0x30] sm:$0xff]
        %v4471 = vld [vmem:[%s4463 + $0x38] sm:$0xff]
        %v4472 = vld [vmem:[%s4463 + $0x40] sm:$0xff]
        %v4473 = vld [vmem:[%s4463 + $0x48] sm:$0xff]
        %v4474 = vld [vmem:[%s4463 + $0x50] sm:$0xff]
        %v4475 = vld [vmem:[%s4463 + $0x58] sm:$0xff]
        %v4476 = vld [vmem:[%s4463 + $0x60] sm:$0xff]
        %v4477 = vld [vmem:[%s4463 + $0x68] sm:$0xff]
        %v4478 = vld [vmem:[%s4463 + $0x70] sm:$0xff]
        %v4479 = vld [vmem:[%s4463 + $0x78] sm:$0xff]
        %v4480 = vrot.slane %v3616, 6
        %v4498 = vunpack.c.l.b16 %v4464
        %v4499 = vunpack.c.h.b16 %v4464
        %v4500 = vunpack.c.l.b16 %v4465
        %v4501 = vunpack.c.h.b16 %v4465
        %v4502 = vunpack.c.l.b16 %v4466
        %v4503 = vunpack.c.h.b16 %v4466
        %v4504 = vunpack.c.l.b16 %v4467
        %v4505 = vunpack.c.h.b16 %v4467
        %v4506 = vunpack.c.l.b16 %v4468
        %v4507 = vunpack.c.h.b16 %v4468
        %v4508 = vunpack.c.l.b16 %v4469
        %v4509 = vunpack.c.h.b16 %v4469
        %v4510 = vunpack.c.l.b16 %v4470
        %v4511 = vunpack.c.h.b16 %v4470
        %v4512 = vunpack.c.l.b16 %v4471
        %v4513 = vunpack.c.h.b16 %v4471
        %v4514 = vunpack.c.l.b16 %v4472
        %v4515 = vunpack.c.h.b16 %v4472
        %v4516 = vunpack.c.l.b16 %v4473
        %v4517 = vunpack.c.h.b16 %v4473
        %v4518 = vunpack.c.l.b16 %v4474
        %v4519 = vunpack.c.h.b16 %v4474
        %v4520 = vunpack.c.l.b16 %v4475
        %v4521 = vunpack.c.h.b16 %v4475
        %v4522 = vunpack.c.l.b16 %v4476
        %v4523 = vunpack.c.h.b16 %v4476
        %v4524 = vunpack.c.l.b16 %v4477
        %v4525 = vunpack.c.h.b16 %v4477
        %v4526 = vunpack.c.l.b16 %v4478
        %v4527 = vunpack.c.h.b16 %v4478
        %v4528 = vunpack.c.l.b16 %v4479
        %v4529 = vunpack.c.h.b16 %v4479
        %v4530 = vpack.c.b16 %v4500, %v4498
        %v4531 = vpack.c.b16 %v4501, %v4499
        %v4532 = vpack.c.b16 %v4504, %v4502
        %v4533 = vpack.c.b16 %v4505, %v4503
        %v4534 = vpack.c.b16 %v4508, %v4506
        %v4535 = vpack.c.b16 %v4509, %v4507
        %v4536 = vpack.c.b16 %v4512, %v4510
        %v4537 = vpack.c.b16 %v4513, %v4511
        %v4538 = vpack.c.b16 %v4516, %v4514
        %v4539 = vpack.c.b16 %v4517, %v4515
        %v4540 = vpack.c.b16 %v4520, %v4518
        %v4541 = vpack.c.b16 %v4521, %v4519
        %v4542 = vpack.c.b16 %v4524, %v4522
        %v4543 = vpack.c.b16 %v4525, %v4523
        %v4544 = vpack.c.b16 %v4528, %v4526
        %v4545 = vpack.c.b16 %v4529, %v4527
        %4562 = vmatprep.subr.bf16.mxu0 %v4545
        %4563 = vmatpush1.bf16.msra.mxu0 %v4544
        %4564 = vmatprep.subr.bf16.mxu0 %v4543
        %4565 = vmatpush1.bf16.msra.mxu0 %v4542
        %4566 = vmatprep.subr.bf16.mxu0 %v4541
        %4567 = vmatpush1.bf16.msra.mxu0 %v4540
        %4568 = vmatprep.subr.bf16.mxu0 %v4539
        %4569 = vmatpush1.bf16.msra.mxu0 %v4538
        %4570 = vmatprep.subr.bf16.mxu0 %v4537
        %4571 = vmatpush1.bf16.msra.mxu0 %v4536
        %4572 = vmatprep.subr.bf16.mxu0 %v4535
        %4573 = vmatpush1.bf16.msra.mxu0 %v4534
        %4574 = vmatprep.subr.bf16.mxu0 %v4533
        %4575 = vmatpush1.bf16.msra.mxu0 %v4532
        %4576 = vmatprep.subr.bf16.mxu0 %v4531
        %4577 = vmatpush1.bf16.msra.mxu0 %v4530
        %4578 = vmatprep.subr.bf16.mxu0 0
        %4579 = vmatpush2.bf16.msra.mxu0 0
        %4580 = vmatprep.subr.bf16.mxu0 0
        %4581 = vmatpush2.bf16.msra.mxu0 0
        %4582 = vmatprep.subr.bf16.mxu0 0
        %4583 = vmatpush2.bf16.msra.mxu0 0
        %4584 = vmatprep.subr.bf16.mxu0 0
        %4585 = vmatpush2.bf16.msra.mxu0 0
        %4586 = vmatprep.subr.bf16.mxu0 0
        %4587 = vmatpush2.bf16.msra.mxu0 0
        %4588 = vmatprep.subr.bf16.mxu0 0
        %4589 = vmatpush2.bf16.msra.mxu0 0
        %4590 = vmatprep.subr.bf16.mxu0 0
        %4591 = vmatpush2.bf16.msra.mxu0 0
        %4592 = vmatprep.subr.bf16.mxu0 0
        %4593 = vmatpush2.bf16.msra.mxu0 0
        %4594 = vmatprep.mubr.bf16.mxu0 0
        %4595 = vmatmul.mubr.bf16.gmra.mxu0 %v4480
        %v4596 = vpop.f32.mrf.mxu0
        %v4597 = vadd.f32 0.0, %v4596
        %v4598 = vpop.f32.mrf.mxu0
        %v4599 = vadd.f32 0.0, %v4598
        %v4600 = vpop.f32.mrf.mxu0
        %v4601 = vpop.f32.mrf.mxu0
        %4602 = vdwg.mxu0
        %v4603 = vadd.f32 %v4461, %v4597
        %v4604 = vadd.f32 %v4462, %v4599
        %s4605 = scalar_lea.vmem %s9, 896
        %v4606 = vld [vmem:[%s4605] sm:$0xff]
        %v4607 = vld [vmem:[%s4605 + $0x8] sm:$0xff]
        %v4608 = vld [vmem:[%s4605 + $0x10] sm:$0xff]
        %v4609 = vld [vmem:[%s4605 + $0x18] sm:$0xff]
        %v4610 = vld [vmem:[%s4605 + $0x20] sm:$0xff]
        %v4611 = vld [vmem:[%s4605 + $0x28] sm:$0xff]
        %v4612 = vld [vmem:[%s4605 + $0x30] sm:$0xff]
        %v4613 = vld [vmem:[%s4605 + $0x38] sm:$0xff]
        %v4614 = vld [vmem:[%s4605 + $0x40] sm:$0xff]
        %v4615 = vld [vmem:[%s4605 + $0x48] sm:$0xff]
        %v4616 = vld [vmem:[%s4605 + $0x50] sm:$0xff]
        %v4617 = vld [vmem:[%s4605 + $0x58] sm:$0xff]
        %v4618 = vld [vmem:[%s4605 + $0x60] sm:$0xff]
        %v4619 = vld [vmem:[%s4605 + $0x68] sm:$0xff]
        %v4620 = vld [vmem:[%s4605 + $0x70] sm:$0xff]
        %v4621 = vld [vmem:[%s4605 + $0x78] sm:$0xff]
        %v4622 = vrot.slane %v3616, 7
        %v4640 = vunpack.c.l.b16 %v4606
        %v4641 = vunpack.c.h.b16 %v4606
        %v4642 = vunpack.c.l.b16 %v4607
        %v4643 = vunpack.c.h.b16 %v4607
        %v4644 = vunpack.c.l.b16 %v4608
        %v4645 = vunpack.c.h.b16 %v4608
        %v4646 = vunpack.c.l.b16 %v4609
        %v4647 = vunpack.c.h.b16 %v4609
        %v4648 = vunpack.c.l.b16 %v4610
        %v4649 = vunpack.c.h.b16 %v4610
        %v4650 = vunpack.c.l.b16 %v4611
        %v4651 = vunpack.c.h.b16 %v4611
        %v4652 = vunpack.c.l.b16 %v4612
        %v4653 = vunpack.c.h.b16 %v4612
        %v4654 = vunpack.c.l.b16 %v4613
        %v4655 = vunpack.c.h.b16 %v4613
        %v4656 = vunpack.c.l.b16 %v4614
        %v4657 = vunpack.c.h.b16 %v4614
        %v4658 = vunpack.c.l.b16 %v4615
        %v4659 = vunpack.c.h.b16 %v4615
        %v4660 = vunpack.c.l.b16 %v4616
        %v4661 = vunpack.c.h.b16 %v4616
        %v4662 = vunpack.c.l.b16 %v4617
        %v4663 = vunpack.c.h.b16 %v4617
        %v4664 = vunpack.c.l.b16 %v4618
        %v4665 = vunpack.c.h.b16 %v4618
        %v4666 = vunpack.c.l.b16 %v4619
        %v4667 = vunpack.c.h.b16 %v4619
        %v4668 = vunpack.c.l.b16 %v4620
        %v4669 = vunpack.c.h.b16 %v4620
        %v4670 = vunpack.c.l.b16 %v4621
        %v4671 = vunpack.c.h.b16 %v4621
        %v4672 = vpack.c.b16 %v4642, %v4640
        %v4673 = vpack.c.b16 %v4643, %v4641
        %v4674 = vpack.c.b16 %v4646, %v4644
        %v4675 = vpack.c.b16 %v4647, %v4645
        %v4676 = vpack.c.b16 %v4650, %v4648
        %v4677 = vpack.c.b16 %v4651, %v4649
        %v4678 = vpack.c.b16 %v4654, %v4652
        %v4679 = vpack.c.b16 %v4655, %v4653
        %v4680 = vpack.c.b16 %v4658, %v4656
        %v4681 = vpack.c.b16 %v4659, %v4657
        %v4682 = vpack.c.b16 %v4662, %v4660
        %v4683 = vpack.c.b16 %v4663, %v4661
        %v4684 = vpack.c.b16 %v4666, %v4664
        %v4685 = vpack.c.b16 %v4667, %v4665
        %v4686 = vpack.c.b16 %v4670, %v4668
        %v4687 = vpack.c.b16 %v4671, %v4669
        %4704 = vmatprep.subr.bf16.mxu0 %v4687
        %4705 = vmatpush1.bf16.msra.mxu0 %v4686
        %4706 = vmatprep.subr.bf16.mxu0 %v4685
        %4707 = vmatpush1.bf16.msra.mxu0 %v4684
        %4708 = vmatprep.subr.bf16.mxu0 %v4683
        %4709 = vmatpush1.bf16.msra.mxu0 %v4682
        %4710 = vmatprep.subr.bf16.mxu0 %v4681
        %4711 = vmatpush1.bf16.msra.mxu0 %v4680
        %4712 = vmatprep.subr.bf16.mxu0 %v4679
        %4713 = vmatpush1.bf16.msra.mxu0 %v4678
        %4714 = vmatprep.subr.bf16.mxu0 %v4677
        %4715 = vmatpush1.bf16.msra.mxu0 %v4676
        %4716 = vmatprep.subr.bf16.mxu0 %v4675
        %4717 = vmatpush1.bf16.msra.mxu0 %v4674
        %4718 = vmatprep.subr.bf16.mxu0 %v4673
        %4719 = vmatpush1.bf16.msra.mxu0 %v4672
        %4720 = vmatprep.subr.bf16.mxu0 0
        %4721 = vmatpush2.bf16.msra.mxu0 0
        %4722 = vmatprep.subr.bf16.mxu0 0
        %4723 = vmatpush2.bf16.msra.mxu0 0
        %4724 = vmatprep.subr.bf16.mxu0 0
        %4725 = vmatpush2.bf16.msra.mxu0 0
        %4726 = vmatprep.subr.bf16.mxu0 0
        %4727 = vmatpush2.bf16.msra.mxu0 0
        %4728 = vmatprep.subr.bf16.mxu0 0
        %4729 = vmatpush2.bf16.msra.mxu0 0
        %4730 = vmatprep.subr.bf16.mxu0 0
        %4731 = vmatpush2.bf16.msra.mxu0 0
        %4732 = vmatprep.subr.bf16.mxu0 0
        %4733 = vmatpush2.bf16.msra.mxu0 0
        %4734 = vmatprep.subr.bf16.mxu0 0
        %4735 = vmatpush2.bf16.msra.mxu0 0
        %4736 = vmatprep.mubr.bf16.mxu0 0
        %4737 = vmatmul.mubr.bf16.gmra.mxu0 %v4622
        %v4738 = vpop.f32.mrf.mxu0
        %v4739 = vadd.f32 0.0, %v4738
        %v4740 = vpop.f32.mrf.mxu0
        %v4741 = vadd.f32 0.0, %v4740
        %v4742 = vpop.f32.mrf.mxu0
        %v4743 = vpop.f32.mrf.mxu0
        %4744 = vdwg.mxu0
        %v4745 = vadd.f32 %v4603, %v4739
        %v4746 = vadd.f32 %v4604, %v4741
        %v4747 = vmax.f32 %v4745, 0.0
        %v4748 = vmax.f32 %v4746, 0.0
        %v4749 = vpack.c.bf16 %v4747, %v4747
        %v4750 = vpack.c.bf16 %v4748, %v4748
        %v4751 = vld [vmem:[%s10] sm:$0xf]
        %v4752 = vld [vmem:[%s10 + $0x4] sm:$0xf]
        %v4753 = vld [vmem:[%s10 + $0x8] sm:$0xf]
        %v4754 = vld [vmem:[%s10 + $0xc] sm:$0xf]
        %v4755 = vld [vmem:[%s10 + $0x10] sm:$0xf]
        %v4756 = vld [vmem:[%s10 + $0x14] sm:$0xf]
        %v4757 = vld [vmem:[%s10 + $0x18] sm:$0xf]
        %v4758 = vld [vmem:[%s10 + $0x1c] sm:$0xf]
        %v4759 = vld [vmem:[%s10 + $0x20] sm:$0xf]
        %v4760 = vld [vmem:[%s10 + $0x24] sm:$0xf]
        %v4761 = vld [vmem:[%s10 + $0x28] sm:$0xf]
        %v4762 = vld [vmem:[%s10 + $0x2c] sm:$0xf]
        %v4763 = vld [vmem:[%s10 + $0x30] sm:$0xf]
        %v4764 = vld [vmem:[%s10 + $0x34] sm:$0xf]
        %v4765 = vld [vmem:[%s10 + $0x38] sm:$0xf]
        %v4766 = vld [vmem:[%s10 + $0x3c] sm:$0xf]
        %v4767 = vld [vmem:[%s10 + $0x40] sm:$0xf]
        %v4768 = vld [vmem:[%s10 + $0x44] sm:$0xf]
        %v4769 = vld [vmem:[%s10 + $0x48] sm:$0xf]
        %v4770 = vld [vmem:[%s10 + $0x4c] sm:$0xf]
        %v4791 = vunpack.c.l.b16 %v4751
        %v4792 = vunpack.c.l.b16 %v4752
        %v4793 = vunpack.c.l.b16 %v4753
        %v4794 = vunpack.c.l.b16 %v4754
        %v4795 = vunpack.c.l.b16 %v4755
        %v4796 = vunpack.c.l.b16 %v4756
        %v4797 = vunpack.c.l.b16 %v4757
        %v4798 = vunpack.c.l.b16 %v4758
        %v4799 = vunpack.c.l.b16 %v4759
        %v4800 = vunpack.c.l.b16 %v4760
        %v4801 = vunpack.c.l.b16 %v4761
        %v4802 = vunpack.c.l.b16 %v4762
        %v4803 = vunpack.c.l.b16 %v4763
        %v4804 = vunpack.c.l.b16 %v4764
        %v4805 = vunpack.c.l.b16 %v4765
        %v4806 = vunpack.c.l.b16 %v4766
        %v4807 = vunpack.c.l.b16 %v4767
        %v4808 = vunpack.c.l.b16 %v4768
        %v4809 = vunpack.c.l.b16 %v4769
        %v4810 = vunpack.c.l.b16 %v4770
        %v4811 = vpack.c.b16 %v4792, %v4791
        %v4812 = vpack.c.b16 %v4794, %v4793
        %v4813 = vpack.c.b16 %v4796, %v4795
        %v4814 = vpack.c.b16 %v4798, %v4797
        %v4815 = vpack.c.b16 %v4800, %v4799
        %v4816 = vpack.c.b16 %v4802, %v4801
        %v4817 = vpack.c.b16 %v4804, %v4803
        %v4818 = vpack.c.b16 %v4806, %v4805
        %v4819 = vpack.c.b16 %v4808, %v4807
        %v4820 = vpack.c.b16 %v4810, %v4809
        %v4832 = vsel %vm2884, %v4750, 0
        %4834 = vmatprep.subr.bf16.mxu0 0
        %4835 = vmatpush1.bf16.msra.mxu0 %v4818
        %4836 = vmatprep.subr.bf16.mxu0 0
        %4837 = vmatpush1.bf16.msra.mxu0 %v4817
        %4838 = vmatprep.subr.bf16.mxu0 0
        %4839 = vmatpush1.bf16.msra.mxu0 %v4816
        %4840 = vmatprep.subr.bf16.mxu0 0
        %4841 = vmatpush1.bf16.msra.mxu0 %v4815
        %4842 = vmatprep.subr.bf16.mxu0 0
        %4843 = vmatpush1.bf16.msra.mxu0 %v4814
        %4844 = vmatprep.subr.bf16.mxu0 0
        %4845 = vmatpush1.bf16.msra.mxu0 %v4813
        %4846 = vmatprep.subr.bf16.mxu0 0
        %4847 = vmatpush1.bf16.msra.mxu0 %v4812
        %4848 = vmatprep.subr.bf16.mxu0 0
        %4849 = vmatpush1.bf16.msra.mxu0 %v4811
        %4850 = vmatprep.subr.bf16.mxu0 0
        %4851 = vmatpush2.bf16.msra.mxu0 0
        %4852 = vmatprep.subr.bf16.mxu0 0
        %4853 = vmatpush2.bf16.msra.mxu0 0
        %4854 = vmatprep.subr.bf16.mxu0 0
        %4855 = vmatpush2.bf16.msra.mxu0 0
        %4856 = vmatprep.subr.bf16.mxu0 0
        %4857 = vmatpush2.bf16.msra.mxu0 0
        %4858 = vmatprep.subr.bf16.mxu0 0
        %4859 = vmatpush2.bf16.msra.mxu0 0
        %4860 = vmatprep.subr.bf16.mxu0 0
        %4861 = vmatpush2.bf16.msra.mxu0 0
        %4862 = vmatprep.subr.bf16.mxu0 0
        %4863 = vmatpush2.bf16.msra.mxu0 %v4820
        %4864 = vmatprep.subr.bf16.mxu0 0
        %4865 = vmatpush2.bf16.msra.mxu0 %v4819
        %4866 = vmatprep.mubr.bf16.mxu0 %v4832
        %4867 = vmatmul.mubr.bf16.gmra.mxu0 %v4749
        %v4868 = vpop.f32.mrf.mxu0
        %v4869 = vadd.f32 0.0, %v4868
        %v4870 = vpop.f32.mrf.mxu0
        %v4871 = vpop.f32.mrf.mxu0
        %v4872 = vpop.f32.mrf.mxu0
        %4873 = vdwg.mxu0
        %v4874 = vmax.f32 %v4869, 0.0
        %v4875 = vpack.c.bf16 %v4874, %v4874
        %v4876 = vld [vmem:[%s11] sm:$0xf]
        %v4877 = vld [vmem:[%s11 + $0x4] sm:$0xf]
        %v4878 = vld [vmem:[%s11 + $0x8] sm:$0xf]
        %v4879 = vld [vmem:[%s11 + $0xc] sm:$0xf]
        %v4880 = vld [vmem:[%s11 + $0x10] sm:$0xf]
        %v4881 = vld [vmem:[%s11 + $0x14] sm:$0xf]
        %v4882 = vld [vmem:[%s11 + $0x18] sm:$0xf]
        %v4883 = vld [vmem:[%s11 + $0x1c] sm:$0xf]
        %v4884 = vld [vmem:[%s11 + $0x20] sm:$0xf]
        %v4885 = vld [vmem:[%s11 + $0x24] sm:$0xf]
        %v4886 = vld [vmem:[%s11 + $0x28] sm:$0xf]
        %v4887 = vld [vmem:[%s11 + $0x2c] sm:$0xf]
        %v4888 = vld [vmem:[%s11 + $0x30] sm:$0x3]
        %v4889 = vld [vmem:[%s12] sm:$0x1]
        %v4891 = vlaneseq
        %v4892 = vshrl.u32 %v4891, 7
        %v4893 = vsub.s32 0, %v4892
        %v4894 = vrot.slane %v4889, %v4893
        %v4909 = vunpack.c.l.b16 %v4876
        %v4910 = vunpack.c.l.b16 %v4877
        %v4911 = vunpack.c.l.b16 %v4878
        %v4912 = vunpack.c.l.b16 %v4879
        %v4913 = vunpack.c.l.b16 %v4880
        %v4914 = vunpack.c.l.b16 %v4881
        %v4915 = vunpack.c.l.b16 %v4882
        %v4916 = vunpack.c.l.b16 %v4883
        %v4917 = vunpack.c.l.b16 %v4884
        %v4918 = vunpack.c.l.b16 %v4885
        %v4919 = vunpack.c.l.b16 %v4886
        %v4920 = vunpack.c.l.b16 %v4887
        %v4921 = vunpack.c.l.b16 %v4888
        %v4922 = vpack.c.b16 %v4910, %v4909
        %v4923 = vpack.c.b16 %v4912, %v4911
        %v4924 = vpack.c.b16 %v4914, %v4913
        %v4925 = vpack.c.b16 %v4916, %v4915
        %v4926 = vpack.c.b16 %v4918, %v4917
        %v4927 = vpack.c.b16 %v4920, %v4919
        %v4928 = vpack.c.b16 %v4921, %v4921
        %vm4935 = vcmask 818176
        %v4937 = vsel %vm4935, %v4875, 0
        %vm4939 = vcmask 1041408
        %v4941 = vsel %vm4939, %v4928, 0
        %4943 = vmatprep.subr.bf16.mxu0 0
        %4944 = vmatpush1.bf16.msra.mxu0 0
        %4945 = vmatprep.subr.bf16.mxu0 0
        %4946 = vmatpush1.bf16.msra.mxu0 %v4941
        %4947 = vmatprep.subr.bf16.mxu0 0
        %4948 = vmatpush1.bf16.msra.mxu0 %v4927
        %4949 = vmatprep.subr.bf16.mxu0 0
        %4950 = vmatpush1.bf16.msra.mxu0 %v4926
        %4951 = vmatprep.subr.bf16.mxu0 0
        %4952 = vmatpush1.bf16.msra.mxu0 %v4925
        %4953 = vmatprep.subr.bf16.mxu0 0
        %4954 = vmatpush1.bf16.msra.mxu0 %v4924
        %4955 = vmatprep.subr.bf16.mxu0 0
        %4956 = vmatpush1.bf16.msra.mxu0 %v4923
        %4957 = vmatprep.subr.bf16.mxu0 0
        %4958 = vmatpush1.bf16.msra.mxu0 %v4922
        %4959 = vmatprep.subr.bf16.mxu0 0
        %4960 = vmatpush2.bf16.msra.mxu0 0
        %4961 = vmatprep.subr.bf16.mxu0 0
        %4962 = vmatpush2.bf16.msra.mxu0 0
        %4963 = vmatprep.subr.bf16.mxu0 0
        %4964 = vmatpush2.bf16.msra.mxu0 0
        %4965 = vmatprep.subr.bf16.mxu0 0
        %4966 = vmatpush2.bf16.msra.mxu0 0
        %4967 = vmatprep.subr.bf16.mxu0 0
        %4968 = vmatpush2.bf16.msra.mxu0 0
        %4969 = vmatprep.subr.bf16.mxu0 0
        %4970 = vmatpush2.bf16.msra.mxu0 0
        %4971 = vmatprep.subr.bf16.mxu0 0
        %4972 = vmatpush2.bf16.msra.mxu0 0
        %4973 = vmatprep.subr.bf16.mxu0 0
        %4974 = vmatpush2.bf16.msra.mxu0 0
        %4975 = vmatprep.mubr.bf16.mxu0 0
        %4976 = vmatmul.mubr.bf16.gmra.mxu0 %v4937
        %v4977 = vpop.f32.mrf.mxu0
        %v4978 = vadd.f32 %v4894, %v4977
        %v4979 = vpop.f32.mrf.mxu0
        %v4980 = vpop.f32.mrf.mxu0
        %v4981 = vpop.f32.mrf.mxu0
        %4982 = vdwg.mxu0
        %vm4983 = vcmask 41984
        %4984 = vst.msk [vmem:[%s436] sm:$0x3] %vm4983, %v4978
        %s4985 = sand.u32 %s313, 1
        %s4986 = scalar_lea.sflag [#allocation3], %s4985
        %s4987 = sand.u32 %s313, 1
        %s4988 = smul.addr %s4987, 2
        %s4989 = scalar_lea.vmem [#allocation2], %s4988
        // Predicated region
        $region73: #{lenet_forward.1} parent=71 // pred_check
          %p4990 = pneg %p323
        $region74: #{lenet_forward.1} parent=71 // pred_check_branch
          %4992 = sbr.rel (%p4990) target = $region76
        $region75: #{lenet_forward.1} parent=71 // pred_region
          %s4994 = ssub.s32 32, 32
          %4995 = vsyncadd %s4986, %s4994
          %s4996 = smul.addr %s27, 32
          %s4997 = scalar_lea.hbm %s13, %s4996
          %s4999 = sshll.u32 %s4989, 4
          %s5000 = int_to_ptr.vmem [resolvable:$true] %s4999
          %5002 = dma.vmem_to_hbm [thread:$0]  %s5000, 32, %s4997, %s4986
        $region76: #{lenet_forward.1} parent=71 // pred_fallthru
          _
      $region72: #{lenet_forward.1} parent=5 // pred_fallthru
        _
      %p5003 = scmp.le.s32.totalorder 2, %s22
      // Predicated region
      $region77: #{lenet_forward.1} parent=5 // pred_check
        %p5004 = pneg %p5003
      $region78: #{lenet_forward.1} parent=5 // pred_check_branch
        %5006 = sbr.rel (%p5004) target = $region80
      $region79: #{lenet_forward.1} parent=5 // pred_region
        %s5007 = ssub.s32 %s22, 2
        // Predicated region
        $region81: #{lenet_forward.1} parent=79 // pred_check
          %p5008 = pneg %p329
        $region82: #{lenet_forward.1} parent=79 // pred_check_branch
          %5010 = sbr.rel (%p5008) target = $region84
        $region83: #{lenet_forward.1} parent=79 // pred_region
          %s5011 = sand.u32 %s314, 1
          %s5012 = scalar_lea.sflag [#allocation3], %s5011
          %s5013 = sand.u32 %s314, 1
          %s5014 = smul.addr %s5013, 2
          %s5015 = scalar_lea.vmem [#allocation2], %s5014
          %5016 = dma.done %s5012, 32
        $region84: #{lenet_forward.1} parent=79 // pred_fallthru
          _
      $region80: #{lenet_forward.1} parent=5 // pred_fallthru
        _
    $region6: #{lenet_forward.1} parent=1 // loop_footer
      %s26 = sadd.s32 1, %s22
    $region7: #{lenet_forward.1} parent=1 // loop_footer_branch
      %21 = sbr.rel target = $region3
    $region8: #{lenet_forward.1} parent=1 // loop_exit
      _
    %5017 = vsyncpa [#allocation3], 1
    %s5018 = scalar_lea.sflag [#allocation3], 1
    %5019 = vsyncpa %s5018, 1

</llo_original>
